<compile_context>
chip_gen: v7x
topology: tpu7x:2x2x1
jax: 0.10.0
libtpu: 0.0.40
codegen_flags: <defaults>
</compile_context>

<pallas_src>
import numpy as np

import jax
import jax.numpy as jnp
from jax.experimental import pallas as pl
from jax.experimental.pallas import tpu as pltpu

EMBED_DIM  = 32                       # embed_dim
HEAD_NUM   = 4                        # head_num
HEAD_DIM   = EMBED_DIM // HEAD_NUM
HIDDEN_DIM = EMBED_DIM                # TextCNN builds Self_Attention(embed_dim, head_num, embed_dim)
EPS        = 1e-6


# --------------------------- fused kernel ---------------------------
def _fused_self_attention_kernel(x_ref, wexp_ref, bexp_ref, hs_ref, sw1_ref,
                                 w2_ref, misc_ref, o_ref):
    """One grid step = Gp independent applications of Self_Attention.forward."""
    Gp, B, E = x_ref.shape
    M = Gp * B                       # matmul rows for this step
    C = hs_ref.shape[0]              # head_num * d * d  (= 256 for E=32, H=4)
    mm = wexp_ref.dtype              # matmul input dtype (f32, or bf16 if pre-cast)

    x = x_ref[...].reshape(M, E)     # leading-dim merge only (cheap)

    # Fused QKV projection with the per-head repeat/tile expansion folded into
    # the pre-expanded weight (wrapper-side): one (M,32)x(32,768) matmul,
    # N = 3*C lane-dense.  Bias stays f32.
    w_exp = jnp.dot(x.astype(mm), wexp_ref[...],
                    preferred_element_type=jnp.float32) + bexp_ref[...]
    qe = w_exp[:, :C]                # q expanded over (head, i, j) columns
    ke = w_exp[:, C:2 * C]           # k expanded
    ve = w_exp[:, 2 * C:]            # v expanded

    # Attention logits, replicated per head so everything stays 256 lanes wide
    # (scale 1/sqrt(d) is folded into hs_ref).  Kept f32 even on the bf16 path.
    a = jnp.dot(qe * ke, hs_ref[...], preferred_element_type=jnp.float32)  # (M, C)

    # Legacy F.softmax(A) on a 3-D tensor -> implicit dim=0: softmax over the
    # BATCH rows of each group.  Reduce over axis=1 of the (Gp, B, C) view only
    # so groups batched in this step never mix.  Exact divide (correctness fix).
    a3 = a.reshape(Gp, B, C)
    a3 = a3 - jnp.max(a3, axis=1, keepdims=True)
    e3 = jnp.exp(a3)
    s = (e3 / jnp.sum(e3, axis=1, keepdims=True)).reshape(M, C)

    # Attention output + first FFN layer: the (i,h)->column scatter is folded
    # into sw1_ref = Scatter @ W1, so this is one elementwise mult + one matmul.
    # dropout(attention(...)) is identity in inference mode.
    p2 = s * ve
    h1 = jnp.dot(p2.astype(mm), sw1_ref[...],
                 preferred_element_type=jnp.float32) + misc_ref[0:1, :]      # + b1
    y = jnp.dot(h1.astype(mm), w2_ref[...],
                preferred_element_type=jnp.float32) + misc_ref[1:2, :]       # + b2

    # LayerNorm: torch.std is unbiased (/(N-1)); eps is added to the std.
    # Exact divides (correctness fix; off the critical path at these sizes).
    mean = jnp.mean(y, axis=-1, keepdims=True)
    cen = y - mean
    std = jnp.sqrt(jnp.sum(cen * cen, axis=-1, keepdims=True) / (E - 1))
    out = misc_ref[2:3, :] * cen / (std + EPS) + misc_ref[3:4, :]            # alpha, beta

    o_ref[...] = out.reshape(Gp, B, E)


# --------------------------- parameter folding (trace/setup time) ---------------------------
def _selection_constants(E, H):
    """0/1 selection matrices for the head split / head-sum / output scatter."""
    d = E // H
    dd = d * d
    C = H * dd
    c = np.arange(C)
    h, m = c // dd, c % dd
    i, j = m // d, m % d
    rep = np.zeros((E, C), np.float32); rep[h * d + i, c] = 1.0    # pick q[:, h*d+i]
    til = np.zeros((E, C), np.float32); til[h * d + j, c] = 1.0    # pick k/v[:, h*d+j]
    scat = np.zeros((C, E), np.float32); scat[c, i * H + h] = 1.0  # (i,h) -> col i*H+h
    # head-sum replicated per head, with the 1/sqrt(d) attention scale folded in
    hs_tile = (m[:, None] == m[None, :]).astype(np.float32) / np.sqrt(np.float32(d))
    return rep, til, scat, hs_tile


def prepare_params(params, *, use_bf16_matmul=False):
    """Fold the head selection matrices into the weights (all exact 0/1 selections)."""
    E, H = EMBED_DIM, HEAD_NUM
    rep, til, scat, hs_tile = _selection_constants(E, H)

    w = np.asarray(params['w_qkv_t'], np.float32)            # (E, 3E)
    b = np.asarray(params['b_qkv'], np.float32).reshape(-1)  # (3E,)
    w_exp = np.concatenate([w[:, :E] @ rep, w[:, E:2 * E] @ til, w[:, 2 * E:] @ til], axis=1)
    b_exp = np.concatenate([b[:E] @ rep, b[E:2 * E] @ til, b[2 * E:] @ til])[None, :]

    w1 = np.asarray(params['w1_t'], np.float32)               # (E, hid)
    assert w1.shape[1] == E, "TextCNN builds Self_Attention(embed_dim, head_num, embed_dim)"
    sw1 = scat @ w1                                            # Scatter folded into FFN linear1
    w2 = np.asarray(params['w2_t'], np.float32)
    misc = np.concatenate([np.asarray(params['b1']), np.asarray(params['b2']),
                           np.asarray(params['alpha']), np.asarray(params['beta'])],
                          axis=0).astype(np.float32)           # (4, E): b1, b2, alpha, beta

    # bf16 applies ONLY to the learned-weight matmuls (QKV / FFN); the head-sum
    # matmul, softmax and LayerNorm stay f32 by design (v5e has no bf16 VPU/EUP).
    mm = jnp.bfloat16 if use_bf16_matmul else jnp.float32
    return {
        'w_exp':   jnp.asarray(w_exp, mm),           # (E, 3C) = (32, 768)
        'b_exp':   jnp.asarray(b_exp, jnp.float32),  # (1, 3C)
        'hs_tile': jnp.asarray(hs_tile, jnp.float32),# (C, C) = (256, 256)
        'sw1':     jnp.asarray(sw1, mm),             # (C, hid) = (256, 32)
        'w2':      jnp.asarray(w2, mm),              # (hid, E) = (32, 32)
        'misc':    jnp.asarray(misc, jnp.float32),   # (4, E)
    }


# --------------------------- wrapper ---------------------------
def self_attention_forward(x, prepared, *, groups_per_step=None):
    """x: (G, B, E) stack of G independent module applications, or a single (B, E)."""
    squeeze = (x.ndim == 2)
    if squeeze:
        x = x[None]
    G, B, E = x.shape

    if groups_per_step is None:
        # >=2 grid steps (both v7x TensorCores busy) while targeting ~256 matmul
        # rows per step; VMEM headroom is huge so the cap is row-count, not memory.
        groups_per_step = max(1, min(pl.cdiv(G, 2), pl.cdiv(256, B)))
    Gp = max(1, min(groups_per_step, G))
    num_steps = pl.cdiv(G, Gp)
    G_pad = num_steps * Gp
    if G_pad != G:
        x = jnp.concatenate([x, jnp.zeros((G_pad - G, B, E), x.dtype)], axis=0)

    C = prepared['hs_tile'].shape[0]
    hid = prepared['sw1'].shape[1]

    out = pl.pallas_call(
        _fused_self_attention_kernel,
        out_shape=jax.ShapeDtypeStruct((G_pad, B, E), jnp.float32),
        grid=(num_steps,),
        in_specs=[
            pl.BlockSpec((Gp, B, E), lambda s: (s, 0, 0)),     # activations: Gp groups/step
            pl.BlockSpec((E, 3 * C), lambda s: (0, 0)),        # weights: constant index maps
            pl.BlockSpec((1, 3 * C), lambda s: (0, 0)),        #   -> fetched once
            pl.BlockSpec((C, C), lambda s: (0, 0)),
            pl.BlockSpec((C, hid), lambda s: (0, 0)),
            pl.BlockSpec((hid, E), lambda s: (0, 0)),
            pl.BlockSpec((4, E), lambda s: (0, 0)),
        ],
        out_specs=pl.BlockSpec((Gp, B, E), lambda s: (s, 0, 0)),
        compiler_params=pltpu.CompilerParams(
            dimension_semantics=("parallel",),                 # independent steps
        ),
    )(x, prepared['w_exp'], prepared['b_exp'], prepared['hs_tile'],
      prepared['sw1'], prepared['w2'], prepared['misc'])
    out = out[:G]
    return out[0] if squeeze else out


# ---------------- pure-JAX reference (for self-check) ----------------
def self_attention_reference(x, params):
    B, E = x.shape
    H, d = HEAD_NUM, E // HEAD_NUM
    W = x @ params['w_qkv_t'] + params['b_qkv']
    q = W[:, :E].reshape(B, H, d).transpose(0, 2, 1)
    k = W[:, E:2 * E].reshape(B, H, d).transpose(0, 2, 1)
    v = W[:, 2 * E:].reshape(B, H, d).transpose(0, 2, 1)
    a = jnp.einsum('bih,bjh->bij', q, k) / jnp.sqrt(jnp.float32(d))
    a = jax.nn.softmax(a, axis=0)                            # legacy implicit dim=0
    att = jnp.einsum('bij,bjh->bih', a, v).reshape(B, E)
    h1 = att @ params['w1_t'] + params['b1']
    y = h1 @ params['w2_t'] + params['b2']
    mean = jnp.mean(y, axis=-1, keepdims=True)
    std = jnp.sqrt(jnp.sum((y - mean) ** 2, axis=-1, keepdims=True) / (E - 1))
    return params['alpha'] * (y - mean) / (std + EPS) + params['beta']


def init_params(key):
    ks = jax.random.split(key, 4)
    # Stored pre-transposed relative to torch (torch Linear weight is (out, in)):
    return {
        'w_qkv_t': 0.05 * jax.random.normal(ks[0], (EMBED_DIM, 3 * EMBED_DIM), jnp.float32),
        'b_qkv':   0.01 * jnp.ones((1, 3 * EMBED_DIM), jnp.float32),
        'w1_t':    0.05 * jax.random.normal(ks[1], (EMBED_DIM, HIDDEN_DIM), jnp.float32),
        'b1':      0.01 * jnp.ones((1, HIDDEN_DIM), jnp.float32),
        'w2_t':    0.05 * jax.random.normal(ks[2], (HIDDEN_DIM, EMBED_DIM), jnp.float32),
        'b2':      0.01 * jnp.ones((1, EMBED_DIM), jnp.float32),
        'alpha':   jnp.ones((1, EMBED_DIM), jnp.float32),    # LayerNorm scale
        'beta':    jnp.zeros((1, EMBED_DIM), jnp.float32),   # LayerNorm bias
    }


if __name__ == "__main__":
    key = jax.random.PRNGKey(0)
    kx, kp = jax.random.split(key)
    # 64 independent (8, 32) applications -> 2 grid steps of 32 groups each,
    # i.e. 256-row matmuls per step (perf feedback item 1) while staying tiny.
    GROUPS, BATCH = 64, 8
    x = jax.random.normal(kx, (GROUPS, BATCH, EMBED_DIM), jnp.float32)
    params = init_params(kp)

    # ---- f32 path (default; v5e-safe) ----
    prepared = prepare_params(params)
    out = jax.block_until_ready(self_attention_forward(x, prepared))
    ref = jax.vmap(lambda xg: self_attention_reference(xg, params))(x)

    assert out.shape == (GROUPS, BATCH, EMBED_DIM)
    # Exact divides + exact 0/1 weight folding: only summation-order noise remains.
    assert jnp.allclose(out, ref, rtol=1e-3, atol=1e-3), (
        f"mismatch vs reference: max abs diff = {jnp.max(jnp.abs(out - ref))}")

    # ---- bf16-matmul variant (v6e/v7x; weights pre-cast in prepare_params) ----
    prepared_bf16 = prepare_params(params, use_bf16_matmul=True)
    out_bf16 = jax.block_until_ready(self_attention_forward(x, prepared_bf16))
    assert out_bf16.shape == out.shape
    assert bool(jnp.isfinite(out_bf16).all())

    print("KERNEL_OK")
</pallas_src>

<mosaic_0001>
module attributes {stable_mosaic.version = 11 : i64} {
  func.func @_fused_self_attention_kernel(%arg0: i32, %arg1: memref<32x8x32xf32, #tpu.memory_space<vmem>>, %arg2: memref<32x768xf32, #tpu.memory_space<vmem>>, %arg3: memref<1x768xf32, #tpu.memory_space<vmem>>, %arg4: memref<256x256xf32, #tpu.memory_space<vmem>>, %arg5: memref<256x32xf32, #tpu.memory_space<vmem>>, %arg6: memref<32x32xf32, #tpu.memory_space<vmem>>, %arg7: memref<4x32xf32, #tpu.memory_space<vmem>>, %arg8: memref<32x8x32xf32, #tpu.memory_space<vmem>>) attributes {dimension_semantics = [#tpu.dimension_semantics<parallel>], iteration_bounds = array<i64: 2>, scalar_prefetch = 0 : i64, scratch_operands = 0 : i64, tpu.core_type = #tpu.core_type<tc>, window_params = [{transform_indices = @transform_0, window_bounds = array<i64: 32, 8, 32>}, {pipeline_mode = #tpu.pipeline_mode<synchronous>, transform_indices = @transform_1, window_bounds = array<i64: 32, 768>}, {pipeline_mode = #tpu.pipeline_mode<synchronous>, transform_indices = @transform_2, window_bounds = array<i64: 1, 768>}, {pipeline_mode = #tpu.pipeline_mode<synchronous>, transform_indices = @transform_3, window_bounds = array<i64: 256, 256>}, {pipeline_mode = #tpu.pipeline_mode<synchronous>, transform_indices = @transform_4, window_bounds = array<i64: 256, 32>}, {pipeline_mode = #tpu.pipeline_mode<synchronous>, transform_indices = @transform_5, window_bounds = array<i64: 32, 32>}, {pipeline_mode = #tpu.pipeline_mode<synchronous>, transform_indices = @transform_6, window_bounds = array<i64: 4, 32>}, {transform_indices = @transform_7, window_bounds = array<i64: 32, 8, 32>}]} {
    %c0 = arith.constant 0 : index
    %c0_0 = arith.constant 0 : index
    %c0_1 = arith.constant 0 : index
    %0 = vector.load %arg1[%c0, %c0_0, %c0_1] : memref<32x8x32xf32, #tpu.memory_space<vmem>>, vector<32x8x32xf32>
    %1 = vector.shape_cast %0 : vector<32x8x32xf32> to vector<256x32xf32>
    %c0_2 = arith.constant 0 : index
    %c0_3 = arith.constant 0 : index
    %2 = vector.load %arg2[%c0_2, %c0_3] : memref<32x768xf32, #tpu.memory_space<vmem>>, vector<32x768xf32>
    %cst = arith.constant dense<0.000000e+00> : vector<256x768xf32>
    %3 = tpu.matmul %1, %2, %cst {dimension_numbers = #tpu.dot_dimension_numbers<[1], [0], [0], [1], [0, 0, 1, 1], [], []>} : vector<256x32xf32>, vector<32x768xf32>, vector<256x768xf32> -> vector<256x768xf32>
    %c0_4 = arith.constant 0 : index
    %c0_5 = arith.constant 0 : index
    %4 = vector.load %arg3[%c0_4, %c0_5] : memref<1x768xf32, #tpu.memory_space<vmem>>, vector<1x768xf32>
    %5 = vector.broadcast %4 : vector<1x768xf32> to vector<256x768xf32>
    %6 = arith.addf %3, %5 : vector<256x768xf32>
    %7 = vector.extract_strided_slice %6 {offsets = [0, 0], sizes = [256, 256], strides = [1, 1]} : vector<256x768xf32> to vector<256x256xf32>
    %8 = vector.extract_strided_slice %6 {offsets = [0, 256], sizes = [256, 256], strides = [1, 1]} : vector<256x768xf32> to vector<256x256xf32>
    %9 = vector.extract_strided_slice %6 {offsets = [0, 512], sizes = [256, 256], strides = [1, 1]} : vector<256x768xf32> to vector<256x256xf32>
    %10 = arith.mulf %7, %8 : vector<256x256xf32>
    %c0_6 = arith.constant 0 : index
    %c0_7 = arith.constant 0 : index
    %11 = vector.load %arg4[%c0_6, %c0_7] : memref<256x256xf32, #tpu.memory_space<vmem>>, vector<256x256xf32>
    %cst_8 = arith.constant dense<0.000000e+00> : vector<256x256xf32>
    %12 = tpu.matmul %10, %11, %cst_8 {dimension_numbers = #tpu.dot_dimension_numbers<[1], [0], [0], [1], [0, 0, 1, 1], [], []>} : vector<256x256xf32>, vector<256x256xf32>, vector<256x256xf32> -> vector<256x256xf32>
    %13 = vector.shape_cast %12 : vector<256x256xf32> to vector<32x8x256xf32>
    %cst_9 = arith.constant dense<0xFF800000> : vector<32x256xf32>
    %14 = vector.multi_reduction <maximumf>, %13, %cst_9 [1] : vector<32x8x256xf32> to vector<32x256xf32>
    %15 = vector.shape_cast %14 : vector<32x256xf32> to vector<32x1x256xf32>
    %16 = vector.broadcast %15 : vector<32x1x256xf32> to vector<32x8x256xf32>
    %17 = arith.subf %13, %16 : vector<32x8x256xf32>
    %18 = math.exp %17 : vector<32x8x256xf32>
    %cst_10 = arith.constant dense<0.000000e+00> : vector<32x256xf32>
    %19 = vector.multi_reduction <add>, %18, %cst_10 [1] : vector<32x8x256xf32> to vector<32x256xf32>
    %20 = vector.shape_cast %19 : vector<32x256xf32> to vector<32x1x256xf32>
    %21 = vector.broadcast %20 : vector<32x1x256xf32> to vector<32x8x256xf32>
    %22 = arith.divf %18, %21 : vector<32x8x256xf32>
    %23 = vector.shape_cast %22 : vector<32x8x256xf32> to vector<256x256xf32>
    %24 = arith.mulf %23, %9 : vector<256x256xf32>
    %c0_11 = arith.constant 0 : index
    %c0_12 = arith.constant 0 : index
    %25 = vector.load %arg5[%c0_11, %c0_12] : memref<256x32xf32, #tpu.memory_space<vmem>>, vector<256x32xf32>
    %cst_13 = arith.constant dense<0.000000e+00> : vector<256x32xf32>
    %26 = tpu.matmul %24, %25, %cst_13 {dimension_numbers = #tpu.dot_dimension_numbers<[1], [0], [0], [1], [0, 0, 1, 1], [], []>} : vector<256x256xf32>, vector<256x32xf32>, vector<256x32xf32> -> vector<256x32xf32>
    %c0_14 = arith.constant 0 : index
    %c0_15 = arith.constant 0 : index
    %27 = vector.load %arg7[%c0_14, %c0_15] : memref<4x32xf32, #tpu.memory_space<vmem>>, vector<1x32xf32>
    %28 = vector.broadcast %27 : vector<1x32xf32> to vector<256x32xf32>
    %29 = arith.addf %26, %28 : vector<256x32xf32>
    %c0_16 = arith.constant 0 : index
    %c0_17 = arith.constant 0 : index
    %30 = vector.load %arg6[%c0_16, %c0_17] : memref<32x32xf32, #tpu.memory_space<vmem>>, vector<32x32xf32>
    %cst_18 = arith.constant dense<0.000000e+00> : vector<256x32xf32>
    %31 = tpu.matmul %29, %30, %cst_18 {dimension_numbers = #tpu.dot_dimension_numbers<[1], [0], [0], [1], [0, 0, 1, 1], [], []>} : vector<256x32xf32>, vector<32x32xf32>, vector<256x32xf32> -> vector<256x32xf32>
    %c1 = arith.constant 1 : index
    %c0_19 = arith.constant 0 : index
    %32 = vector.load %arg7[%c1, %c0_19] : memref<4x32xf32, #tpu.memory_space<vmem>>, vector<1x32xf32>
    %33 = vector.broadcast %32 : vector<1x32xf32> to vector<256x32xf32>
    %34 = arith.addf %31, %33 : vector<256x32xf32>
    %cst_20 = arith.constant dense<0.000000e+00> : vector<256xf32>
    %35 = vector.multi_reduction <add>, %34, %cst_20 [1] : vector<256x32xf32> to vector<256xf32>
    %36 = vector.shape_cast %35 : vector<256xf32> to vector<256x1xf32>
    %cst_21 = arith.constant 3.200000e+01 : f32
    %37 = vector.broadcast %cst_21 : f32 to vector<256x1xf32>
    %38 = arith.divf %36, %37 : vector<256x1xf32>
    %39 = vector.broadcast %38 : vector<256x1xf32> to vector<256x32xf32>
    %40 = arith.subf %34, %39 : vector<256x32xf32>
    %41 = arith.mulf %40, %40 : vector<256x32xf32>
    %cst_22 = arith.constant dense<0.000000e+00> : vector<256xf32>
    %42 = vector.multi_reduction <add>, %41, %cst_22 [1] : vector<256x32xf32> to vector<256xf32>
    %43 = vector.shape_cast %42 : vector<256xf32> to vector<256x1xf32>
    %cst_23 = arith.constant 3.100000e+01 : f32
    %44 = vector.broadcast %cst_23 : f32 to vector<256x1xf32>
    %45 = arith.divf %43, %44 : vector<256x1xf32>
    %46 = math.sqrt %45 : vector<256x1xf32>
    %c2 = arith.constant 2 : index
    %c0_24 = arith.constant 0 : index
    %47 = vector.load %arg7[%c2, %c0_24] : memref<4x32xf32, #tpu.memory_space<vmem>>, vector<1x32xf32>
    %48 = vector.broadcast %47 : vector<1x32xf32> to vector<256x32xf32>
    %49 = arith.mulf %48, %40 : vector<256x32xf32>
    %cst_25 = arith.constant 9.99999997E-7 : f32
    %50 = vector.broadcast %cst_25 : f32 to vector<256x1xf32>
    %51 = arith.addf %46, %50 : vector<256x1xf32>
    %52 = vector.broadcast %51 : vector<256x1xf32> to vector<256x32xf32>
    %53 = arith.divf %49, %52 : vector<256x32xf32>
    %c3 = arith.constant 3 : index
    %c0_26 = arith.constant 0 : index
    %54 = vector.load %arg7[%c3, %c0_26] : memref<4x32xf32, #tpu.memory_space<vmem>>, vector<1x32xf32>
    %55 = vector.broadcast %54 : vector<1x32xf32> to vector<256x32xf32>
    %56 = arith.addf %53, %55 : vector<256x32xf32>
    %57 = vector.shape_cast %56 : vector<256x32xf32> to vector<32x8x32xf32>
    %c0_27 = arith.constant 0 : index
    %c0_28 = arith.constant 0 : index
    %c0_29 = arith.constant 0 : index
    %58 = vector.load %arg8[%c0_27, %c0_28, %c0_29] : memref<32x8x32xf32, #tpu.memory_space<vmem>>, vector<32x8x32xf32>
    tpu.vector_store %arg8[%c0_27, %c0_28, %c0_29], %57 {strides = array<i32>} : memref<32x8x32xf32, #tpu.memory_space<vmem>>, vector<32x8x32xf32>,
    return
  }
  func.func @transform_0(%arg0: i32) -> (i32, i32, i32) {
    %c0_i32 = arith.constant 0 : i32
    %c0_i32_0 = arith.constant 0 : i32
    %c0_i32_1 = arith.constant 0 : i32
    return %arg0, %c0_i32, %c0_i32_0 : i32, i32, i32
  }
  func.func @transform_1(%arg0: i32) -> (i32, i32) {
    %c0_i32 = arith.constant 0 : i32
    %c0_i32_0 = arith.constant 0 : i32
    %c0_i32_1 = arith.constant 0 : i32
    return %c0_i32, %c0_i32_0 : i32, i32
  }
  func.func @transform_2(%arg0: i32) -> (i32, i32) {
    %c0_i32 = arith.constant 0 : i32
    %c0_i32_0 = arith.constant 0 : i32
    %c0_i32_1 = arith.constant 0 : i32
    return %c0_i32, %c0_i32_0 : i32, i32
  }
  func.func @transform_3(%arg0: i32) -> (i32, i32) {
    %c0_i32 = arith.constant 0 : i32
    %c0_i32_0 = arith.constant 0 : i32
    %c0_i32_1 = arith.constant 0 : i32
    return %c0_i32, %c0_i32_0 : i32, i32
  }
  func.func @transform_4(%arg0: i32) -> (i32, i32) {
    %c0_i32 = arith.constant 0 : i32
    %c0_i32_0 = arith.constant 0 : i32
    %c0_i32_1 = arith.constant 0 : i32
    return %c0_i32, %c0_i32_0 : i32, i32
  }
  func.func @transform_5(%arg0: i32) -> (i32, i32) {
    %c0_i32 = arith.constant 0 : i32
    %c0_i32_0 = arith.constant 0 : i32
    %c0_i32_1 = arith.constant 0 : i32
    return %c0_i32, %c0_i32_0 : i32, i32
  }
  func.func @transform_6(%arg0: i32) -> (i32, i32) {
    %c0_i32 = arith.constant 0 : i32
    %c0_i32_0 = arith.constant 0 : i32
    %c0_i32_1 = arith.constant 0 : i32
    return %c0_i32, %c0_i32_0 : i32, i32
  }
  func.func @transform_7(%arg0: i32) -> (i32, i32, i32) {
    %c0_i32 = arith.constant 0 : i32
    %c0_i32_0 = arith.constant 0 : i32
    %c0_i32_1 = arith.constant 0 : i32
    return %arg0, %c0_i32, %c0_i32_0 : i32, i32, i32
  }
}

</mosaic_0001>

<llo_original>
// kernel: tpu_custom_call.1
$region0: #{tpu_custom_call.1}
  #allocation0 [shape = 'u32[]', space=smem, size = 0x4, offset = 0x4, fixed_abs, tag = 'smem constant byte address 0x4 - core index']
  #allocation1 [shape = 'u32[144,128]{1,0:T(1,128)}', space=vmem, size = 0x12000, scoped, tag = 'internal scratch']
  %s0 = inlined_call_operand.vmem [shape: f32[64,8,32], index: 0, kind: input, shape index: {}]
  %s1 = inlined_call_operand.vmem [shape: f32[32,768], index: 1, kind: input, shape index: {}]
  %s2 = inlined_call_operand.vmem [shape: f32[1,768], index: 2, kind: input, shape index: {}]
  %s3 = inlined_call_operand.vmem [shape: f32[256,256], index: 3, kind: input, shape index: {}]
  %s4 = inlined_call_operand.vmem [shape: f32[256,32], index: 4, kind: input, shape index: {}]
  %s5 = inlined_call_operand.vmem [shape: f32[32,32], index: 5, kind: input, shape index: {}]
  %s6 = inlined_call_operand.vmem [shape: f32[4,32], index: 6, kind: input, shape index: {}]
  %s7 = inlined_call_operand.vmem [shape: f32[64,8,32], index: 7, kind: output, shape index: {}]
  %s8 = sld [smem:[#allocation0]]
  $region61: #{tpu_custom_call.1} parent=0
    _
  %s10 = ssub.s32 1, %s8
  %s11 = scalar_select 0, %s10, %s8
  loop: start=0, step=1, limit=4
  $region2: #{tpu_custom_call.1} parent=0 // loop_pre_header
    _
  $region3: #{tpu_custom_call.1} parent=0 // loop_header
    %s13 = sphi 0, %s17
    %p14 = scmp.ge.s32.totalorder %s13, 4
    %s23 = sphi 0, %s25
    %s26 = sphi 0, %s23
    %s27 = sphi 0, %s26
    %s43 = sphi 0, %s27
    %s47 = sphi 0, %s47
    %s49 = sphi 0, %s47
    %s50 = sphi 0, %s49
    %s64 = sphi 0, %s50
    %s68 = sphi 0, %s68
    %s70 = sphi 0, %s68
    %s71 = sphi 0, %s70
    %s85 = sphi 0, %s71
    %s89 = sphi 0, %s89
    %s91 = sphi 0, %s89
    %s92 = sphi 0, %s91
    %s106 = sphi 0, %s92
    %s110 = sphi 0, %s110
    %s112 = sphi 0, %s110
    %s113 = sphi 0, %s112
    %s127 = sphi 0, %s113
    %s131 = sphi 0, %s131
    %s133 = sphi 0, %s131
    %s134 = sphi 0, %s133
    %s148 = sphi 0, %s134
    %s152 = sphi 0, %s152
    %s154 = sphi 0, %s152
    %s155 = sphi 0, %s154
    %s169 = sphi 0, %s155
    %s175 = sphi 0, %s177
    %s178 = sphi 0, %s175
    %s179 = sphi 0, %s178
    %s195 = sphi 0, %s179
  $region4: #{tpu_custom_call.1} parent=0 // loop_header_branch
    %16 = sbr.rel (%p14) target = $region8
  $region5: #{tpu_custom_call.1} parent=0 // loop_body
    %s18 = ssub.s32 %s13, 1
    %s19 = ssub.s32 %s13, 2
    %s20 = sadd.s32 %s13, 1
    %s21 = ssub.s32 %s13, %s20
    %p22 = scmp.eq.s32.totalorder %s21, 0
    %s24 = sadd.s32 %s23, 1
    %s25 = scalar_select %p22, %s23, %s24
    %p28 = pneg %p22
    %p29 = scmp.eq.s32.totalorder %s13, 1
    %p30 = por %p28, %p29
    %p31 = scmp.ne.s32.totalorder %s23, %s26
    %p32 = scmp.eq.s32.totalorder %s13, 0
    %p33 = por %p31, %p32
    %p34 = scmp.ne.s32.totalorder %s23, %s26
    %p35 = scmp.eq.s32.totalorder %s18, 1
    %p36 = por %p34, %p35
    %p37 = scmp.ne.s32.totalorder %s26, %s27
    %p38 = scmp.eq.s32.totalorder %s18, 0
    %p39 = por %p37, %p38
    %p40 = scmp.ne.s32.totalorder %s26, %s27
    %p41 = scmp.eq.s32.totalorder %s19, 1
    %p42 = por %p40, %p41
    %p44 = scmp.ne.s32.totalorder %s27, %s43
    %p45 = scmp.eq.s32.totalorder %s19, 0
    %p46 = por %p44, %p45
    %s48 = sadd.s32 %s47, 1
    %p51 = scmp.eq.s32.totalorder %s13, 1
    %p52 = scmp.ne.s32.totalorder %s47, %s49
    %p53 = scmp.eq.s32.totalorder %s13, 0
    %p54 = por %p52, %p53
    %p55 = scmp.ne.s32.totalorder %s47, %s49
    %p56 = scmp.eq.s32.totalorder %s18, 1
    %p57 = por %p55, %p56
    %p58 = scmp.ne.s32.totalorder %s49, %s50
    %p59 = scmp.eq.s32.totalorder %s18, 0
    %p60 = por %p58, %p59
    %p61 = scmp.ne.s32.totalorder %s49, %s50
    %p62 = scmp.eq.s32.totalorder %s19, 1
    %p63 = por %p61, %p62
    %p65 = scmp.ne.s32.totalorder %s50, %s64
    %p66 = scmp.eq.s32.totalorder %s19, 0
    %p67 = por %p65, %p66
    %s69 = sadd.s32 %s68, 1
    %p72 = scmp.eq.s32.totalorder %s13, 1
    %p73 = scmp.ne.s32.totalorder %s68, %s70
    %p74 = scmp.eq.s32.totalorder %s13, 0
    %p75 = por %p73, %p74
    %p76 = scmp.ne.s32.totalorder %s68, %s70
    %p77 = scmp.eq.s32.totalorder %s18, 1
    %p78 = por %p76, %p77
    %p79 = scmp.ne.s32.totalorder %s70, %s71
    %p80 = scmp.eq.s32.totalorder %s18, 0
    %p81 = por %p79, %p80
    %p82 = scmp.ne.s32.totalorder %s70, %s71
    %p83 = scmp.eq.s32.totalorder %s19, 1
    %p84 = por %p82, %p83
    %p86 = scmp.ne.s32.totalorder %s71, %s85
    %p87 = scmp.eq.s32.totalorder %s19, 0
    %p88 = por %p86, %p87
    %s90 = sadd.s32 %s89, 1
    %p93 = scmp.eq.s32.totalorder %s13, 1
    %p94 = scmp.ne.s32.totalorder %s89, %s91
    %p95 = scmp.eq.s32.totalorder %s13, 0
    %p96 = por %p94, %p95
    %p97 = scmp.ne.s32.totalorder %s89, %s91
    %p98 = scmp.eq.s32.totalorder %s18, 1
    %p99 = por %p97, %p98
    %p100 = scmp.ne.s32.totalorder %s91, %s92
    %p101 = scmp.eq.s32.totalorder %s18, 0
    %p102 = por %p100, %p101
    %p103 = scmp.ne.s32.totalorder %s91, %s92
    %p104 = scmp.eq.s32.totalorder %s19, 1
    %p105 = por %p103, %p104
    %p107 = scmp.ne.s32.totalorder %s92, %s106
    %p108 = scmp.eq.s32.totalorder %s19, 0
    %p109 = por %p107, %p108
    %s111 = sadd.s32 %s110, 1
    %p114 = scmp.eq.s32.totalorder %s13, 1
    %p115 = scmp.ne.s32.totalorder %s110, %s112
    %p116 = scmp.eq.s32.totalorder %s13, 0
    %p117 = por %p115, %p116
    %p118 = scmp.ne.s32.totalorder %s110, %s112
    %p119 = scmp.eq.s32.totalorder %s18, 1
    %p120 = por %p118, %p119
    %p121 = scmp.ne.s32.totalorder %s112, %s113
    %p122 = scmp.eq.s32.totalorder %s18, 0
    %p123 = por %p121, %p122
    %p124 = scmp.ne.s32.totalorder %s112, %s113
    %p125 = scmp.eq.s32.totalorder %s19, 1
    %p126 = por %p124, %p125
    %p128 = scmp.ne.s32.totalorder %s113, %s127
    %p129 = scmp.eq.s32.totalorder %s19, 0
    %p130 = por %p128, %p129
    %s132 = sadd.s32 %s131, 1
    %p135 = scmp.eq.s32.totalorder %s13, 1
    %p136 = scmp.ne.s32.totalorder %s131, %s133
    %p137 = scmp.eq.s32.totalorder %s13, 0
    %p138 = por %p136, %p137
    %p139 = scmp.ne.s32.totalorder %s131, %s133
    %p140 = scmp.eq.s32.totalorder %s18, 1
    %p141 = por %p139, %p140
    %p142 = scmp.ne.s32.totalorder %s133, %s134
    %p143 = scmp.eq.s32.totalorder %s18, 0
    %p144 = por %p142, %p143
    %p145 = scmp.ne.s32.totalorder %s133, %s134
    %p146 = scmp.eq.s32.totalorder %s19, 1
    %p147 = por %p145, %p146
    %p149 = scmp.ne.s32.totalorder %s134, %s148
    %p150 = scmp.eq.s32.totalorder %s19, 0
    %p151 = por %p149, %p150
    %s153 = sadd.s32 %s152, 1
    %p156 = scmp.eq.s32.totalorder %s13, 1
    %p157 = scmp.ne.s32.totalorder %s152, %s154
    %p158 = scmp.eq.s32.totalorder %s13, 0
    %p159 = por %p157, %p158
    %p160 = scmp.ne.s32.totalorder %s152, %s154
    %p161 = scmp.eq.s32.totalorder %s18, 1
    %p162 = por %p160, %p161
    %p163 = scmp.ne.s32.totalorder %s154, %s155
    %p164 = scmp.eq.s32.totalorder %s18, 0
    %p165 = por %p163, %p164
    %p166 = scmp.ne.s32.totalorder %s154, %s155
    %p167 = scmp.eq.s32.totalorder %s19, 1
    %p168 = por %p166, %p167
    %p170 = scmp.ne.s32.totalorder %s155, %s169
    %p171 = scmp.eq.s32.totalorder %s19, 0
    %p172 = por %p170, %p171
    %s173 = ssub.s32 %s13, %s20
    %p174 = scmp.eq.s32.totalorder %s173, 0
    %s176 = sadd.s32 %s175, 1
    %s177 = scalar_select %p174, %s175, %s176
    %p180 = pneg %p174
    %p181 = scmp.eq.s32.totalorder %s13, 1
    %p182 = por %p180, %p181
    %p183 = scmp.ne.s32.totalorder %s175, %s178
    %p184 = scmp.eq.s32.totalorder %s13, 0
    %p185 = por %p183, %p184
    %p186 = scmp.ne.s32.totalorder %s175, %s178
    %p187 = scmp.eq.s32.totalorder %s18, 1
    %p188 = por %p186, %p187
    %p189 = scmp.ne.s32.totalorder %s178, %s179
    %p190 = scmp.eq.s32.totalorder %s18, 0
    %p191 = por %p189, %p190
    %p192 = scmp.ne.s32.totalorder %s178, %s179
    %p193 = scmp.eq.s32.totalorder %s19, 1
    %p194 = por %p192, %p193
    %p196 = scmp.ne.s32.totalorder %s179, %s195
    %p197 = scmp.eq.s32.totalorder %s19, 0
    %p198 = por %p196, %p197
    %p199 = scmp.le.s32.totalorder 1, %s13
    %p200 = scmp.lt.s32.totalorder %s13, 3
    %p201 = pnand %p199, %p200
    %p202 = pneg %p201
    // Predicated region
    $region9: #{tpu_custom_call.1} parent=5 // pred_check
      _
    $region10: #{tpu_custom_call.1} parent=5 // pred_check_branch
      %204 = sbr.rel (%p201) target = $region12
    $region11: #{tpu_custom_call.1} parent=5 // pred_region
      %s205 = ssub.s32 %s13, 1
      // Predicated region
      $region13: #{tpu_custom_call.1} parent=11 // pred_check
        %p206 = pneg %p60
      $region14: #{tpu_custom_call.1} parent=11 // pred_check_branch
        %208 = sbr.rel (%p206) target = $region16
      $region15: #{tpu_custom_call.1} parent=11 // pred_region
        _
      $region16: #{tpu_custom_call.1} parent=11 // pred_fallthru
        _
      // Predicated region
      $region17: #{tpu_custom_call.1} parent=11 // pred_check
        %p209 = pneg %p81
      $region18: #{tpu_custom_call.1} parent=11 // pred_check_branch
        %211 = sbr.rel (%p209) target = $region20
      $region19: #{tpu_custom_call.1} parent=11 // pred_region
        _
      $region20: #{tpu_custom_call.1} parent=11 // pred_fallthru
        _
      // Predicated region
      $region21: #{tpu_custom_call.1} parent=11 // pred_check
        %p212 = pneg %p102
      $region22: #{tpu_custom_call.1} parent=11 // pred_check_branch
        %214 = sbr.rel (%p212) target = $region24
      $region23: #{tpu_custom_call.1} parent=11 // pred_region
        _
      $region24: #{tpu_custom_call.1} parent=11 // pred_fallthru
        _
      // Predicated region
      $region25: #{tpu_custom_call.1} parent=11 // pred_check
        %p215 = pneg %p123
      $region26: #{tpu_custom_call.1} parent=11 // pred_check_branch
        %217 = sbr.rel (%p215) target = $region28
      $region27: #{tpu_custom_call.1} parent=11 // pred_region
        _
      $region28: #{tpu_custom_call.1} parent=11 // pred_fallthru
        _
      // Predicated region
      $region29: #{tpu_custom_call.1} parent=11 // pred_check
        %p218 = pneg %p144
      $region30: #{tpu_custom_call.1} parent=11 // pred_check_branch
        %220 = sbr.rel (%p218) target = $region32
      $region31: #{tpu_custom_call.1} parent=11 // pred_region
        _
      $region32: #{tpu_custom_call.1} parent=11 // pred_fallthru
        _
      // Predicated region
      $region33: #{tpu_custom_call.1} parent=11 // pred_check
        %p221 = pneg %p165
      $region34: #{tpu_custom_call.1} parent=11 // pred_check_branch
        %223 = sbr.rel (%p221) target = $region36
      $region35: #{tpu_custom_call.1} parent=11 // pred_region
        _
      $region36: #{tpu_custom_call.1} parent=11 // pred_fallthru
        _
    $region12: #{tpu_custom_call.1} parent=5 // pred_fallthru
      _
    %p224 = scmp.lt.s32.totalorder %s13, 2
    // Predicated region
    $region37: #{tpu_custom_call.1} parent=5 // pred_check
      %p225 = pneg %p224
    $region38: #{tpu_custom_call.1} parent=5 // pred_check_branch
      %227 = sbr.rel (%p225) target = $region40
    $region39: #{tpu_custom_call.1} parent=5 // pred_region
      // Predicated region
      $region41: #{tpu_custom_call.1} parent=39 // pred_check
        %p228 = pneg %p33
      $region42: #{tpu_custom_call.1} parent=39 // pred_check_branch
        %230 = sbr.rel (%p228) target = $region44
      $region43: #{tpu_custom_call.1} parent=39 // pred_region
        %s231 = smul.u32 32, %s13
        %p232 = scmp.lt.s32.totalorder %s231, 63
        %s233 = scalar_select %p232, %s231, 63
        %s234 = smul.addr %s233, 8
        %s235 = scalar_lea.vmem %s0, %s234
        %s236 = smul.u32 32, %s13
      $region44: #{tpu_custom_call.1} parent=39 // pred_fallthru
        _
    $region40: #{tpu_custom_call.1} parent=5 // pred_fallthru
      _
    %p237 = scmp.le.s32.totalorder 1, %s13
    %p238 = scmp.lt.s32.totalorder %s13, 3
    %p239 = pnand %p237, %p238
    %p240 = pneg %p239
    // Predicated region
    $region45: #{tpu_custom_call.1} parent=5 // pred_check
      _
    $region46: #{tpu_custom_call.1} parent=5 // pred_check_branch
      %242 = sbr.rel (%p239) target = $region48
    $region47: #{tpu_custom_call.1} parent=5 // pred_region
      %s243 = ssub.s32 %s13, 1
      %s244 = smul.u32 32, %s18
      %p245 = scmp.lt.s32.totalorder %s244, 63
      %s246 = scalar_select %p245, %s244, 63
      %s247 = smul.addr %s246, 8
      %s248 = scalar_lea.vmem %s0, %s247
      %p249 = pneg %p39
      %p250 = pneg %p36
      %p251 = pneg %p60
      %p252 = pneg %p57
      %p253 = pneg %p81
      %p254 = pneg %p78
      %p255 = pneg %p102
      %p256 = pneg %p99
      %p257 = pneg %p123
      %p258 = pneg %p120
      %p259 = pneg %p144
      %p260 = pneg %p141
      %p261 = pneg %p165
      %p262 = pneg %p162
      %p263 = pneg %p191
      %p264 = pneg %p188
      %s265 = smul.u32 32, %s18
      %p266 = scmp.lt.s32.totalorder %s265, 63
      %s267 = scalar_select %p266, %s265, 63
      %s268 = smul.addr %s267, 8
      %s269 = scalar_lea.vmem %s7, %s268
      %s270 = smul.u32 32, %s18
      %p271 = scmp.lt.s32.totalorder %s270, 63
      %s272 = scalar_select %p271, %s270, 63
      %s273 = smul.addr %s272, 8
      %s274 = scalar_lea.vmem %s0, %s273
      %s275 = smul.u32 32, %s18
      %s276 = smul.u32 32, %s18
      %p277 = scmp.lt.s32.totalorder %s276, 63
      %s278 = scalar_select %p277, %s276, 63
      %s279 = smul.addr %s278, 8
      %s280 = scalar_lea.vmem %s7, %s279
      %s281 = smul.u32 32, %s18
      %v282 = vld [vmem:[%s274] sm:$0xff]
      %v283 = vld [vmem:[%s274 + $0x8] sm:$0xff]
      %v284 = vld [vmem:[%s274 + $0x10] sm:$0xff]
      %v285 = vld [vmem:[%s274 + $0x18] sm:$0xff]
      %v286 = vld [vmem:[%s274 + $0x20] sm:$0xff]
      %v287 = vld [vmem:[%s274 + $0x28] sm:$0xff]
      %v288 = vld [vmem:[%s274 + $0x30] sm:$0xff]
      %v289 = vld [vmem:[%s274 + $0x38] sm:$0xff]
      %v290 = vld [vmem:[%s274 + $0x40] sm:$0xff]
      %v291 = vld [vmem:[%s274 + $0x48] sm:$0xff]
      %v292 = vld [vmem:[%s274 + $0x50] sm:$0xff]
      %v293 = vld [vmem:[%s274 + $0x58] sm:$0xff]
      %v294 = vld [vmem:[%s274 + $0x60] sm:$0xff]
      %v295 = vld [vmem:[%s274 + $0x68] sm:$0xff]
      %v296 = vld [vmem:[%s274 + $0x70] sm:$0xff]
      %v297 = vld [vmem:[%s274 + $0x78] sm:$0xff]
      %v298 = vld [vmem:[%s274 + $0x80] sm:$0xff]
      %v299 = vld [vmem:[%s274 + $0x88] sm:$0xff]
      %v300 = vld [vmem:[%s274 + $0x90] sm:$0xff]
      %v301 = vld [vmem:[%s274 + $0x98] sm:$0xff]
      %v302 = vld [vmem:[%s274 + $0xa0] sm:$0xff]
      %v303 = vld [vmem:[%s274 + $0xa8] sm:$0xff]
      %v304 = vld [vmem:[%s274 + $0xb0] sm:$0xff]
      %v305 = vld [vmem:[%s274 + $0xb8] sm:$0xff]
      %v306 = vld [vmem:[%s274 + $0xc0] sm:$0xff]
      %v307 = vld [vmem:[%s274 + $0xc8] sm:$0xff]
      %v308 = vld [vmem:[%s274 + $0xd0] sm:$0xff]
      %v309 = vld [vmem:[%s274 + $0xd8] sm:$0xff]
      %v310 = vld [vmem:[%s274 + $0xe0] sm:$0xff]
      %v311 = vld [vmem:[%s274 + $0xe8] sm:$0xff]
      %v312 = vld [vmem:[%s274 + $0xf0] sm:$0xff]
      %v313 = vld [vmem:[%s274 + $0xf8] sm:$0xff]
      %v314 = vld [vmem:[%s1] sm:$0xff]
      %v315 = vld [vmem:[%s1 + $0x8] sm:$0xff]
      %v316 = vld [vmem:[%s1 + $0x10] sm:$0xff]
      %v317 = vld [vmem:[%s1 + $0x18] sm:$0xff]
      %v318 = vld [vmem:[%s1 + $0x20] sm:$0xff]
      %v319 = vld [vmem:[%s1 + $0x28] sm:$0xff]
      %v320 = vld [vmem:[%s1 + $0x30] sm:$0xff]
      %v321 = vld [vmem:[%s1 + $0x38] sm:$0xff]
      %v322 = vld [vmem:[%s1 + $0x40] sm:$0xff]
      %v323 = vld [vmem:[%s1 + $0x48] sm:$0xff]
      %v324 = vld [vmem:[%s1 + $0x50] sm:$0xff]
      %v325 = vld [vmem:[%s1 + $0x58] sm:$0xff]
      %v326 = vld [vmem:[%s1 + $0x60] sm:$0xff]
      %v327 = vld [vmem:[%s1 + $0x68] sm:$0xff]
      %v328 = vld [vmem:[%s1 + $0x70] sm:$0xff]
      %v329 = vld [vmem:[%s1 + $0x78] sm:$0xff]
      %v330 = vld [vmem:[%s1 + $0x80] sm:$0xff]
      %v331 = vld [vmem:[%s1 + $0x88] sm:$0xff]
      %v332 = vld [vmem:[%s1 + $0x90] sm:$0xff]
      %v333 = vld [vmem:[%s1 + $0x98] sm:$0xff]
      %v334 = vld [vmem:[%s1 + $0xa0] sm:$0xff]
      %v335 = vld [vmem:[%s1 + $0xa8] sm:$0xff]
      %v336 = vld [vmem:[%s1 + $0xb0] sm:$0xff]
      %v337 = vld [vmem:[%s1 + $0xb8] sm:$0xff]
      %v338 = vld [vmem:[%s2] sm:$0x3f]
      %v340 = vlaneseq
      %v341 = vshrl.u32 %v340, 7
      %v342 = vsub.s32 0, %v341
      %v343 = vrot.slane %v338, %v342
      %v344 = vlaneseq
      %v345 = vshrl.u32 %v344, 7
      %v346 = vsub.s32 1, %v345
      %v347 = vrot.slane %v338, %v346
      %v348 = vlaneseq
      %v349 = vshrl.u32 %v348, 7
      %v350 = vsub.s32 2, %v349
      %v351 = vrot.slane %v338, %v350
      %v352 = vlaneseq
      %v353 = vshrl.u32 %v352, 7
      %v354 = vsub.s32 3, %v353
      %v355 = vrot.slane %v338, %v354
      %v356 = vlaneseq
      %v357 = vshrl.u32 %v356, 7
      %v358 = vsub.s32 4, %v357
      %v359 = vrot.slane %v338, %v358
      %v360 = vlaneseq
      %v361 = vshrl.u32 %v360, 7
      %v362 = vsub.s32 5, %v361
      %v363 = vrot.slane %v338, %v362
      %vm370 = vcmask 261120
      %v372 = vsel %vm370, %v282, 0
      %v375 = vsel %vm370, %v283, 0
      %v378 = vsel %vm370, %v284, 0
      %v381 = vsel %vm370, %v285, 0
      %v384 = vsel %vm370, %v286, 0
      %v387 = vsel %vm370, %v287, 0
      %v390 = vsel %vm370, %v288, 0
      %v393 = vsel %vm370, %v289, 0
      %v396 = vsel %vm370, %v290, 0
      %v399 = vsel %vm370, %v291, 0
      %v402 = vsel %vm370, %v292, 0
      %v405 = vsel %vm370, %v293, 0
      %v408 = vsel %vm370, %v294, 0
      %v411 = vsel %vm370, %v295, 0
      %v414 = vsel %vm370, %v296, 0
      %v417 = vsel %vm370, %v297, 0
      %v420 = vsel %vm370, %v298, 0
      %v423 = vsel %vm370, %v299, 0
      %v426 = vsel %vm370, %v300, 0
      %v429 = vsel %vm370, %v301, 0
      %v432 = vsel %vm370, %v302, 0
      %v435 = vsel %vm370, %v303, 0
      %v438 = vsel %vm370, %v304, 0
      %v441 = vsel %vm370, %v305, 0
      %v444 = vsel %vm370, %v306, 0
      %v447 = vsel %vm370, %v307, 0
      %v450 = vsel %vm370, %v308, 0
      %v453 = vsel %vm370, %v309, 0
      %v456 = vsel %vm370, %v310, 0
      %v459 = vsel %vm370, %v311, 0
      %v462 = vsel %vm370, %v312, 0
      %v465 = vsel %vm370, %v313, 0
      %467 = vmatprep.subr.mxu0 %v315
      %468 = vmatpush1.msra.mxu0 %v314
      %469 = vmatprep.subr.mxu0 %v321
      %470 = vmatpush1.msra.mxu0 %v320
      %471 = vmatprep.subr.mxu0 %v327
      %472 = vmatpush1.msra.mxu0 %v326
      %473 = vmatprep.subr.mxu0 %v333
      %474 = vmatpush1.msra.mxu0 %v332
      %475 = vmatprep.subr.mxu0 0.0
      %476 = vmatpush1.msra.mxu0 0.0
      %477 = vmatprep.subr.mxu0 0.0
      %478 = vmatpush1.msra.mxu0 0.0
      %479 = vmatprep.subr.mxu0 0.0
      %480 = vmatpush1.msra.mxu0 0.0
      %481 = vmatprep.subr.mxu0 0.0
      %482 = vmatpush1.msra.mxu0 0.0
      %483 = vmatprep.subr.mxu0 0.0
      %484 = vmatpush1.msra.mxu0 0.0
      %485 = vmatprep.subr.mxu0 0.0
      %486 = vmatpush1.msra.mxu0 0.0
      %487 = vmatprep.subr.mxu0 0.0
      %488 = vmatpush1.msra.mxu0 0.0
      %489 = vmatprep.subr.mxu0 0.0
      %490 = vmatpush1.msra.mxu0 0.0
      %491 = vmatprep.subr.mxu0 0.0
      %492 = vmatpush1.msra.mxu0 0.0
      %493 = vmatprep.subr.mxu0 0.0
      %494 = vmatpush1.msra.mxu0 0.0
      %495 = vmatprep.subr.mxu0 0.0
      %496 = vmatpush1.msra.mxu0 0.0
      %497 = vmatprep.subr.mxu0 0.0
      %498 = vmatpush1.msra.mxu0 0.0
      %499 = vmatprep.subr.mxu0 0.0
      %500 = vmatpush1.msra.mxu0 0.0
      %501 = vmatprep.subr.mxu0 0.0
      %502 = vmatpush1.msra.mxu0 0.0
      %503 = vmatprep.subr.mxu0 0.0
      %504 = vmatpush1.msra.mxu0 0.0
      %505 = vmatprep.subr.mxu0 0.0
      %506 = vmatpush1.msra.mxu0 0.0
      %507 = vmatprep.subr.mxu0 0.0
      %508 = vmatpush1.msra.mxu0 0.0
      %509 = vmatprep.subr.mxu0 0.0
      %510 = vmatpush1.msra.mxu0 0.0
      %511 = vmatprep.subr.mxu0 0.0
      %512 = vmatpush1.msra.mxu0 0.0
      %513 = vmatprep.subr.mxu0 0.0
      %514 = vmatpush1.msra.mxu0 0.0
      %515 = vmatprep.subr.mxu0 0.0
      %516 = vmatpush1.msra.mxu0 0.0
      %517 = vmatprep.subr.mxu0 0.0
      %518 = vmatpush1.msra.mxu0 0.0
      %519 = vmatprep.subr.mxu0 0.0
      %520 = vmatpush1.msra.mxu0 0.0
      %521 = vmatprep.subr.mxu0 0.0
      %522 = vmatpush1.msra.mxu0 0.0
      %523 = vmatprep.subr.mxu0 0.0
      %524 = vmatpush1.msra.mxu0 0.0
      %525 = vmatprep.subr.mxu0 0.0
      %526 = vmatpush1.msra.mxu0 0.0
      %527 = vmatprep.subr.mxu0 0.0
      %528 = vmatpush1.msra.mxu0 0.0
      %529 = vmatprep.subr.mxu0 0.0
      %530 = vmatpush1.msra.mxu0 0.0
      %531 = vmatprep.mubr.f32.mxu0 0.0
      %532 = vmatmul.mubr.f32.gmra.mrb[0].mxu0 %v372
      %v533 = vpop.f32.mrb[0].mxu0
      %v534 = vadd.f32 %v343, %v533
      %v535 = vpop.f32.mrb[0].mxu0
      %v536 = vadd.f32 %v347, %v535
      %537 = vmatprep.mubr.f32.mxu0 0.0
      %538 = vmatmul.mubr.f32.gmra.mrb[0].mxu0 %v375
      %v539 = vpop.f32.mrb[0].mxu0
      %v540 = vadd.f32 %v343, %v539
      %v541 = vpop.f32.mrb[0].mxu0
      %v542 = vadd.f32 %v347, %v541
      %543 = vmatprep.mubr.f32.mxu0 0.0
      %544 = vmatmul.mubr.f32.gmra.mrb[0].mxu0 %v378
      %v545 = vpop.f32.mrb[0].mxu0
      %v546 = vadd.f32 %v343, %v545
      %v547 = vpop.f32.mrb[0].mxu0
      %v548 = vadd.f32 %v347, %v547
      %549 = vmatprep.mubr.f32.mxu0 0.0
      %550 = vmatmul.mubr.f32.gmra.mrb[0].mxu0 %v381
      %v551 = vpop.f32.mrb[0].mxu0
      %v552 = vadd.f32 %v343, %v551
      %v553 = vpop.f32.mrb[0].mxu0
      %v554 = vadd.f32 %v347, %v553
      %555 = vmatprep.mubr.f32.mxu0 0.0
      %556 = vmatmul.mubr.f32.gmra.mrb[0].mxu0 %v384
      %v557 = vpop.f32.mrb[0].mxu0
      %v558 = vadd.f32 %v343, %v557
      %v559 = vpop.f32.mrb[0].mxu0
      %v560 = vadd.f32 %v347, %v559
      %561 = vmatprep.mubr.f32.mxu0 0.0
      %562 = vmatmul.mubr.f32.gmra.mrb[0].mxu0 %v387
      %v563 = vpop.f32.mrb[0].mxu0
      %v564 = vadd.f32 %v343, %v563
      %v565 = vpop.f32.mrb[0].mxu0
      %v566 = vadd.f32 %v347, %v565
      %567 = vmatprep.mubr.f32.mxu0 0.0
      %568 = vmatmul.mubr.f32.gmra.mrb[0].mxu0 %v390
      %v569 = vpop.f32.mrb[0].mxu0
      %v570 = vadd.f32 %v343, %v569
      %v571 = vpop.f32.mrb[0].mxu0
      %v572 = vadd.f32 %v347, %v571
      %573 = vmatprep.mubr.f32.mxu0 0.0
      %574 = vmatmul.mubr.f32.gmra.mrb[0].mxu0 %v393
      %v575 = vpop.f32.mrb[0].mxu0
      %v576 = vadd.f32 %v343, %v575
      %v577 = vpop.f32.mrb[0].mxu0
      %v578 = vadd.f32 %v347, %v577
      %579 = vmatprep.mubr.f32.mxu0 0.0
      %580 = vmatmul.mubr.f32.gmra.mrb[0].mxu0 %v396
      %v581 = vpop.f32.mrb[0].mxu0
      %v582 = vadd.f32 %v343, %v581
      %v583 = vpop.f32.mrb[0].mxu0
      %v584 = vadd.f32 %v347, %v583
      %585 = vmatprep.mubr.f32.mxu0 0.0
      %586 = vmatmul.mubr.f32.gmra.mrb[0].mxu0 %v399
      %v587 = vpop.f32.mrb[0].mxu0
      %v588 = vadd.f32 %v343, %v587
      %v589 = vpop.f32.mrb[0].mxu0
      %v590 = vadd.f32 %v347, %v589
      %591 = vmatprep.mubr.f32.mxu0 0.0
      %592 = vmatmul.mubr.f32.gmra.mrb[0].mxu0 %v402
      %v593 = vpop.f32.mrb[0].mxu0
      %v594 = vadd.f32 %v343, %v593
      %v595 = vpop.f32.mrb[0].mxu0
      %v596 = vadd.f32 %v347, %v595
      %597 = vmatprep.mubr.f32.mxu0 0.0
      %598 = vmatmul.mubr.f32.gmra.mrb[0].mxu0 %v405
      %v599 = vpop.f32.mrb[0].mxu0
      %v600 = vadd.f32 %v343, %v599
      %v601 = vpop.f32.mrb[0].mxu0
      %v602 = vadd.f32 %v347, %v601
      %603 = vmatprep.mubr.f32.mxu0 0.0
      %604 = vmatmul.mubr.f32.gmra.mrb[0].mxu0 %v408
      %v605 = vpop.f32.mrb[0].mxu0
      %v606 = vadd.f32 %v343, %v605
      %v607 = vpop.f32.mrb[0].mxu0
      %v608 = vadd.f32 %v347, %v607
      %609 = vmatprep.mubr.f32.mxu0 0.0
      %610 = vmatmul.mubr.f32.gmra.mrb[0].mxu0 %v411
      %v611 = vpop.f32.mrb[0].mxu0
      %v612 = vadd.f32 %v343, %v611
      %v613 = vpop.f32.mrb[0].mxu0
      %v614 = vadd.f32 %v347, %v613
      %615 = vmatprep.mubr.f32.mxu0 0.0
      %616 = vmatmul.mubr.f32.gmra.mrb[0].mxu0 %v414
      %v617 = vpop.f32.mrb[0].mxu0
      %v618 = vadd.f32 %v343, %v617
      %v619 = vpop.f32.mrb[0].mxu0
      %v620 = vadd.f32 %v347, %v619
      %621 = vmatprep.mubr.f32.mxu0 0.0
      %622 = vmatmul.mubr.f32.gmra.mrb[0].mxu0 %v417
      %v623 = vpop.f32.mrb[0].mxu0
      %v624 = vadd.f32 %v343, %v623
      %v625 = vpop.f32.mrb[0].mxu0
      %v626 = vadd.f32 %v347, %v625
      %627 = vmatprep.mubr.f32.mxu0 0.0
      %628 = vmatmul.mubr.f32.gmra.mrb[0].mxu0 %v420
      %v629 = vpop.f32.mrb[0].mxu0
      %v630 = vadd.f32 %v343, %v629
      %v631 = vpop.f32.mrb[0].mxu0
      %v632 = vadd.f32 %v347, %v631
      %633 = vmatprep.mubr.f32.mxu0 0.0
      %634 = vmatmul.mubr.f32.gmra.mrb[0].mxu0 %v423
      %v635 = vpop.f32.mrb[0].mxu0
      %v636 = vadd.f32 %v343, %v635
      %v637 = vpop.f32.mrb[0].mxu0
      %v638 = vadd.f32 %v347, %v637
      %639 = vmatprep.mubr.f32.mxu0 0.0
      %640 = vmatmul.mubr.f32.gmra.mrb[0].mxu0 %v426
      %v641 = vpop.f32.mrb[0].mxu0
      %v642 = vadd.f32 %v343, %v641
      %v643 = vpop.f32.mrb[0].mxu0
      %v644 = vadd.f32 %v347, %v643
      %645 = vmatprep.mubr.f32.mxu0 0.0
      %646 = vmatmul.mubr.f32.gmra.mrb[0].mxu0 %v429
      %v647 = vpop.f32.mrb[0].mxu0
      %v648 = vadd.f32 %v343, %v647
      %v649 = vpop.f32.mrb[0].mxu0
      %v650 = vadd.f32 %v347, %v649
      %651 = vmatprep.mubr.f32.mxu0 0.0
      %652 = vmatmul.mubr.f32.gmra.mrb[0].mxu0 %v432
      %v653 = vpop.f32.mrb[0].mxu0
      %v654 = vadd.f32 %v343, %v653
      %v655 = vpop.f32.mrb[0].mxu0
      %v656 = vadd.f32 %v347, %v655
      %657 = vmatprep.mubr.f32.mxu0 0.0
      %658 = vmatmul.mubr.f32.gmra.mrb[0].mxu0 %v435
      %v659 = vpop.f32.mrb[0].mxu0
      %v660 = vadd.f32 %v343, %v659
      %v661 = vpop.f32.mrb[0].mxu0
      %v662 = vadd.f32 %v347, %v661
      %663 = vmatprep.mubr.f32.mxu0 0.0
      %664 = vmatmul.mubr.f32.gmra.mrb[0].mxu0 %v438
      %v665 = vpop.f32.mrb[0].mxu0
      %v666 = vadd.f32 %v343, %v665
      %v667 = vpop.f32.mrb[0].mxu0
      %v668 = vadd.f32 %v347, %v667
      %669 = vmatprep.mubr.f32.mxu0 0.0
      %670 = vmatmul.mubr.f32.gmra.mrb[0].mxu0 %v441
      %v671 = vpop.f32.mrb[0].mxu0
      %v672 = vadd.f32 %v343, %v671
      %v673 = vpop.f32.mrb[0].mxu0
      %v674 = vadd.f32 %v347, %v673
      %675 = vmatprep.mubr.f32.mxu0 0.0
      %676 = vmatmul.mubr.f32.gmra.mrb[0].mxu0 %v444
      %v677 = vpop.f32.mrb[0].mxu0
      %v678 = vadd.f32 %v343, %v677
      %v679 = vpop.f32.mrb[0].mxu0
      %v680 = vadd.f32 %v347, %v679
      %681 = vmatprep.mubr.f32.mxu0 0.0
      %682 = vmatmul.mubr.f32.gmra.mrb[0].mxu0 %v447
      %v683 = vpop.f32.mrb[0].mxu0
      %v684 = vadd.f32 %v343, %v683
      %v685 = vpop.f32.mrb[0].mxu0
      %v686 = vadd.f32 %v347, %v685
      %687 = vmatprep.mubr.f32.mxu0 0.0
      %688 = vmatmul.mubr.f32.gmra.mrb[0].mxu0 %v450
      %v689 = vpop.f32.mrb[0].mxu0
      %v690 = vadd.f32 %v343, %v689
      %v691 = vpop.f32.mrb[0].mxu0
      %v692 = vadd.f32 %v347, %v691
      %693 = vmatprep.mubr.f32.mxu0 0.0
      %694 = vmatmul.mubr.f32.gmra.mrb[0].mxu0 %v453
      %v695 = vpop.f32.mrb[0].mxu0
      %v696 = vadd.f32 %v343, %v695
      %v697 = vpop.f32.mrb[0].mxu0
      %v698 = vadd.f32 %v347, %v697
      %699 = vmatprep.mubr.f32.mxu0 0.0
      %700 = vmatmul.mubr.f32.gmra.mrb[0].mxu0 %v456
      %v701 = vpop.f32.mrb[0].mxu0
      %v702 = vadd.f32 %v343, %v701
      %v703 = vpop.f32.mrb[0].mxu0
      %v704 = vadd.f32 %v347, %v703
      %705 = vmatprep.mubr.f32.mxu0 0.0
      %706 = vmatmul.mubr.f32.gmra.mrb[0].mxu0 %v459
      %v707 = vpop.f32.mrb[0].mxu0
      %v708 = vadd.f32 %v343, %v707
      %v709 = vpop.f32.mrb[0].mxu0
      %v710 = vadd.f32 %v347, %v709
      %711 = vmatprep.mubr.f32.mxu0 0.0
      %712 = vmatmul.mubr.f32.gmra.mrb[0].mxu0 %v462
      %v713 = vpop.f32.mrb[0].mxu0
      %v714 = vadd.f32 %v343, %v713
      %v715 = vpop.f32.mrb[0].mxu0
      %v716 = vadd.f32 %v347, %v715
      %717 = vmatprep.mubr.f32.mxu0 0.0
      %718 = vmatmul.mubr.f32.gmra.mrb[0].mxu0 %v465
      %v719 = vpop.f32.mrb[0].mxu0
      %v720 = vadd.f32 %v343, %v719
      %v721 = vpop.f32.mrb[0].mxu0
      %v722 = vadd.f32 %v347, %v721
      %723 = vdwg.mxu0
      %724 = vmatprep.subr.mxu0 %v317
      %725 = vmatpush1.msra.mxu0 %v316
      %726 = vmatprep.subr.mxu0 %v323
      %727 = vmatpush1.msra.mxu0 %v322
      %728 = vmatprep.subr.mxu0 %v329
      %729 = vmatpush1.msra.mxu0 %v328
      %730 = vmatprep.subr.mxu0 %v335
      %731 = vmatpush1.msra.mxu0 %v334
      %732 = vmatprep.subr.mxu0 0.0
      %733 = vmatpush1.msra.mxu0 0.0
      %734 = vmatprep.subr.mxu0 0.0
      %735 = vmatpush1.msra.mxu0 0.0
      %736 = vmatprep.subr.mxu0 0.0
      %737 = vmatpush1.msra.mxu0 0.0
      %738 = vmatprep.subr.mxu0 0.0
      %739 = vmatpush1.msra.mxu0 0.0
      %740 = vmatprep.subr.mxu0 0.0
      %741 = vmatpush1.msra.mxu0 0.0
      %742 = vmatprep.subr.mxu0 0.0
      %743 = vmatpush1.msra.mxu0 0.0
      %744 = vmatprep.subr.mxu0 0.0
      %745 = vmatpush1.msra.mxu0 0.0
      %746 = vmatprep.subr.mxu0 0.0
      %747 = vmatpush1.msra.mxu0 0.0
      %748 = vmatprep.subr.mxu0 0.0
      %749 = vmatpush1.msra.mxu0 0.0
      %750 = vmatprep.subr.mxu0 0.0
      %751 = vmatpush1.msra.mxu0 0.0
      %752 = vmatprep.subr.mxu0 0.0
      %753 = vmatpush1.msra.mxu0 0.0
      %754 = vmatprep.subr.mxu0 0.0
      %755 = vmatpush1.msra.mxu0 0.0
      %756 = vmatprep.subr.mxu0 0.0
      %757 = vmatpush1.msra.mxu0 0.0
      %758 = vmatprep.subr.mxu0 0.0
      %759 = vmatpush1.msra.mxu0 0.0
      %760 = vmatprep.subr.mxu0 0.0
      %761 = vmatpush1.msra.mxu0 0.0
      %762 = vmatprep.subr.mxu0 0.0
      %763 = vmatpush1.msra.mxu0 0.0
      %764 = vmatprep.subr.mxu0 0.0
      %765 = vmatpush1.msra.mxu0 0.0
      %766 = vmatprep.subr.mxu0 0.0
      %767 = vmatpush1.msra.mxu0 0.0
      %768 = vmatprep.subr.mxu0 0.0
      %769 = vmatpush1.msra.mxu0 0.0
      %770 = vmatprep.subr.mxu0 0.0
      %771 = vmatpush1.msra.mxu0 0.0
      %772 = vmatprep.subr.mxu0 0.0
      %773 = vmatpush1.msra.mxu0 0.0
      %774 = vmatprep.subr.mxu0 0.0
      %775 = vmatpush1.msra.mxu0 0.0
      %776 = vmatprep.subr.mxu0 0.0
      %777 = vmatpush1.msra.mxu0 0.0
      %778 = vmatprep.subr.mxu0 0.0
      %779 = vmatpush1.msra.mxu0 0.0
      %780 = vmatprep.subr.mxu0 0.0
      %781 = vmatpush1.msra.mxu0 0.0
      %782 = vmatprep.subr.mxu0 0.0
      %783 = vmatpush1.msra.mxu0 0.0
      %784 = vmatprep.subr.mxu0 0.0
      %785 = vmatpush1.msra.mxu0 0.0
      %786 = vmatprep.subr.mxu0 0.0
      %787 = vmatpush1.msra.mxu0 0.0
      %788 = vmatprep.mubr.f32.mxu0 0.0
      %789 = vmatmul.mubr.f32.gmra.mrb[0].mxu0 %v372
      %v790 = vpop.f32.mrb[0].mxu0
      %v791 = vadd.f32 %v351, %v790
      %v792 = vpop.f32.mrb[0].mxu0
      %v793 = vadd.f32 %v355, %v792
      %794 = vmatprep.mubr.f32.mxu0 0.0
      %795 = vmatmul.mubr.f32.gmra.mrb[0].mxu0 %v375
      %v796 = vpop.f32.mrb[0].mxu0
      %v797 = vadd.f32 %v351, %v796
      %v798 = vpop.f32.mrb[0].mxu0
      %v799 = vadd.f32 %v355, %v798
      %800 = vmatprep.mubr.f32.mxu0 0.0
      %801 = vmatmul.mubr.f32.gmra.mrb[0].mxu0 %v378
      %v802 = vpop.f32.mrb[0].mxu0
      %v803 = vadd.f32 %v351, %v802
      %v804 = vpop.f32.mrb[0].mxu0
      %v805 = vadd.f32 %v355, %v804
      %806 = vmatprep.mubr.f32.mxu0 0.0
      %807 = vmatmul.mubr.f32.gmra.mrb[0].mxu0 %v381
      %v808 = vpop.f32.mrb[0].mxu0
      %v809 = vadd.f32 %v351, %v808
      %v810 = vpop.f32.mrb[0].mxu0
      %v811 = vadd.f32 %v355, %v810
      %812 = vmatprep.mubr.f32.mxu0 0.0
      %813 = vmatmul.mubr.f32.gmra.mrb[0].mxu0 %v384
      %v814 = vpop.f32.mrb[0].mxu0
      %v815 = vadd.f32 %v351, %v814
      %v816 = vpop.f32.mrb[0].mxu0
      %v817 = vadd.f32 %v355, %v816
      %818 = vmatprep.mubr.f32.mxu0 0.0
      %819 = vmatmul.mubr.f32.gmra.mrb[0].mxu0 %v387
      %v820 = vpop.f32.mrb[0].mxu0
      %v821 = vadd.f32 %v351, %v820
      %v822 = vpop.f32.mrb[0].mxu0
      %v823 = vadd.f32 %v355, %v822
      %824 = vmatprep.mubr.f32.mxu0 0.0
      %825 = vmatmul.mubr.f32.gmra.mrb[0].mxu0 %v390
      %v826 = vpop.f32.mrb[0].mxu0
      %v827 = vadd.f32 %v351, %v826
      %v828 = vpop.f32.mrb[0].mxu0
      %v829 = vadd.f32 %v355, %v828
      %830 = vmatprep.mubr.f32.mxu0 0.0
      %831 = vmatmul.mubr.f32.gmra.mrb[0].mxu0 %v393
      %v832 = vpop.f32.mrb[0].mxu0
      %v833 = vadd.f32 %v351, %v832
      %v834 = vpop.f32.mrb[0].mxu0
      %v835 = vadd.f32 %v355, %v834
      %836 = vmatprep.mubr.f32.mxu0 0.0
      %837 = vmatmul.mubr.f32.gmra.mrb[0].mxu0 %v396
      %v838 = vpop.f32.mrb[0].mxu0
      %v839 = vadd.f32 %v351, %v838
      %v840 = vpop.f32.mrb[0].mxu0
      %v841 = vadd.f32 %v355, %v840
      %842 = vmatprep.mubr.f32.mxu0 0.0
      %843 = vmatmul.mubr.f32.gmra.mrb[0].mxu0 %v399
      %v844 = vpop.f32.mrb[0].mxu0
      %v845 = vadd.f32 %v351, %v844
      %v846 = vpop.f32.mrb[0].mxu0
      %v847 = vadd.f32 %v355, %v846
      %848 = vmatprep.mubr.f32.mxu0 0.0
      %849 = vmatmul.mubr.f32.gmra.mrb[0].mxu0 %v402
      %v850 = vpop.f32.mrb[0].mxu0
      %v851 = vadd.f32 %v351, %v850
      %v852 = vpop.f32.mrb[0].mxu0
      %v853 = vadd.f32 %v355, %v852
      %854 = vmatprep.mubr.f32.mxu0 0.0
      %855 = vmatmul.mubr.f32.gmra.mrb[0].mxu0 %v405
      %v856 = vpop.f32.mrb[0].mxu0
      %v857 = vadd.f32 %v351, %v856
      %v858 = vpop.f32.mrb[0].mxu0
      %v859 = vadd.f32 %v355, %v858
      %860 = vmatprep.mubr.f32.mxu0 0.0
      %861 = vmatmul.mubr.f32.gmra.mrb[0].mxu0 %v408
      %v862 = vpop.f32.mrb[0].mxu0
      %v863 = vadd.f32 %v351, %v862
      %v864 = vpop.f32.mrb[0].mxu0
      %v865 = vadd.f32 %v355, %v864
      %866 = vmatprep.mubr.f32.mxu0 0.0
      %867 = vmatmul.mubr.f32.gmra.mrb[0].mxu0 %v411
      %v868 = vpop.f32.mrb[0].mxu0
      %v869 = vadd.f32 %v351, %v868
      %v870 = vpop.f32.mrb[0].mxu0
      %v871 = vadd.f32 %v355, %v870
      %872 = vmatprep.mubr.f32.mxu0 0.0
      %873 = vmatmul.mubr.f32.gmra.mrb[0].mxu0 %v414
      %v874 = vpop.f32.mrb[0].mxu0
      %v875 = vadd.f32 %v351, %v874
      %v876 = vpop.f32.mrb[0].mxu0
      %v877 = vadd.f32 %v355, %v876
      %878 = vmatprep.mubr.f32.mxu0 0.0
      %879 = vmatmul.mubr.f32.gmra.mrb[0].mxu0 %v417
      %v880 = vpop.f32.mrb[0].mxu0
      %v881 = vadd.f32 %v351, %v880
      %v882 = vpop.f32.mrb[0].mxu0
      %v883 = vadd.f32 %v355, %v882
      %884 = vmatprep.mubr.f32.mxu0 0.0
      %885 = vmatmul.mubr.f32.gmra.mrb[0].mxu0 %v420
      %v886 = vpop.f32.mrb[0].mxu0
      %v887 = vadd.f32 %v351, %v886
      %v888 = vpop.f32.mrb[0].mxu0
      %v889 = vadd.f32 %v355, %v888
      %890 = vmatprep.mubr.f32.mxu0 0.0
      %891 = vmatmul.mubr.f32.gmra.mrb[0].mxu0 %v423
      %v892 = vpop.f32.mrb[0].mxu0
      %v893 = vadd.f32 %v351, %v892
      %v894 = vpop.f32.mrb[0].mxu0
      %v895 = vadd.f32 %v355, %v894
      %896 = vmatprep.mubr.f32.mxu0 0.0
      %897 = vmatmul.mubr.f32.gmra.mrb[0].mxu0 %v426
      %v898 = vpop.f32.mrb[0].mxu0
      %v899 = vadd.f32 %v351, %v898
      %v900 = vpop.f32.mrb[0].mxu0
      %v901 = vadd.f32 %v355, %v900
      %902 = vmatprep.mubr.f32.mxu0 0.0
      %903 = vmatmul.mubr.f32.gmra.mrb[0].mxu0 %v429
      %v904 = vpop.f32.mrb[0].mxu0
      %v905 = vadd.f32 %v351, %v904
      %v906 = vpop.f32.mrb[0].mxu0
      %v907 = vadd.f32 %v355, %v906
      %908 = vmatprep.mubr.f32.mxu0 0.0
      %909 = vmatmul.mubr.f32.gmra.mrb[0].mxu0 %v432
      %v910 = vpop.f32.mrb[0].mxu0
      %v911 = vadd.f32 %v351, %v910
      %v912 = vpop.f32.mrb[0].mxu0
      %v913 = vadd.f32 %v355, %v912
      %914 = vmatprep.mubr.f32.mxu0 0.0
      %915 = vmatmul.mubr.f32.gmra.mrb[0].mxu0 %v435
      %v916 = vpop.f32.mrb[0].mxu0
      %v917 = vadd.f32 %v351, %v916
      %v918 = vpop.f32.mrb[0].mxu0
      %v919 = vadd.f32 %v355, %v918
      %920 = vmatprep.mubr.f32.mxu0 0.0
      %921 = vmatmul.mubr.f32.gmra.mrb[0].mxu0 %v438
      %v922 = vpop.f32.mrb[0].mxu0
      %v923 = vadd.f32 %v351, %v922
      %v924 = vpop.f32.mrb[0].mxu0
      %v925 = vadd.f32 %v355, %v924
      %926 = vmatprep.mubr.f32.mxu0 0.0
      %927 = vmatmul.mubr.f32.gmra.mrb[0].mxu0 %v441
      %v928 = vpop.f32.mrb[0].mxu0
      %v929 = vadd.f32 %v351, %v928
      %v930 = vpop.f32.mrb[0].mxu0
      %v931 = vadd.f32 %v355, %v930
      %932 = vmatprep.mubr.f32.mxu0 0.0
      %933 = vmatmul.mubr.f32.gmra.mrb[0].mxu0 %v444
      %v934 = vpop.f32.mrb[0].mxu0
      %v935 = vadd.f32 %v351, %v934
      %v936 = vpop.f32.mrb[0].mxu0
      %v937 = vadd.f32 %v355, %v936
      %938 = vmatprep.mubr.f32.mxu0 0.0
      %939 = vmatmul.mubr.f32.gmra.mrb[0].mxu0 %v447
      %v940 = vpop.f32.mrb[0].mxu0
      %v941 = vadd.f32 %v351, %v940
      %v942 = vpop.f32.mrb[0].mxu0
      %v943 = vadd.f32 %v355, %v942
      %944 = vmatprep.mubr.f32.mxu0 0.0
      %945 = vmatmul.mubr.f32.gmra.mrb[0].mxu0 %v450
      %v946 = vpop.f32.mrb[0].mxu0
      %v947 = vadd.f32 %v351, %v946
      %v948 = vpop.f32.mrb[0].mxu0
      %v949 = vadd.f32 %v355, %v948
      %950 = vmatprep.mubr.f32.mxu0 0.0
      %951 = vmatmul.mubr.f32.gmra.mrb[0].mxu0 %v453
      %v952 = vpop.f32.mrb[0].mxu0
      %v953 = vadd.f32 %v351, %v952
      %v954 = vpop.f32.mrb[0].mxu0
      %v955 = vadd.f32 %v355, %v954
      %956 = vmatprep.mubr.f32.mxu0 0.0
      %957 = vmatmul.mubr.f32.gmra.mrb[0].mxu0 %v456
      %v958 = vpop.f32.mrb[0].mxu0
      %v959 = vadd.f32 %v351, %v958
      %v960 = vpop.f32.mrb[0].mxu0
      %v961 = vadd.f32 %v355, %v960
      %962 = vmatprep.mubr.f32.mxu0 0.0
      %963 = vmatmul.mubr.f32.gmra.mrb[0].mxu0 %v459
      %v964 = vpop.f32.mrb[0].mxu0
      %v965 = vadd.f32 %v351, %v964
      %v966 = vpop.f32.mrb[0].mxu0
      %v967 = vadd.f32 %v355, %v966
      %968 = vmatprep.mubr.f32.mxu0 0.0
      %969 = vmatmul.mubr.f32.gmra.mrb[0].mxu0 %v462
      %v970 = vpop.f32.mrb[0].mxu0
      %v971 = vadd.f32 %v351, %v970
      %v972 = vpop.f32.mrb[0].mxu0
      %v973 = vadd.f32 %v355, %v972
      %974 = vmatprep.mubr.f32.mxu0 0.0
      %975 = vmatmul.mubr.f32.gmra.mrb[0].mxu0 %v465
      %v976 = vpop.f32.mrb[0].mxu0
      %v977 = vadd.f32 %v351, %v976
      %v978 = vpop.f32.mrb[0].mxu0
      %v979 = vadd.f32 %v355, %v978
      %980 = vdwg.mxu0
      %981 = vmatprep.subr.mxu0 %v319
      %982 = vmatpush1.msra.mxu0 %v318
      %983 = vmatprep.subr.mxu0 %v325
      %984 = vmatpush1.msra.mxu0 %v324
      %985 = vmatprep.subr.mxu0 %v331
      %986 = vmatpush1.msra.mxu0 %v330
      %987 = vmatprep.subr.mxu0 %v337
      %988 = vmatpush1.msra.mxu0 %v336
      %989 = vmatprep.subr.mxu0 0.0
      %990 = vmatpush1.msra.mxu0 0.0
      %991 = vmatprep.subr.mxu0 0.0
      %992 = vmatpush1.msra.mxu0 0.0
      %993 = vmatprep.subr.mxu0 0.0
      %994 = vmatpush1.msra.mxu0 0.0
      %995 = vmatprep.subr.mxu0 0.0
      %996 = vmatpush1.msra.mxu0 0.0
      %997 = vmatprep.subr.mxu0 0.0
      %998 = vmatpush1.msra.mxu0 0.0
      %999 = vmatprep.subr.mxu0 0.0
      %1000 = vmatpush1.msra.mxu0 0.0
      %1001 = vmatprep.subr.mxu0 0.0
      %1002 = vmatpush1.msra.mxu0 0.0
      %1003 = vmatprep.subr.mxu0 0.0
      %1004 = vmatpush1.msra.mxu0 0.0
      %1005 = vmatprep.subr.mxu0 0.0
      %1006 = vmatpush1.msra.mxu0 0.0
      %1007 = vmatprep.subr.mxu0 0.0
      %1008 = vmatpush1.msra.mxu0 0.0
      %1009 = vmatprep.subr.mxu0 0.0
      %1010 = vmatpush1.msra.mxu0 0.0
      %1011 = vmatprep.subr.mxu0 0.0
      %1012 = vmatpush1.msra.mxu0 0.0
      %1013 = vmatprep.subr.mxu0 0.0
      %1014 = vmatpush1.msra.mxu0 0.0
      %1015 = vmatprep.subr.mxu0 0.0
      %1016 = vmatpush1.msra.mxu0 0.0
      %1017 = vmatprep.subr.mxu0 0.0
      %1018 = vmatpush1.msra.mxu0 0.0
      %1019 = vmatprep.subr.mxu0 0.0
      %1020 = vmatpush1.msra.mxu0 0.0
      %1021 = vmatprep.subr.mxu0 0.0
      %1022 = vmatpush1.msra.mxu0 0.0
      %1023 = vmatprep.subr.mxu0 0.0
      %1024 = vmatpush1.msra.mxu0 0.0
      %1025 = vmatprep.subr.mxu0 0.0
      %1026 = vmatpush1.msra.mxu0 0.0
      %1027 = vmatprep.subr.mxu0 0.0
      %1028 = vmatpush1.msra.mxu0 0.0
      %1029 = vmatprep.subr.mxu0 0.0
      %1030 = vmatpush1.msra.mxu0 0.0
      %1031 = vmatprep.subr.mxu0 0.0
      %1032 = vmatpush1.msra.mxu0 0.0
      %1033 = vmatprep.subr.mxu0 0.0
      %1034 = vmatpush1.msra.mxu0 0.0
      %1035 = vmatprep.subr.mxu0 0.0
      %1036 = vmatpush1.msra.mxu0 0.0
      %1037 = vmatprep.subr.mxu0 0.0
      %1038 = vmatpush1.msra.mxu0 0.0
      %1039 = vmatprep.subr.mxu0 0.0
      %1040 = vmatpush1.msra.mxu0 0.0
      %1041 = vmatprep.subr.mxu0 0.0
      %1042 = vmatpush1.msra.mxu0 0.0
      %1043 = vmatprep.subr.mxu0 0.0
      %1044 = vmatpush1.msra.mxu0 0.0
      %1045 = vmatprep.mubr.f32.mxu0 0.0
      %1046 = vmatmul.mubr.f32.gmra.mrb[0].mxu0 %v372
      %v1047 = vpop.f32.mrb[0].mxu0
      %v1048 = vadd.f32 %v359, %v1047
      %v1049 = vpop.f32.mrb[0].mxu0
      %v1050 = vadd.f32 %v363, %v1049
      %1051 = vmatprep.mubr.f32.mxu0 0.0
      %1052 = vmatmul.mubr.f32.gmra.mrb[0].mxu0 %v375
      %v1053 = vpop.f32.mrb[0].mxu0
      %v1054 = vadd.f32 %v359, %v1053
      %v1055 = vpop.f32.mrb[0].mxu0
      %v1056 = vadd.f32 %v363, %v1055
      %1057 = vmatprep.mubr.f32.mxu0 0.0
      %1058 = vmatmul.mubr.f32.gmra.mrb[0].mxu0 %v378
      %v1059 = vpop.f32.mrb[0].mxu0
      %v1060 = vadd.f32 %v359, %v1059
      %v1061 = vpop.f32.mrb[0].mxu0
      %v1062 = vadd.f32 %v363, %v1061
      %1063 = vmatprep.mubr.f32.mxu0 0.0
      %1064 = vmatmul.mubr.f32.gmra.mrb[0].mxu0 %v381
      %v1065 = vpop.f32.mrb[0].mxu0
      %v1066 = vadd.f32 %v359, %v1065
      %v1067 = vpop.f32.mrb[0].mxu0
      %v1068 = vadd.f32 %v363, %v1067
      %1069 = vmatprep.mubr.f32.mxu0 0.0
      %1070 = vmatmul.mubr.f32.gmra.mrb[0].mxu0 %v384
      %v1071 = vpop.f32.mrb[0].mxu0
      %v1072 = vadd.f32 %v359, %v1071
      %v1073 = vpop.f32.mrb[0].mxu0
      %v1074 = vadd.f32 %v363, %v1073
      %1075 = vmatprep.mubr.f32.mxu0 0.0
      %1076 = vmatmul.mubr.f32.gmra.mrb[0].mxu0 %v387
      %v1077 = vpop.f32.mrb[0].mxu0
      %v1078 = vadd.f32 %v359, %v1077
      %v1079 = vpop.f32.mrb[0].mxu0
      %v1080 = vadd.f32 %v363, %v1079
      %1081 = vmatprep.mubr.f32.mxu0 0.0
      %1082 = vmatmul.mubr.f32.gmra.mrb[0].mxu0 %v390
      %v1083 = vpop.f32.mrb[0].mxu0
      %v1084 = vadd.f32 %v359, %v1083
      %v1085 = vpop.f32.mrb[0].mxu0
      %v1086 = vadd.f32 %v363, %v1085
      %1087 = vmatprep.mubr.f32.mxu0 0.0
      %1088 = vmatmul.mubr.f32.gmra.mrb[0].mxu0 %v393
      %v1089 = vpop.f32.mrb[0].mxu0
      %v1090 = vadd.f32 %v359, %v1089
      %v1091 = vpop.f32.mrb[0].mxu0
      %v1092 = vadd.f32 %v363, %v1091
      %1093 = vmatprep.mubr.f32.mxu0 0.0
      %1094 = vmatmul.mubr.f32.gmra.mrb[0].mxu0 %v396
      %v1095 = vpop.f32.mrb[0].mxu0
      %v1096 = vadd.f32 %v359, %v1095
      %v1097 = vpop.f32.mrb[0].mxu0
      %v1098 = vadd.f32 %v363, %v1097
      %1099 = vmatprep.mubr.f32.mxu0 0.0
      %1100 = vmatmul.mubr.f32.gmra.mrb[0].mxu0 %v399
      %v1101 = vpop.f32.mrb[0].mxu0
      %v1102 = vadd.f32 %v359, %v1101
      %v1103 = vpop.f32.mrb[0].mxu0
      %v1104 = vadd.f32 %v363, %v1103
      %1105 = vmatprep.mubr.f32.mxu0 0.0
      %1106 = vmatmul.mubr.f32.gmra.mrb[0].mxu0 %v402
      %v1107 = vpop.f32.mrb[0].mxu0
      %v1108 = vadd.f32 %v359, %v1107
      %v1109 = vpop.f32.mrb[0].mxu0
      %v1110 = vadd.f32 %v363, %v1109
      %1111 = vmatprep.mubr.f32.mxu0 0.0
      %1112 = vmatmul.mubr.f32.gmra.mrb[0].mxu0 %v405
      %v1113 = vpop.f32.mrb[0].mxu0
      %v1114 = vadd.f32 %v359, %v1113
      %v1115 = vpop.f32.mrb[0].mxu0
      %v1116 = vadd.f32 %v363, %v1115
      %1117 = vmatprep.mubr.f32.mxu0 0.0
      %1118 = vmatmul.mubr.f32.gmra.mrb[0].mxu0 %v408
      %v1119 = vpop.f32.mrb[0].mxu0
      %v1120 = vadd.f32 %v359, %v1119
      %v1121 = vpop.f32.mrb[0].mxu0
      %v1122 = vadd.f32 %v363, %v1121
      %1123 = vmatprep.mubr.f32.mxu0 0.0
      %1124 = vmatmul.mubr.f32.gmra.mrb[0].mxu0 %v411
      %v1125 = vpop.f32.mrb[0].mxu0
      %v1126 = vadd.f32 %v359, %v1125
      %v1127 = vpop.f32.mrb[0].mxu0
      %v1128 = vadd.f32 %v363, %v1127
      %1129 = vmatprep.mubr.f32.mxu0 0.0
      %1130 = vmatmul.mubr.f32.gmra.mrb[0].mxu0 %v414
      %v1131 = vpop.f32.mrb[0].mxu0
      %v1132 = vadd.f32 %v359, %v1131
      %v1133 = vpop.f32.mrb[0].mxu0
      %v1134 = vadd.f32 %v363, %v1133
      %1135 = vmatprep.mubr.f32.mxu0 0.0
      %1136 = vmatmul.mubr.f32.gmra.mrb[0].mxu0 %v417
      %v1137 = vpop.f32.mrb[0].mxu0
      %v1138 = vadd.f32 %v359, %v1137
      %v1139 = vpop.f32.mrb[0].mxu0
      %v1140 = vadd.f32 %v363, %v1139
      %1141 = vmatprep.mubr.f32.mxu0 0.0
      %1142 = vmatmul.mubr.f32.gmra.mrb[0].mxu0 %v420
      %v1143 = vpop.f32.mrb[0].mxu0
      %v1144 = vadd.f32 %v359, %v1143
      %v1145 = vpop.f32.mrb[0].mxu0
      %v1146 = vadd.f32 %v363, %v1145
      %1147 = vmatprep.mubr.f32.mxu0 0.0
      %1148 = vmatmul.mubr.f32.gmra.mrb[0].mxu0 %v423
      %v1149 = vpop.f32.mrb[0].mxu0
      %v1150 = vadd.f32 %v359, %v1149
      %v1151 = vpop.f32.mrb[0].mxu0
      %v1152 = vadd.f32 %v363, %v1151
      %1153 = vmatprep.mubr.f32.mxu0 0.0
      %1154 = vmatmul.mubr.f32.gmra.mrb[0].mxu0 %v426
      %v1155 = vpop.f32.mrb[0].mxu0
      %v1156 = vadd.f32 %v359, %v1155
      %v1157 = vpop.f32.mrb[0].mxu0
      %v1158 = vadd.f32 %v363, %v1157
      %1159 = vmatprep.mubr.f32.mxu0 0.0
      %1160 = vmatmul.mubr.f32.gmra.mrb[0].mxu0 %v429
      %v1161 = vpop.f32.mrb[0].mxu0
      %v1162 = vadd.f32 %v359, %v1161
      %v1163 = vpop.f32.mrb[0].mxu0
      %v1164 = vadd.f32 %v363, %v1163
      %1165 = vmatprep.mubr.f32.mxu0 0.0
      %1166 = vmatmul.mubr.f32.gmra.mrb[0].mxu0 %v432
      %v1167 = vpop.f32.mrb[0].mxu0
      %v1168 = vadd.f32 %v359, %v1167
      %v1169 = vpop.f32.mrb[0].mxu0
      %v1170 = vadd.f32 %v363, %v1169
      %1171 = vmatprep.mubr.f32.mxu0 0.0
      %1172 = vmatmul.mubr.f32.gmra.mrb[0].mxu0 %v435
      %v1173 = vpop.f32.mrb[0].mxu0
      %v1174 = vadd.f32 %v359, %v1173
      %v1175 = vpop.f32.mrb[0].mxu0
      %v1176 = vadd.f32 %v363, %v1175
      %1177 = vmatprep.mubr.f32.mxu0 0.0
      %1178 = vmatmul.mubr.f32.gmra.mrb[0].mxu0 %v438
      %v1179 = vpop.f32.mrb[0].mxu0
      %v1180 = vadd.f32 %v359, %v1179
      %v1181 = vpop.f32.mrb[0].mxu0
      %v1182 = vadd.f32 %v363, %v1181
      %1183 = vmatprep.mubr.f32.mxu0 0.0
      %1184 = vmatmul.mubr.f32.gmra.mrb[0].mxu0 %v441
      %v1185 = vpop.f32.mrb[0].mxu0
      %v1186 = vadd.f32 %v359, %v1185
      %v1187 = vpop.f32.mrb[0].mxu0
      %v1188 = vadd.f32 %v363, %v1187
      %1189 = vmatprep.mubr.f32.mxu0 0.0
      %1190 = vmatmul.mubr.f32.gmra.mrb[0].mxu0 %v444
      %v1191 = vpop.f32.mrb[0].mxu0
      %v1192 = vadd.f32 %v359, %v1191
      %v1193 = vpop.f32.mrb[0].mxu0
      %v1194 = vadd.f32 %v363, %v1193
      %1195 = vmatprep.mubr.f32.mxu0 0.0
      %1196 = vmatmul.mubr.f32.gmra.mrb[0].mxu0 %v447
      %v1197 = vpop.f32.mrb[0].mxu0
      %v1198 = vadd.f32 %v359, %v1197
      %v1199 = vpop.f32.mrb[0].mxu0
      %v1200 = vadd.f32 %v363, %v1199
      %1201 = vmatprep.mubr.f32.mxu0 0.0
      %1202 = vmatmul.mubr.f32.gmra.mrb[0].mxu0 %v450
      %v1203 = vpop.f32.mrb[0].mxu0
      %v1204 = vadd.f32 %v359, %v1203
      %v1205 = vpop.f32.mrb[0].mxu0
      %v1206 = vadd.f32 %v363, %v1205
      %1207 = vmatprep.mubr.f32.mxu0 0.0
      %1208 = vmatmul.mubr.f32.gmra.mrb[0].mxu0 %v453
      %v1209 = vpop.f32.mrb[0].mxu0
      %v1210 = vadd.f32 %v359, %v1209
      %v1211 = vpop.f32.mrb[0].mxu0
      %v1212 = vadd.f32 %v363, %v1211
      %1213 = vmatprep.mubr.f32.mxu0 0.0
      %1214 = vmatmul.mubr.f32.gmra.mrb[0].mxu0 %v456
      %v1215 = vpop.f32.mrb[0].mxu0
      %v1216 = vadd.f32 %v359, %v1215
      %v1217 = vpop.f32.mrb[0].mxu0
      %v1218 = vadd.f32 %v363, %v1217
      %1219 = vmatprep.mubr.f32.mxu0 0.0
      %1220 = vmatmul.mubr.f32.gmra.mrb[0].mxu0 %v459
      %v1221 = vpop.f32.mrb[0].mxu0
      %v1222 = vadd.f32 %v359, %v1221
      %v1223 = vpop.f32.mrb[0].mxu0
      %v1224 = vadd.f32 %v363, %v1223
      %1225 = vmatprep.mubr.f32.mxu0 0.0
      %1226 = vmatmul.mubr.f32.gmra.mrb[0].mxu0 %v462
      %v1227 = vpop.f32.mrb[0].mxu0
      %v1228 = vadd.f32 %v359, %v1227
      %v1229 = vpop.f32.mrb[0].mxu0
      %v1230 = vadd.f32 %v363, %v1229
      %1231 = vmatprep.mubr.f32.mxu0 0.0
      %1232 = vmatmul.mubr.f32.gmra.mrb[0].mxu0 %v465
      %v1233 = vpop.f32.mrb[0].mxu0
      %v1234 = vadd.f32 %v359, %v1233
      %v1235 = vpop.f32.mrb[0].mxu0
      %v1236 = vadd.f32 %v363, %v1235
      %1237 = vdwg.mxu0
      %v1238 = vmul.f32 %v534, %v791
      %v1239 = vmul.f32 %v536, %v793
      %v1240 = vmul.f32 %v540, %v797
      %v1241 = vmul.f32 %v542, %v799
      %v1242 = vmul.f32 %v546, %v803
      %v1243 = vmul.f32 %v548, %v805
      %v1244 = vmul.f32 %v552, %v809
      %v1245 = vmul.f32 %v554, %v811
      %v1246 = vmul.f32 %v558, %v815
      %v1247 = vmul.f32 %v560, %v817
      %v1248 = vmul.f32 %v564, %v821
      %v1249 = vmul.f32 %v566, %v823
      %v1250 = vmul.f32 %v570, %v827
      %v1251 = vmul.f32 %v572, %v829
      %v1252 = vmul.f32 %v576, %v833
      %v1253 = vmul.f32 %v578, %v835
      %v1254 = vmul.f32 %v582, %v839
      %v1255 = vmul.f32 %v584, %v841
      %v1256 = vmul.f32 %v588, %v845
      %v1257 = vmul.f32 %v590, %v847
      %v1258 = vmul.f32 %v594, %v851
      %v1259 = vmul.f32 %v596, %v853
      %v1260 = vmul.f32 %v600, %v857
      %v1261 = vmul.f32 %v602, %v859
      %v1262 = vmul.f32 %v606, %v863
      %v1263 = vmul.f32 %v608, %v865
      %v1264 = vmul.f32 %v612, %v869
      %v1265 = vmul.f32 %v614, %v871
      %v1266 = vmul.f32 %v618, %v875
      %v1267 = vmul.f32 %v620, %v877
      %v1268 = vmul.f32 %v624, %v881
      %v1269 = vmul.f32 %v626, %v883
      %v1270 = vmul.f32 %v630, %v887
      %v1271 = vmul.f32 %v632, %v889
      %v1272 = vmul.f32 %v636, %v893
      %v1273 = vmul.f32 %v638, %v895
      %v1274 = vmul.f32 %v642, %v899
      %v1275 = vmul.f32 %v644, %v901
      %v1276 = vmul.f32 %v648, %v905
      %v1277 = vmul.f32 %v650, %v907
      %v1278 = vmul.f32 %v654, %v911
      %v1279 = vmul.f32 %v656, %v913
      %v1280 = vmul.f32 %v660, %v917
      %v1281 = vmul.f32 %v662, %v919
      %v1282 = vmul.f32 %v666, %v923
      %v1283 = vmul.f32 %v668, %v925
      %v1284 = vmul.f32 %v672, %v929
      %v1285 = vmul.f32 %v674, %v931
      %v1286 = vmul.f32 %v678, %v935
      %v1287 = vmul.f32 %v680, %v937
      %v1288 = vmul.f32 %v684, %v941
      %v1289 = vmul.f32 %v686, %v943
      %v1290 = vmul.f32 %v690, %v947
      %v1291 = vmul.f32 %v692, %v949
      %v1292 = vmul.f32 %v696, %v953
      %v1293 = vmul.f32 %v698, %v955
      %v1294 = vmul.f32 %v702, %v959
      %v1295 = vmul.f32 %v704, %v961
      %v1296 = vmul.f32 %v708, %v965
      %v1297 = vmul.f32 %v710, %v967
      %v1298 = vmul.f32 %v714, %v971
      %v1299 = vmul.f32 %v716, %v973
      %v1300 = vmul.f32 %v720, %v977
      %v1301 = vmul.f32 %v722, %v979
      %v1302 = vld [vmem:[%s3] sm:$0xff]
      %v1303 = vld [vmem:[%s3 + $0x8] sm:$0xff]
      %v1304 = vld [vmem:[%s3 + $0x10] sm:$0xff]
      %v1305 = vld [vmem:[%s3 + $0x18] sm:$0xff]
      %v1306 = vld [vmem:[%s3 + $0x20] sm:$0xff]
      %v1307 = vld [vmem:[%s3 + $0x28] sm:$0xff]
      %v1308 = vld [vmem:[%s3 + $0x30] sm:$0xff]
      %v1309 = vld [vmem:[%s3 + $0x38] sm:$0xff]
      %v1310 = vld [vmem:[%s3 + $0x40] sm:$0xff]
      %v1311 = vld [vmem:[%s3 + $0x48] sm:$0xff]
      %v1312 = vld [vmem:[%s3 + $0x50] sm:$0xff]
      %v1313 = vld [vmem:[%s3 + $0x58] sm:$0xff]
      %v1314 = vld [vmem:[%s3 + $0x60] sm:$0xff]
      %v1315 = vld [vmem:[%s3 + $0x68] sm:$0xff]
      %v1316 = vld [vmem:[%s3 + $0x70] sm:$0xff]
      %v1317 = vld [vmem:[%s3 + $0x78] sm:$0xff]
      %v1318 = vld [vmem:[%s3 + $0x80] sm:$0xff]
      %v1319 = vld [vmem:[%s3 + $0x88] sm:$0xff]
      %v1320 = vld [vmem:[%s3 + $0x90] sm:$0xff]
      %v1321 = vld [vmem:[%s3 + $0x98] sm:$0xff]
      %v1322 = vld [vmem:[%s3 + $0xa0] sm:$0xff]
      %v1323 = vld [vmem:[%s3 + $0xa8] sm:$0xff]
      %v1324 = vld [vmem:[%s3 + $0xb0] sm:$0xff]
      %v1325 = vld [vmem:[%s3 + $0xb8] sm:$0xff]
      %v1326 = vld [vmem:[%s3 + $0xc0] sm:$0xff]
      %v1327 = vld [vmem:[%s3 + $0xc8] sm:$0xff]
      %v1328 = vld [vmem:[%s3 + $0xd0] sm:$0xff]
      %v1329 = vld [vmem:[%s3 + $0xd8] sm:$0xff]
      %v1330 = vld [vmem:[%s3 + $0xe0] sm:$0xff]
      %v1331 = vld [vmem:[%s3 + $0xe8] sm:$0xff]
      %v1332 = vld [vmem:[%s3 + $0xf0] sm:$0xff]
      %v1333 = vld [vmem:[%s3 + $0xf8] sm:$0xff]
      %v1334 = vld [vmem:[%s3 + $0x100] sm:$0xff]
      %v1335 = vld [vmem:[%s3 + $0x108] sm:$0xff]
      %v1336 = vld [vmem:[%s3 + $0x110] sm:$0xff]
      %v1337 = vld [vmem:[%s3 + $0x118] sm:$0xff]
      %v1338 = vld [vmem:[%s3 + $0x120] sm:$0xff]
      %v1339 = vld [vmem:[%s3 + $0x128] sm:$0xff]
      %v1340 = vld [vmem:[%s3 + $0x130] sm:$0xff]
      %v1341 = vld [vmem:[%s3 + $0x138] sm:$0xff]
      %v1342 = vld [vmem:[%s3 + $0x140] sm:$0xff]
      %v1343 = vld [vmem:[%s3 + $0x148] sm:$0xff]
      %v1344 = vld [vmem:[%s3 + $0x150] sm:$0xff]
      %v1345 = vld [vmem:[%s3 + $0x158] sm:$0xff]
      %v1346 = vld [vmem:[%s3 + $0x160] sm:$0xff]
      %v1347 = vld [vmem:[%s3 + $0x168] sm:$0xff]
      %v1348 = vld [vmem:[%s3 + $0x170] sm:$0xff]
      %v1349 = vld [vmem:[%s3 + $0x178] sm:$0xff]
      %v1350 = vld [vmem:[%s3 + $0x180] sm:$0xff]
      %v1351 = vld [vmem:[%s3 + $0x188] sm:$0xff]
      %v1352 = vld [vmem:[%s3 + $0x190] sm:$0xff]
      %v1353 = vld [vmem:[%s3 + $0x198] sm:$0xff]
      %v1354 = vld [vmem:[%s3 + $0x1a0] sm:$0xff]
      %v1355 = vld [vmem:[%s3 + $0x1a8] sm:$0xff]
      %v1356 = vld [vmem:[%s3 + $0x1b0] sm:$0xff]
      %v1357 = vld [vmem:[%s3 + $0x1b8] sm:$0xff]
      %v1358 = vld [vmem:[%s3 + $0x1c0] sm:$0xff]
      %v1359 = vld [vmem:[%s3 + $0x1c8] sm:$0xff]
      %v1360 = vld [vmem:[%s3 + $0x1d0] sm:$0xff]
      %v1361 = vld [vmem:[%s3 + $0x1d8] sm:$0xff]
      %v1362 = vld [vmem:[%s3 + $0x1e0] sm:$0xff]
      %v1363 = vld [vmem:[%s3 + $0x1e8] sm:$0xff]
      %v1364 = vld [vmem:[%s3 + $0x1f0] sm:$0xff]
      %v1365 = vld [vmem:[%s3 + $0x1f8] sm:$0xff]
      %1366 = vmatprep.subr.mxu0 %v1303
      %1367 = vmatpush1.msra.mxu0 %v1302
      %1368 = vmatprep.subr.mxu0 %v1305
      %1369 = vmatpush1.msra.mxu0 %v1304
      %1370 = vmatprep.subr.mxu0 %v1307
      %1371 = vmatpush1.msra.mxu0 %v1306
      %1372 = vmatprep.subr.mxu0 %v1309
      %1373 = vmatpush1.msra.mxu0 %v1308
      %1374 = vmatprep.subr.mxu0 %v1311
      %1375 = vmatpush1.msra.mxu0 %v1310
      %1376 = vmatprep.subr.mxu0 %v1313
      %1377 = vmatpush1.msra.mxu0 %v1312
      %1378 = vmatprep.subr.mxu0 %v1315
      %1379 = vmatpush1.msra.mxu0 %v1314
      %1380 = vmatprep.subr.mxu0 %v1317
      %1381 = vmatpush1.msra.mxu0 %v1316
      %1382 = vmatprep.subr.mxu0 %v1319
      %1383 = vmatpush1.msra.mxu0 %v1318
      %1384 = vmatprep.subr.mxu0 %v1321
      %1385 = vmatpush1.msra.mxu0 %v1320
      %1386 = vmatprep.subr.mxu0 %v1323
      %1387 = vmatpush1.msra.mxu0 %v1322
      %1388 = vmatprep.subr.mxu0 %v1325
      %1389 = vmatpush1.msra.mxu0 %v1324
      %1390 = vmatprep.subr.mxu0 %v1327
      %1391 = vmatpush1.msra.mxu0 %v1326
      %1392 = vmatprep.subr.mxu0 %v1329
      %1393 = vmatpush1.msra.mxu0 %v1328
      %1394 = vmatprep.subr.mxu0 %v1331
      %1395 = vmatpush1.msra.mxu0 %v1330
      %1396 = vmatprep.subr.mxu0 %v1333
      %1397 = vmatpush1.msra.mxu0 %v1332
      %1398 = vmatprep.subr.mxu0 %v1335
      %1399 = vmatpush1.msra.mxu0 %v1334
      %1400 = vmatprep.subr.mxu0 %v1337
      %1401 = vmatpush1.msra.mxu0 %v1336
      %1402 = vmatprep.subr.mxu0 %v1339
      %1403 = vmatpush1.msra.mxu0 %v1338
      %1404 = vmatprep.subr.mxu0 %v1341
      %1405 = vmatpush1.msra.mxu0 %v1340
      %1406 = vmatprep.subr.mxu0 %v1343
      %1407 = vmatpush1.msra.mxu0 %v1342
      %1408 = vmatprep.subr.mxu0 %v1345
      %1409 = vmatpush1.msra.mxu0 %v1344
      %1410 = vmatprep.subr.mxu0 %v1347
      %1411 = vmatpush1.msra.mxu0 %v1346
      %1412 = vmatprep.subr.mxu0 %v1349
      %1413 = vmatpush1.msra.mxu0 %v1348
      %1414 = vmatprep.subr.mxu0 %v1351
      %1415 = vmatpush1.msra.mxu0 %v1350
      %1416 = vmatprep.subr.mxu0 %v1353
      %1417 = vmatpush1.msra.mxu0 %v1352
      %1418 = vmatprep.subr.mxu0 %v1355
      %1419 = vmatpush1.msra.mxu0 %v1354
      %1420 = vmatprep.subr.mxu0 %v1357
      %1421 = vmatpush1.msra.mxu0 %v1356
      %1422 = vmatprep.subr.mxu0 %v1359
      %1423 = vmatpush1.msra.mxu0 %v1358
      %1424 = vmatprep.subr.mxu0 %v1361
      %1425 = vmatpush1.msra.mxu0 %v1360
      %1426 = vmatprep.subr.mxu0 %v1363
      %1427 = vmatpush1.msra.mxu0 %v1362
      %1428 = vmatprep.subr.mxu0 %v1365
      %1429 = vmatpush1.msra.mxu0 %v1364
      %1430 = vmatprep.mubr.f32.mxu0 %v1239
      %1431 = vmatmul.mubr.f32.gmra.mrb[0].mxu0 %v1238
      %v1432 = vpop.f32.mrb[0].mxu0
      %v1433 = vadd.f32 0.0, %v1432
      %v1434 = vpop.f32.mrb[0].mxu0
      %v1435 = vadd.f32 0.0, %v1434
      %1436 = vmatprep.mubr.f32.mxu0 %v1241
      %1437 = vmatmul.mubr.f32.gmra.mrb[0].mxu0 %v1240
      %v1438 = vpop.f32.mrb[0].mxu0
      %v1439 = vadd.f32 0.0, %v1438
      %v1440 = vpop.f32.mrb[0].mxu0
      %v1441 = vadd.f32 0.0, %v1440
      %1442 = vmatprep.mubr.f32.mxu0 %v1243
      %1443 = vmatmul.mubr.f32.gmra.mrb[0].mxu0 %v1242
      %v1444 = vpop.f32.mrb[0].mxu0
      %v1445 = vadd.f32 0.0, %v1444
      %v1446 = vpop.f32.mrb[0].mxu0
      %v1447 = vadd.f32 0.0, %v1446
      %1448 = vmatprep.mubr.f32.mxu0 %v1245
      %1449 = vmatmul.mubr.f32.gmra.mrb[0].mxu0 %v1244
      %v1450 = vpop.f32.mrb[0].mxu0
      %v1451 = vadd.f32 0.0, %v1450
      %v1452 = vpop.f32.mrb[0].mxu0
      %v1453 = vadd.f32 0.0, %v1452
      %1454 = vmatprep.mubr.f32.mxu0 %v1247
      %1455 = vmatmul.mubr.f32.gmra.mrb[0].mxu0 %v1246
      %v1456 = vpop.f32.mrb[0].mxu0
      %v1457 = vadd.f32 0.0, %v1456
      %v1458 = vpop.f32.mrb[0].mxu0
      %v1459 = vadd.f32 0.0, %v1458
      %1460 = vmatprep.mubr.f32.mxu0 %v1249
      %1461 = vmatmul.mubr.f32.gmra.mrb[0].mxu0 %v1248
      %v1462 = vpop.f32.mrb[0].mxu0
      %v1463 = vadd.f32 0.0, %v1462
      %v1464 = vpop.f32.mrb[0].mxu0
      %v1465 = vadd.f32 0.0, %v1464
      %1466 = vmatprep.mubr.f32.mxu0 %v1251
      %1467 = vmatmul.mubr.f32.gmra.mrb[0].mxu0 %v1250
      %v1468 = vpop.f32.mrb[0].mxu0
      %v1469 = vadd.f32 0.0, %v1468
      %v1470 = vpop.f32.mrb[0].mxu0
      %v1471 = vadd.f32 0.0, %v1470
      %1472 = vmatprep.mubr.f32.mxu0 %v1253
      %1473 = vmatmul.mubr.f32.gmra.mrb[0].mxu0 %v1252
      %v1474 = vpop.f32.mrb[0].mxu0
      %v1475 = vadd.f32 0.0, %v1474
      %v1476 = vpop.f32.mrb[0].mxu0
      %v1477 = vadd.f32 0.0, %v1476
      %1478 = vmatprep.mubr.f32.mxu0 %v1255
      %1479 = vmatmul.mubr.f32.gmra.mrb[0].mxu0 %v1254
      %v1480 = vpop.f32.mrb[0].mxu0
      %v1481 = vadd.f32 0.0, %v1480
      %v1482 = vpop.f32.mrb[0].mxu0
      %v1483 = vadd.f32 0.0, %v1482
      %1484 = vmatprep.mubr.f32.mxu0 %v1257
      %1485 = vmatmul.mubr.f32.gmra.mrb[0].mxu0 %v1256
      %v1486 = vpop.f32.mrb[0].mxu0
      %v1487 = vadd.f32 0.0, %v1486
      %v1488 = vpop.f32.mrb[0].mxu0
      %v1489 = vadd.f32 0.0, %v1488
      %1490 = vmatprep.mubr.f32.mxu0 %v1259
      %1491 = vmatmul.mubr.f32.gmra.mrb[0].mxu0 %v1258
      %v1492 = vpop.f32.mrb[0].mxu0
      %v1493 = vadd.f32 0.0, %v1492
      %v1494 = vpop.f32.mrb[0].mxu0
      %v1495 = vadd.f32 0.0, %v1494
      %1496 = vmatprep.mubr.f32.mxu0 %v1261
      %1497 = vmatmul.mubr.f32.gmra.mrb[0].mxu0 %v1260
      %v1498 = vpop.f32.mrb[0].mxu0
      %v1499 = vadd.f32 0.0, %v1498
      %v1500 = vpop.f32.mrb[0].mxu0
      %v1501 = vadd.f32 0.0, %v1500
      %1502 = vmatprep.mubr.f32.mxu0 %v1263
      %1503 = vmatmul.mubr.f32.gmra.mrb[0].mxu0 %v1262
      %v1504 = vpop.f32.mrb[0].mxu0
      %v1505 = vadd.f32 0.0, %v1504
      %v1506 = vpop.f32.mrb[0].mxu0
      %v1507 = vadd.f32 0.0, %v1506
      %1508 = vmatprep.mubr.f32.mxu0 %v1265
      %1509 = vmatmul.mubr.f32.gmra.mrb[0].mxu0 %v1264
      %v1510 = vpop.f32.mrb[0].mxu0
      %v1511 = vadd.f32 0.0, %v1510
      %v1512 = vpop.f32.mrb[0].mxu0
      %v1513 = vadd.f32 0.0, %v1512
      %1514 = vmatprep.mubr.f32.mxu0 %v1267
      %1515 = vmatmul.mubr.f32.gmra.mrb[0].mxu0 %v1266
      %v1516 = vpop.f32.mrb[0].mxu0
      %v1517 = vadd.f32 0.0, %v1516
      %v1518 = vpop.f32.mrb[0].mxu0
      %v1519 = vadd.f32 0.0, %v1518
      %1520 = vmatprep.mubr.f32.mxu0 %v1269
      %1521 = vmatmul.mubr.f32.gmra.mrb[0].mxu0 %v1268
      %v1522 = vpop.f32.mrb[0].mxu0
      %v1523 = vadd.f32 0.0, %v1522
      %v1524 = vpop.f32.mrb[0].mxu0
      %v1525 = vadd.f32 0.0, %v1524
      %1526 = vmatprep.mubr.f32.mxu0 %v1271
      %1527 = vmatmul.mubr.f32.gmra.mrb[0].mxu0 %v1270
      %v1528 = vpop.f32.mrb[0].mxu0
      %v1529 = vadd.f32 0.0, %v1528
      %v1530 = vpop.f32.mrb[0].mxu0
      %v1531 = vadd.f32 0.0, %v1530
      %1532 = vmatprep.mubr.f32.mxu0 %v1273
      %1533 = vmatmul.mubr.f32.gmra.mrb[0].mxu0 %v1272
      %v1534 = vpop.f32.mrb[0].mxu0
      %v1535 = vadd.f32 0.0, %v1534
      %v1536 = vpop.f32.mrb[0].mxu0
      %v1537 = vadd.f32 0.0, %v1536
      %1538 = vmatprep.mubr.f32.mxu0 %v1275
      %1539 = vmatmul.mubr.f32.gmra.mrb[0].mxu0 %v1274
      %v1540 = vpop.f32.mrb[0].mxu0
      %v1541 = vadd.f32 0.0, %v1540
      %v1542 = vpop.f32.mrb[0].mxu0
      %v1543 = vadd.f32 0.0, %v1542
      %1544 = vmatprep.mubr.f32.mxu0 %v1277
      %1545 = vmatmul.mubr.f32.gmra.mrb[0].mxu0 %v1276
      %v1546 = vpop.f32.mrb[0].mxu0
      %v1547 = vadd.f32 0.0, %v1546
      %v1548 = vpop.f32.mrb[0].mxu0
      %v1549 = vadd.f32 0.0, %v1548
      %1550 = vmatprep.mubr.f32.mxu0 %v1279
      %1551 = vmatmul.mubr.f32.gmra.mrb[0].mxu0 %v1278
      %v1552 = vpop.f32.mrb[0].mxu0
      %v1553 = vadd.f32 0.0, %v1552
      %v1554 = vpop.f32.mrb[0].mxu0
      %v1555 = vadd.f32 0.0, %v1554
      %1556 = vmatprep.mubr.f32.mxu0 %v1281
      %1557 = vmatmul.mubr.f32.gmra.mrb[0].mxu0 %v1280
      %v1558 = vpop.f32.mrb[0].mxu0
      %v1559 = vadd.f32 0.0, %v1558
      %v1560 = vpop.f32.mrb[0].mxu0
      %v1561 = vadd.f32 0.0, %v1560
      %1562 = vmatprep.mubr.f32.mxu0 %v1283
      %1563 = vmatmul.mubr.f32.gmra.mrb[0].mxu0 %v1282
      %v1564 = vpop.f32.mrb[0].mxu0
      %v1565 = vadd.f32 0.0, %v1564
      %v1566 = vpop.f32.mrb[0].mxu0
      %v1567 = vadd.f32 0.0, %v1566
      %1568 = vmatprep.mubr.f32.mxu0 %v1285
      %1569 = vmatmul.mubr.f32.gmra.mrb[0].mxu0 %v1284
      %v1570 = vpop.f32.mrb[0].mxu0
      %v1571 = vadd.f32 0.0, %v1570
      %v1572 = vpop.f32.mrb[0].mxu0
      %v1573 = vadd.f32 0.0, %v1572
      %1574 = vmatprep.mubr.f32.mxu0 %v1287
      %1575 = vmatmul.mubr.f32.gmra.mrb[0].mxu0 %v1286
      %v1576 = vpop.f32.mrb[0].mxu0
      %v1577 = vadd.f32 0.0, %v1576
      %v1578 = vpop.f32.mrb[0].mxu0
      %v1579 = vadd.f32 0.0, %v1578
      %1580 = vmatprep.mubr.f32.mxu0 %v1289
      %1581 = vmatmul.mubr.f32.gmra.mrb[0].mxu0 %v1288
      %v1582 = vpop.f32.mrb[0].mxu0
      %v1583 = vadd.f32 0.0, %v1582
      %v1584 = vpop.f32.mrb[0].mxu0
      %v1585 = vadd.f32 0.0, %v1584
      %1586 = vmatprep.mubr.f32.mxu0 %v1291
      %1587 = vmatmul.mubr.f32.gmra.mrb[0].mxu0 %v1290
      %v1588 = vpop.f32.mrb[0].mxu0
      %v1589 = vadd.f32 0.0, %v1588
      %v1590 = vpop.f32.mrb[0].mxu0
      %v1591 = vadd.f32 0.0, %v1590
      %1592 = vmatprep.mubr.f32.mxu0 %v1293
      %1593 = vmatmul.mubr.f32.gmra.mrb[0].mxu0 %v1292
      %v1594 = vpop.f32.mrb[0].mxu0
      %v1595 = vadd.f32 0.0, %v1594
      %v1596 = vpop.f32.mrb[0].mxu0
      %v1597 = vadd.f32 0.0, %v1596
      %1598 = vmatprep.mubr.f32.mxu0 %v1295
      %1599 = vmatmul.mubr.f32.gmra.mrb[0].mxu0 %v1294
      %v1600 = vpop.f32.mrb[0].mxu0
      %v1601 = vadd.f32 0.0, %v1600
      %v1602 = vpop.f32.mrb[0].mxu0
      %v1603 = vadd.f32 0.0, %v1602
      %1604 = vmatprep.mubr.f32.mxu0 %v1297
      %1605 = vmatmul.mubr.f32.gmra.mrb[0].mxu0 %v1296
      %v1606 = vpop.f32.mrb[0].mxu0
      %v1607 = vadd.f32 0.0, %v1606
      %v1608 = vpop.f32.mrb[0].mxu0
      %v1609 = vadd.f32 0.0, %v1608
      %1610 = vmatprep.mubr.f32.mxu0 %v1299
      %1611 = vmatmul.mubr.f32.gmra.mrb[0].mxu0 %v1298
      %v1612 = vpop.f32.mrb[0].mxu0
      %v1613 = vadd.f32 0.0, %v1612
      %v1614 = vpop.f32.mrb[0].mxu0
      %v1615 = vadd.f32 0.0, %v1614
      %1616 = vmatprep.mubr.f32.mxu0 %v1301
      %1617 = vmatmul.mubr.f32.gmra.mrb[0].mxu0 %v1300
      %v1618 = vpop.f32.mrb[0].mxu0
      %v1619 = vadd.f32 0.0, %v1618
      %v1620 = vpop.f32.mrb[0].mxu0
      %v1621 = vadd.f32 0.0, %v1620
      %1622 = vdwg.mxu0
      %v1623 = vrot.slane %v1433, 4
      %v1624 = vmax.f32 %v1433, %v1623
      %v1625 = vrot.slane %v1624, 2
      %v1626 = vmax.f32 %v1624, %v1625
      %v1627 = vrot.slane %v1626, 1
      %v1628 = vmax.f32 %v1626, %v1627
      %v1629 = vrot.slane %v1435, 4
      %v1630 = vmax.f32 %v1435, %v1629
      %v1631 = vrot.slane %v1630, 2
      %v1632 = vmax.f32 %v1630, %v1631
      %v1633 = vrot.slane %v1632, 1
      %v1634 = vmax.f32 %v1632, %v1633
      %v1635 = vrot.slane %v1439, 4
      %v1636 = vmax.f32 %v1439, %v1635
      %v1637 = vrot.slane %v1636, 2
      %v1638 = vmax.f32 %v1636, %v1637
      %v1639 = vrot.slane %v1638, 1
      %v1640 = vmax.f32 %v1638, %v1639
      %v1641 = vrot.slane %v1441, 4
      %v1642 = vmax.f32 %v1441, %v1641
      %v1643 = vrot.slane %v1642, 2
      %v1644 = vmax.f32 %v1642, %v1643
      %v1645 = vrot.slane %v1644, 1
      %v1646 = vmax.f32 %v1644, %v1645
      %v1647 = vrot.slane %v1445, 4
      %v1648 = vmax.f32 %v1445, %v1647
      %v1649 = vrot.slane %v1648, 2
      %v1650 = vmax.f32 %v1648, %v1649
      %v1651 = vrot.slane %v1650, 1
      %v1652 = vmax.f32 %v1650, %v1651
      %v1653 = vrot.slane %v1447, 4
      %v1654 = vmax.f32 %v1447, %v1653
      %v1655 = vrot.slane %v1654, 2
      %v1656 = vmax.f32 %v1654, %v1655
      %v1657 = vrot.slane %v1656, 1
      %v1658 = vmax.f32 %v1656, %v1657
      %v1659 = vrot.slane %v1451, 4
      %v1660 = vmax.f32 %v1451, %v1659
      %v1661 = vrot.slane %v1660, 2
      %v1662 = vmax.f32 %v1660, %v1661
      %v1663 = vrot.slane %v1662, 1
      %v1664 = vmax.f32 %v1662, %v1663
      %v1665 = vrot.slane %v1453, 4
      %v1666 = vmax.f32 %v1453, %v1665
      %v1667 = vrot.slane %v1666, 2
      %v1668 = vmax.f32 %v1666, %v1667
      %v1669 = vrot.slane %v1668, 1
      %v1670 = vmax.f32 %v1668, %v1669
      %v1671 = vrot.slane %v1457, 4
      %v1672 = vmax.f32 %v1457, %v1671
      %v1673 = vrot.slane %v1672, 2
      %v1674 = vmax.f32 %v1672, %v1673
      %v1675 = vrot.slane %v1674, 1
      %v1676 = vmax.f32 %v1674, %v1675
      %v1677 = vrot.slane %v1459, 4
      %v1678 = vmax.f32 %v1459, %v1677
      %v1679 = vrot.slane %v1678, 2
      %v1680 = vmax.f32 %v1678, %v1679
      %v1681 = vrot.slane %v1680, 1
      %v1682 = vmax.f32 %v1680, %v1681
      %v1683 = vrot.slane %v1463, 4
      %v1684 = vmax.f32 %v1463, %v1683
      %v1685 = vrot.slane %v1684, 2
      %v1686 = vmax.f32 %v1684, %v1685
      %v1687 = vrot.slane %v1686, 1
      %v1688 = vmax.f32 %v1686, %v1687
      %v1689 = vrot.slane %v1465, 4
      %v1690 = vmax.f32 %v1465, %v1689
      %v1691 = vrot.slane %v1690, 2
      %v1692 = vmax.f32 %v1690, %v1691
      %v1693 = vrot.slane %v1692, 1
      %v1694 = vmax.f32 %v1692, %v1693
      %v1695 = vrot.slane %v1469, 4
      %v1696 = vmax.f32 %v1469, %v1695
      %v1697 = vrot.slane %v1696, 2
      %v1698 = vmax.f32 %v1696, %v1697
      %v1699 = vrot.slane %v1698, 1
      %v1700 = vmax.f32 %v1698, %v1699
      %v1701 = vrot.slane %v1471, 4
      %v1702 = vmax.f32 %v1471, %v1701
      %v1703 = vrot.slane %v1702, 2
      %v1704 = vmax.f32 %v1702, %v1703
      %v1705 = vrot.slane %v1704, 1
      %v1706 = vmax.f32 %v1704, %v1705
      %v1707 = vrot.slane %v1475, 4
      %v1708 = vmax.f32 %v1475, %v1707
      %v1709 = vrot.slane %v1708, 2
      %v1710 = vmax.f32 %v1708, %v1709
      %v1711 = vrot.slane %v1710, 1
      %v1712 = vmax.f32 %v1710, %v1711
      %v1713 = vrot.slane %v1477, 4
      %v1714 = vmax.f32 %v1477, %v1713
      %v1715 = vrot.slane %v1714, 2
      %v1716 = vmax.f32 %v1714, %v1715
      %v1717 = vrot.slane %v1716, 1
      %v1718 = vmax.f32 %v1716, %v1717
      %v1719 = vrot.slane %v1481, 4
      %v1720 = vmax.f32 %v1481, %v1719
      %v1721 = vrot.slane %v1720, 2
      %v1722 = vmax.f32 %v1720, %v1721
      %v1723 = vrot.slane %v1722, 1
      %v1724 = vmax.f32 %v1722, %v1723
      %v1725 = vrot.slane %v1483, 4
      %v1726 = vmax.f32 %v1483, %v1725
      %v1727 = vrot.slane %v1726, 2
      %v1728 = vmax.f32 %v1726, %v1727
      %v1729 = vrot.slane %v1728, 1
      %v1730 = vmax.f32 %v1728, %v1729
      %v1731 = vrot.slane %v1487, 4
      %v1732 = vmax.f32 %v1487, %v1731
      %v1733 = vrot.slane %v1732, 2
      %v1734 = vmax.f32 %v1732, %v1733
      %v1735 = vrot.slane %v1734, 1
      %v1736 = vmax.f32 %v1734, %v1735
      %v1737 = vrot.slane %v1489, 4
      %v1738 = vmax.f32 %v1489, %v1737
      %v1739 = vrot.slane %v1738, 2
      %v1740 = vmax.f32 %v1738, %v1739
      %v1741 = vrot.slane %v1740, 1
      %v1742 = vmax.f32 %v1740, %v1741
      %v1743 = vrot.slane %v1493, 4
      %v1744 = vmax.f32 %v1493, %v1743
      %v1745 = vrot.slane %v1744, 2
      %v1746 = vmax.f32 %v1744, %v1745
      %v1747 = vrot.slane %v1746, 1
      %v1748 = vmax.f32 %v1746, %v1747
      %v1749 = vrot.slane %v1495, 4
      %v1750 = vmax.f32 %v1495, %v1749
      %v1751 = vrot.slane %v1750, 2
      %v1752 = vmax.f32 %v1750, %v1751
      %v1753 = vrot.slane %v1752, 1
      %v1754 = vmax.f32 %v1752, %v1753
      %v1755 = vrot.slane %v1499, 4
      %v1756 = vmax.f32 %v1499, %v1755
      %v1757 = vrot.slane %v1756, 2
      %v1758 = vmax.f32 %v1756, %v1757
      %v1759 = vrot.slane %v1758, 1
      %v1760 = vmax.f32 %v1758, %v1759
      %v1761 = vrot.slane %v1501, 4
      %v1762 = vmax.f32 %v1501, %v1761
      %v1763 = vrot.slane %v1762, 2
      %v1764 = vmax.f32 %v1762, %v1763
      %v1765 = vrot.slane %v1764, 1
      %v1766 = vmax.f32 %v1764, %v1765
      %v1767 = vrot.slane %v1505, 4
      %v1768 = vmax.f32 %v1505, %v1767
      %v1769 = vrot.slane %v1768, 2
      %v1770 = vmax.f32 %v1768, %v1769
      %v1771 = vrot.slane %v1770, 1
      %v1772 = vmax.f32 %v1770, %v1771
      %v1773 = vrot.slane %v1507, 4
      %v1774 = vmax.f32 %v1507, %v1773
      %v1775 = vrot.slane %v1774, 2
      %v1776 = vmax.f32 %v1774, %v1775
      %v1777 = vrot.slane %v1776, 1
      %v1778 = vmax.f32 %v1776, %v1777
      %v1779 = vrot.slane %v1511, 4
      %v1780 = vmax.f32 %v1511, %v1779
      %v1781 = vrot.slane %v1780, 2
      %v1782 = vmax.f32 %v1780, %v1781
      %v1783 = vrot.slane %v1782, 1
      %v1784 = vmax.f32 %v1782, %v1783
      %v1785 = vrot.slane %v1513, 4
      %v1786 = vmax.f32 %v1513, %v1785
      %v1787 = vrot.slane %v1786, 2
      %v1788 = vmax.f32 %v1786, %v1787
      %v1789 = vrot.slane %v1788, 1
      %v1790 = vmax.f32 %v1788, %v1789
      %v1791 = vrot.slane %v1517, 4
      %v1792 = vmax.f32 %v1517, %v1791
      %v1793 = vrot.slane %v1792, 2
      %v1794 = vmax.f32 %v1792, %v1793
      %v1795 = vrot.slane %v1794, 1
      %v1796 = vmax.f32 %v1794, %v1795
      %v1797 = vrot.slane %v1519, 4
      %v1798 = vmax.f32 %v1519, %v1797
      %v1799 = vrot.slane %v1798, 2
      %v1800 = vmax.f32 %v1798, %v1799
      %v1801 = vrot.slane %v1800, 1
      %v1802 = vmax.f32 %v1800, %v1801
      %v1803 = vrot.slane %v1523, 4
      %v1804 = vmax.f32 %v1523, %v1803
      %v1805 = vrot.slane %v1804, 2
      %v1806 = vmax.f32 %v1804, %v1805
      %v1807 = vrot.slane %v1806, 1
      %v1808 = vmax.f32 %v1806, %v1807
      %v1809 = vrot.slane %v1525, 4
      %v1810 = vmax.f32 %v1525, %v1809
      %v1811 = vrot.slane %v1810, 2
      %v1812 = vmax.f32 %v1810, %v1811
      %v1813 = vrot.slane %v1812, 1
      %v1814 = vmax.f32 %v1812, %v1813
      %v1815 = vrot.slane %v1529, 4
      %v1816 = vmax.f32 %v1529, %v1815
      %v1817 = vrot.slane %v1816, 2
      %v1818 = vmax.f32 %v1816, %v1817
      %v1819 = vrot.slane %v1818, 1
      %v1820 = vmax.f32 %v1818, %v1819
      %v1821 = vrot.slane %v1531, 4
      %v1822 = vmax.f32 %v1531, %v1821
      %v1823 = vrot.slane %v1822, 2
      %v1824 = vmax.f32 %v1822, %v1823
      %v1825 = vrot.slane %v1824, 1
      %v1826 = vmax.f32 %v1824, %v1825
      %v1827 = vrot.slane %v1535, 4
      %v1828 = vmax.f32 %v1535, %v1827
      %v1829 = vrot.slane %v1828, 2
      %v1830 = vmax.f32 %v1828, %v1829
      %v1831 = vrot.slane %v1830, 1
      %v1832 = vmax.f32 %v1830, %v1831
      %v1833 = vrot.slane %v1537, 4
      %v1834 = vmax.f32 %v1537, %v1833
      %v1835 = vrot.slane %v1834, 2
      %v1836 = vmax.f32 %v1834, %v1835
      %v1837 = vrot.slane %v1836, 1
      %v1838 = vmax.f32 %v1836, %v1837
      %v1839 = vrot.slane %v1541, 4
      %v1840 = vmax.f32 %v1541, %v1839
      %v1841 = vrot.slane %v1840, 2
      %v1842 = vmax.f32 %v1840, %v1841
      %v1843 = vrot.slane %v1842, 1
      %v1844 = vmax.f32 %v1842, %v1843
      %v1845 = vrot.slane %v1543, 4
      %v1846 = vmax.f32 %v1543, %v1845
      %v1847 = vrot.slane %v1846, 2
      %v1848 = vmax.f32 %v1846, %v1847
      %v1849 = vrot.slane %v1848, 1
      %v1850 = vmax.f32 %v1848, %v1849
      %v1851 = vrot.slane %v1547, 4
      %v1852 = vmax.f32 %v1547, %v1851
      %v1853 = vrot.slane %v1852, 2
      %v1854 = vmax.f32 %v1852, %v1853
      %v1855 = vrot.slane %v1854, 1
      %v1856 = vmax.f32 %v1854, %v1855
      %v1857 = vrot.slane %v1549, 4
      %v1858 = vmax.f32 %v1549, %v1857
      %v1859 = vrot.slane %v1858, 2
      %v1860 = vmax.f32 %v1858, %v1859
      %v1861 = vrot.slane %v1860, 1
      %v1862 = vmax.f32 %v1860, %v1861
      %v1863 = vrot.slane %v1553, 4
      %v1864 = vmax.f32 %v1553, %v1863
      %v1865 = vrot.slane %v1864, 2
      %v1866 = vmax.f32 %v1864, %v1865
      %v1867 = vrot.slane %v1866, 1
      %v1868 = vmax.f32 %v1866, %v1867
      %v1869 = vrot.slane %v1555, 4
      %v1870 = vmax.f32 %v1555, %v1869
      %v1871 = vrot.slane %v1870, 2
      %v1872 = vmax.f32 %v1870, %v1871
      %v1873 = vrot.slane %v1872, 1
      %v1874 = vmax.f32 %v1872, %v1873
      %v1875 = vrot.slane %v1559, 4
      %v1876 = vmax.f32 %v1559, %v1875
      %v1877 = vrot.slane %v1876, 2
      %v1878 = vmax.f32 %v1876, %v1877
      %v1879 = vrot.slane %v1878, 1
      %v1880 = vmax.f32 %v1878, %v1879
      %v1881 = vrot.slane %v1561, 4
      %v1882 = vmax.f32 %v1561, %v1881
      %v1883 = vrot.slane %v1882, 2
      %v1884 = vmax.f32 %v1882, %v1883
      %v1885 = vrot.slane %v1884, 1
      %v1886 = vmax.f32 %v1884, %v1885
      %v1887 = vrot.slane %v1565, 4
      %v1888 = vmax.f32 %v1565, %v1887
      %v1889 = vrot.slane %v1888, 2
      %v1890 = vmax.f32 %v1888, %v1889
      %v1891 = vrot.slane %v1890, 1
      %v1892 = vmax.f32 %v1890, %v1891
      %v1893 = vrot.slane %v1567, 4
      %v1894 = vmax.f32 %v1567, %v1893
      %v1895 = vrot.slane %v1894, 2
      %v1896 = vmax.f32 %v1894, %v1895
      %v1897 = vrot.slane %v1896, 1
      %v1898 = vmax.f32 %v1896, %v1897
      %v1899 = vrot.slane %v1571, 4
      %v1900 = vmax.f32 %v1571, %v1899
      %v1901 = vrot.slane %v1900, 2
      %v1902 = vmax.f32 %v1900, %v1901
      %v1903 = vrot.slane %v1902, 1
      %v1904 = vmax.f32 %v1902, %v1903
      %v1905 = vrot.slane %v1573, 4
      %v1906 = vmax.f32 %v1573, %v1905
      %v1907 = vrot.slane %v1906, 2
      %v1908 = vmax.f32 %v1906, %v1907
      %v1909 = vrot.slane %v1908, 1
      %v1910 = vmax.f32 %v1908, %v1909
      %v1911 = vrot.slane %v1577, 4
      %v1912 = vmax.f32 %v1577, %v1911
      %v1913 = vrot.slane %v1912, 2
      %v1914 = vmax.f32 %v1912, %v1913
      %v1915 = vrot.slane %v1914, 1
      %v1916 = vmax.f32 %v1914, %v1915
      %v1917 = vrot.slane %v1579, 4
      %v1918 = vmax.f32 %v1579, %v1917
      %v1919 = vrot.slane %v1918, 2
      %v1920 = vmax.f32 %v1918, %v1919
      %v1921 = vrot.slane %v1920, 1
      %v1922 = vmax.f32 %v1920, %v1921
      %v1923 = vrot.slane %v1583, 4
      %v1924 = vmax.f32 %v1583, %v1923
      %v1925 = vrot.slane %v1924, 2
      %v1926 = vmax.f32 %v1924, %v1925
      %v1927 = vrot.slane %v1926, 1
      %v1928 = vmax.f32 %v1926, %v1927
      %v1929 = vrot.slane %v1585, 4
      %v1930 = vmax.f32 %v1585, %v1929
      %v1931 = vrot.slane %v1930, 2
      %v1932 = vmax.f32 %v1930, %v1931
      %v1933 = vrot.slane %v1932, 1
      %v1934 = vmax.f32 %v1932, %v1933
      %v1935 = vrot.slane %v1589, 4
      %v1936 = vmax.f32 %v1589, %v1935
      %v1937 = vrot.slane %v1936, 2
      %v1938 = vmax.f32 %v1936, %v1937
      %v1939 = vrot.slane %v1938, 1
      %v1940 = vmax.f32 %v1938, %v1939
      %v1941 = vrot.slane %v1591, 4
      %v1942 = vmax.f32 %v1591, %v1941
      %v1943 = vrot.slane %v1942, 2
      %v1944 = vmax.f32 %v1942, %v1943
      %v1945 = vrot.slane %v1944, 1
      %v1946 = vmax.f32 %v1944, %v1945
      %v1947 = vrot.slane %v1595, 4
      %v1948 = vmax.f32 %v1595, %v1947
      %v1949 = vrot.slane %v1948, 2
      %v1950 = vmax.f32 %v1948, %v1949
      %v1951 = vrot.slane %v1950, 1
      %v1952 = vmax.f32 %v1950, %v1951
      %v1953 = vrot.slane %v1597, 4
      %v1954 = vmax.f32 %v1597, %v1953
      %v1955 = vrot.slane %v1954, 2
      %v1956 = vmax.f32 %v1954, %v1955
      %v1957 = vrot.slane %v1956, 1
      %v1958 = vmax.f32 %v1956, %v1957
      %v1959 = vrot.slane %v1601, 4
      %v1960 = vmax.f32 %v1601, %v1959
      %v1961 = vrot.slane %v1960, 2
      %v1962 = vmax.f32 %v1960, %v1961
      %v1963 = vrot.slane %v1962, 1
      %v1964 = vmax.f32 %v1962, %v1963
      %v1965 = vrot.slane %v1603, 4
      %v1966 = vmax.f32 %v1603, %v1965
      %v1967 = vrot.slane %v1966, 2
      %v1968 = vmax.f32 %v1966, %v1967
      %v1969 = vrot.slane %v1968, 1
      %v1970 = vmax.f32 %v1968, %v1969
      %v1971 = vrot.slane %v1607, 4
      %v1972 = vmax.f32 %v1607, %v1971
      %v1973 = vrot.slane %v1972, 2
      %v1974 = vmax.f32 %v1972, %v1973
      %v1975 = vrot.slane %v1974, 1
      %v1976 = vmax.f32 %v1974, %v1975
      %v1977 = vrot.slane %v1609, 4
      %v1978 = vmax.f32 %v1609, %v1977
      %v1979 = vrot.slane %v1978, 2
      %v1980 = vmax.f32 %v1978, %v1979
      %v1981 = vrot.slane %v1980, 1
      %v1982 = vmax.f32 %v1980, %v1981
      %v1983 = vrot.slane %v1613, 4
      %v1984 = vmax.f32 %v1613, %v1983
      %v1985 = vrot.slane %v1984, 2
      %v1986 = vmax.f32 %v1984, %v1985
      %v1987 = vrot.slane %v1986, 1
      %v1988 = vmax.f32 %v1986, %v1987
      %v1989 = vrot.slane %v1615, 4
      %v1990 = vmax.f32 %v1615, %v1989
      %v1991 = vrot.slane %v1990, 2
      %v1992 = vmax.f32 %v1990, %v1991
      %v1993 = vrot.slane %v1992, 1
      %v1994 = vmax.f32 %v1992, %v1993
      %v1995 = vrot.slane %v1619, 4
      %v1996 = vmax.f32 %v1619, %v1995
      %v1997 = vrot.slane %v1996, 2
      %v1998 = vmax.f32 %v1996, %v1997
      %v1999 = vrot.slane %v1998, 1
      %v2000 = vmax.f32 %v1998, %v1999
      %v2001 = vrot.slane %v1621, 4
      %v2002 = vmax.f32 %v1621, %v2001
      %v2003 = vrot.slane %v2002, 2
      %v2004 = vmax.f32 %v2002, %v2003
      %v2005 = vrot.slane %v2004, 1
      %v2006 = vmax.f32 %v2004, %v2005
      %v2007 = vsub.f32 %v1433, %v1628
      %v2008 = vsub.f32 %v1435, %v1634
      %v2009 = vsub.f32 %v1439, %v1640
      %v2010 = vsub.f32 %v1441, %v1646
      %v2011 = vsub.f32 %v1445, %v1652
      %v2012 = vsub.f32 %v1447, %v1658
      %v2013 = vsub.f32 %v1451, %v1664
      %v2014 = vsub.f32 %v1453, %v1670
      %v2015 = vsub.f32 %v1457, %v1676
      %v2016 = vsub.f32 %v1459, %v1682
      %v2017 = vsub.f32 %v1463, %v1688
      %v2018 = vsub.f32 %v1465, %v1694
      %v2019 = vsub.f32 %v1469, %v1700
      %v2020 = vsub.f32 %v1471, %v1706
      %v2021 = vsub.f32 %v1475, %v1712
      %v2022 = vsub.f32 %v1477, %v1718
      %v2023 = vsub.f32 %v1481, %v1724
      %v2024 = vsub.f32 %v1483, %v1730
      %v2025 = vsub.f32 %v1487, %v1736
      %v2026 = vsub.f32 %v1489, %v1742
      %v2027 = vsub.f32 %v1493, %v1748
      %v2028 = vsub.f32 %v1495, %v1754
      %v2029 = vsub.f32 %v1499, %v1760
      %v2030 = vsub.f32 %v1501, %v1766
      %v2031 = vsub.f32 %v1505, %v1772
      %v2032 = vsub.f32 %v1507, %v1778
      %v2033 = vsub.f32 %v1511, %v1784
      %v2034 = vsub.f32 %v1513, %v1790
      %v2035 = vsub.f32 %v1517, %v1796
      %v2036 = vsub.f32 %v1519, %v1802
      %v2037 = vsub.f32 %v1523, %v1808
      %v2038 = vsub.f32 %v1525, %v1814
      %v2039 = vsub.f32 %v1529, %v1820
      %v2040 = vsub.f32 %v1531, %v1826
      %v2041 = vsub.f32 %v1535, %v1832
      %v2042 = vsub.f32 %v1537, %v1838
      %v2043 = vsub.f32 %v1541, %v1844
      %v2044 = vsub.f32 %v1543, %v1850
      %v2045 = vsub.f32 %v1547, %v1856
      %v2046 = vsub.f32 %v1549, %v1862
      %v2047 = vsub.f32 %v1553, %v1868
      %v2048 = vsub.f32 %v1555, %v1874
      %v2049 = vsub.f32 %v1559, %v1880
      %v2050 = vsub.f32 %v1561, %v1886
      %v2051 = vsub.f32 %v1565, %v1892
      %v2052 = vsub.f32 %v1567, %v1898
      %v2053 = vsub.f32 %v1571, %v1904
      %v2054 = vsub.f32 %v1573, %v1910
      %v2055 = vsub.f32 %v1577, %v1916
      %v2056 = vsub.f32 %v1579, %v1922
      %v2057 = vsub.f32 %v1583, %v1928
      %v2058 = vsub.f32 %v1585, %v1934
      %v2059 = vsub.f32 %v1589, %v1940
      %v2060 = vsub.f32 %v1591, %v1946
      %v2061 = vsub.f32 %v1595, %v1952
      %v2062 = vsub.f32 %v1597, %v1958
      %v2063 = vsub.f32 %v1601, %v1964
      %v2064 = vsub.f32 %v1603, %v1970
      %v2065 = vsub.f32 %v1607, %v1976
      %v2066 = vsub.f32 %v1609, %v1982
      %v2067 = vsub.f32 %v1613, %v1988
      %v2068 = vsub.f32 %v1615, %v1994
      %v2069 = vsub.f32 %v1619, %v2000
      %v2070 = vsub.f32 %v1621, %v2006
      %v2071 = vmul.f32 %v2007, 1.442695
      %v2072 = vpow.pop %v2071
      %v2073 = vmul.f32 %v2008, 1.442695
      %v2074 = vpow.pop %v2073
      %v2075 = vmul.f32 %v2009, 1.442695
      %v2076 = vpow.pop %v2075
      %v2077 = vmul.f32 %v2010, 1.442695
      %v2078 = vpow.pop %v2077
      %v2079 = vmul.f32 %v2011, 1.442695
      %v2080 = vpow.pop %v2079
      %v2081 = vmul.f32 %v2012, 1.442695
      %v2082 = vpow.pop %v2081
      %v2083 = vmul.f32 %v2013, 1.442695
      %v2084 = vpow.pop %v2083
      %v2085 = vmul.f32 %v2014, 1.442695
      %v2086 = vpow.pop %v2085
      %v2087 = vmul.f32 %v2015, 1.442695
      %v2088 = vpow.pop %v2087
      %v2089 = vmul.f32 %v2016, 1.442695
      %v2090 = vpow.pop %v2089
      %v2091 = vmul.f32 %v2017, 1.442695
      %v2092 = vpow.pop %v2091
      %v2093 = vmul.f32 %v2018, 1.442695
      %v2094 = vpow.pop %v2093
      %v2095 = vmul.f32 %v2019, 1.442695
      %v2096 = vpow.pop %v2095
      %v2097 = vmul.f32 %v2020, 1.442695
      %v2098 = vpow.pop %v2097
      %v2099 = vmul.f32 %v2021, 1.442695
      %v2100 = vpow.pop %v2099
      %v2101 = vmul.f32 %v2022, 1.442695
      %v2102 = vpow.pop %v2101
      %v2103 = vmul.f32 %v2023, 1.442695
      %v2104 = vpow.pop %v2103
      %v2105 = vmul.f32 %v2024, 1.442695
      %v2106 = vpow.pop %v2105
      %v2107 = vmul.f32 %v2025, 1.442695
      %v2108 = vpow.pop %v2107
      %v2109 = vmul.f32 %v2026, 1.442695
      %v2110 = vpow.pop %v2109
      %v2111 = vmul.f32 %v2027, 1.442695
      %v2112 = vpow.pop %v2111
      %v2113 = vmul.f32 %v2028, 1.442695
      %v2114 = vpow.pop %v2113
      %v2115 = vmul.f32 %v2029, 1.442695
      %v2116 = vpow.pop %v2115
      %v2117 = vmul.f32 %v2030, 1.442695
      %v2118 = vpow.pop %v2117
      %v2119 = vmul.f32 %v2031, 1.442695
      %v2120 = vpow.pop %v2119
      %v2121 = vmul.f32 %v2032, 1.442695
      %v2122 = vpow.pop %v2121
      %v2123 = vmul.f32 %v2033, 1.442695
      %v2124 = vpow.pop %v2123
      %v2125 = vmul.f32 %v2034, 1.442695
      %v2126 = vpow.pop %v2125
      %v2127 = vmul.f32 %v2035, 1.442695
      %v2128 = vpow.pop %v2127
      %v2129 = vmul.f32 %v2036, 1.442695
      %v2130 = vpow.pop %v2129
      %v2131 = vmul.f32 %v2037, 1.442695
      %v2132 = vpow.pop %v2131
      %v2133 = vmul.f32 %v2038, 1.442695
      %v2134 = vpow.pop %v2133
      %v2135 = vmul.f32 %v2039, 1.442695
      %v2136 = vpow.pop %v2135
      %v2137 = vmul.f32 %v2040, 1.442695
      %v2138 = vpow.pop %v2137
      %v2139 = vmul.f32 %v2041, 1.442695
      %v2140 = vpow.pop %v2139
      %v2141 = vmul.f32 %v2042, 1.442695
      %v2142 = vpow.pop %v2141
      %v2143 = vmul.f32 %v2043, 1.442695
      %v2144 = vpow.pop %v2143
      %v2145 = vmul.f32 %v2044, 1.442695
      %v2146 = vpow.pop %v2145
      %v2147 = vmul.f32 %v2045, 1.442695
      %v2148 = vpow.pop %v2147
      %v2149 = vmul.f32 %v2046, 1.442695
      %v2150 = vpow.pop %v2149
      %v2151 = vmul.f32 %v2047, 1.442695
      %v2152 = vpow.pop %v2151
      %v2153 = vmul.f32 %v2048, 1.442695
      %v2154 = vpow.pop %v2153
      %v2155 = vmul.f32 %v2049, 1.442695
      %v2156 = vpow.pop %v2155
      %v2157 = vmul.f32 %v2050, 1.442695
      %v2158 = vpow.pop %v2157
      %v2159 = vmul.f32 %v2051, 1.442695
      %v2160 = vpow.pop %v2159
      %v2161 = vmul.f32 %v2052, 1.442695
      %v2162 = vpow.pop %v2161
      %v2163 = vmul.f32 %v2053, 1.442695
      %v2164 = vpow.pop %v2163
      %v2165 = vmul.f32 %v2054, 1.442695
      %v2166 = vpow.pop %v2165
      %v2167 = vmul.f32 %v2055, 1.442695
      %v2168 = vpow.pop %v2167
      %v2169 = vmul.f32 %v2056, 1.442695
      %v2170 = vpow.pop %v2169
      %v2171 = vmul.f32 %v2057, 1.442695
      %v2172 = vpow.pop %v2171
      %v2173 = vmul.f32 %v2058, 1.442695
      %v2174 = vpow.pop %v2173
      %v2175 = vmul.f32 %v2059, 1.442695
      %v2176 = vpow.pop %v2175
      %v2177 = vmul.f32 %v2060, 1.442695
      %v2178 = vpow.pop %v2177
      %v2179 = vmul.f32 %v2061, 1.442695
      %v2180 = vpow.pop %v2179
      %v2181 = vmul.f32 %v2062, 1.442695
      %v2182 = vpow.pop %v2181
      %v2183 = vmul.f32 %v2063, 1.442695
      %v2184 = vpow.pop %v2183
      %v2185 = vmul.f32 %v2064, 1.442695
      %v2186 = vpow.pop %v2185
      %v2187 = vmul.f32 %v2065, 1.442695
      %v2188 = vpow.pop %v2187
      %v2189 = vmul.f32 %v2066, 1.442695
      %v2190 = vpow.pop %v2189
      %v2191 = vmul.f32 %v2067, 1.442695
      %v2192 = vpow.pop %v2191
      %v2193 = vmul.f32 %v2068, 1.442695
      %v2194 = vpow.pop %v2193
      %v2195 = vmul.f32 %v2069, 1.442695
      %v2196 = vpow.pop %v2195
      %v2197 = vmul.f32 %v2070, 1.442695
      %v2198 = vpow.pop %v2197
      %v2199 = vrot.slane %v2072, 4
      %v2200 = vadd.f32 %v2072, %v2199
      %v2201 = vrot.slane %v2200, 2
      %v2202 = vadd.f32 %v2200, %v2201
      %v2203 = vrot.slane %v2202, 1
      %v2204 = vadd.f32 %v2202, %v2203
      %v2205 = vrot.slane %v2074, 4
      %v2206 = vadd.f32 %v2074, %v2205
      %v2207 = vrot.slane %v2206, 2
      %v2208 = vadd.f32 %v2206, %v2207
      %v2209 = vrot.slane %v2208, 1
      %v2210 = vadd.f32 %v2208, %v2209
      %v2211 = vrot.slane %v2076, 4
      %v2212 = vadd.f32 %v2076, %v2211
      %v2213 = vrot.slane %v2212, 2
      %v2214 = vadd.f32 %v2212, %v2213
      %v2215 = vrot.slane %v2214, 1
      %v2216 = vadd.f32 %v2214, %v2215
      %v2217 = vrot.slane %v2078, 4
      %v2218 = vadd.f32 %v2078, %v2217
      %v2219 = vrot.slane %v2218, 2
      %v2220 = vadd.f32 %v2218, %v2219
      %v2221 = vrot.slane %v2220, 1
      %v2222 = vadd.f32 %v2220, %v2221
      %v2223 = vrot.slane %v2080, 4
      %v2224 = vadd.f32 %v2080, %v2223
      %v2225 = vrot.slane %v2224, 2
      %v2226 = vadd.f32 %v2224, %v2225
      %v2227 = vrot.slane %v2226, 1
      %v2228 = vadd.f32 %v2226, %v2227
      %v2229 = vrot.slane %v2082, 4
      %v2230 = vadd.f32 %v2082, %v2229
      %v2231 = vrot.slane %v2230, 2
      %v2232 = vadd.f32 %v2230, %v2231
      %v2233 = vrot.slane %v2232, 1
      %v2234 = vadd.f32 %v2232, %v2233
      %v2235 = vrot.slane %v2084, 4
      %v2236 = vadd.f32 %v2084, %v2235
      %v2237 = vrot.slane %v2236, 2
      %v2238 = vadd.f32 %v2236, %v2237
      %v2239 = vrot.slane %v2238, 1
      %v2240 = vadd.f32 %v2238, %v2239
      %v2241 = vrot.slane %v2086, 4
      %v2242 = vadd.f32 %v2086, %v2241
      %v2243 = vrot.slane %v2242, 2
      %v2244 = vadd.f32 %v2242, %v2243
      %v2245 = vrot.slane %v2244, 1
      %v2246 = vadd.f32 %v2244, %v2245
      %v2247 = vrot.slane %v2088, 4
      %v2248 = vadd.f32 %v2088, %v2247
      %v2249 = vrot.slane %v2248, 2
      %v2250 = vadd.f32 %v2248, %v2249
      %v2251 = vrot.slane %v2250, 1
      %v2252 = vadd.f32 %v2250, %v2251
      %v2253 = vrot.slane %v2090, 4
      %v2254 = vadd.f32 %v2090, %v2253
      %v2255 = vrot.slane %v2254, 2
      %v2256 = vadd.f32 %v2254, %v2255
      %v2257 = vrot.slane %v2256, 1
      %v2258 = vadd.f32 %v2256, %v2257
      %v2259 = vrot.slane %v2092, 4
      %v2260 = vadd.f32 %v2092, %v2259
      %v2261 = vrot.slane %v2260, 2
      %v2262 = vadd.f32 %v2260, %v2261
      %v2263 = vrot.slane %v2262, 1
      %v2264 = vadd.f32 %v2262, %v2263
      %v2265 = vrot.slane %v2094, 4
      %v2266 = vadd.f32 %v2094, %v2265
      %v2267 = vrot.slane %v2266, 2
      %v2268 = vadd.f32 %v2266, %v2267
      %v2269 = vrot.slane %v2268, 1
      %v2270 = vadd.f32 %v2268, %v2269
      %v2271 = vrot.slane %v2096, 4
      %v2272 = vadd.f32 %v2096, %v2271
      %v2273 = vrot.slane %v2272, 2
      %v2274 = vadd.f32 %v2272, %v2273
      %v2275 = vrot.slane %v2274, 1
      %v2276 = vadd.f32 %v2274, %v2275
      %v2277 = vrot.slane %v2098, 4
      %v2278 = vadd.f32 %v2098, %v2277
      %v2279 = vrot.slane %v2278, 2
      %v2280 = vadd.f32 %v2278, %v2279
      %v2281 = vrot.slane %v2280, 1
      %v2282 = vadd.f32 %v2280, %v2281
      %v2283 = vrot.slane %v2100, 4
      %v2284 = vadd.f32 %v2100, %v2283
      %v2285 = vrot.slane %v2284, 2
      %v2286 = vadd.f32 %v2284, %v2285
      %v2287 = vrot.slane %v2286, 1
      %v2288 = vadd.f32 %v2286, %v2287
      %v2289 = vrot.slane %v2102, 4
      %v2290 = vadd.f32 %v2102, %v2289
      %v2291 = vrot.slane %v2290, 2
      %v2292 = vadd.f32 %v2290, %v2291
      %v2293 = vrot.slane %v2292, 1
      %v2294 = vadd.f32 %v2292, %v2293
      %v2295 = vrot.slane %v2104, 4
      %v2296 = vadd.f32 %v2104, %v2295
      %v2297 = vrot.slane %v2296, 2
      %v2298 = vadd.f32 %v2296, %v2297
      %v2299 = vrot.slane %v2298, 1
      %v2300 = vadd.f32 %v2298, %v2299
      %v2301 = vrot.slane %v2106, 4
      %v2302 = vadd.f32 %v2106, %v2301
      %v2303 = vrot.slane %v2302, 2
      %v2304 = vadd.f32 %v2302, %v2303
      %v2305 = vrot.slane %v2304, 1
      %v2306 = vadd.f32 %v2304, %v2305
      %v2307 = vrot.slane %v2108, 4
      %v2308 = vadd.f32 %v2108, %v2307
      %v2309 = vrot.slane %v2308, 2
      %v2310 = vadd.f32 %v2308, %v2309
      %v2311 = vrot.slane %v2310, 1
      %v2312 = vadd.f32 %v2310, %v2311
      %v2313 = vrot.slane %v2110, 4
      %v2314 = vadd.f32 %v2110, %v2313
      %v2315 = vrot.slane %v2314, 2
      %v2316 = vadd.f32 %v2314, %v2315
      %v2317 = vrot.slane %v2316, 1
      %v2318 = vadd.f32 %v2316, %v2317
      %v2319 = vrot.slane %v2112, 4
      %v2320 = vadd.f32 %v2112, %v2319
      %v2321 = vrot.slane %v2320, 2
      %v2322 = vadd.f32 %v2320, %v2321
      %v2323 = vrot.slane %v2322, 1
      %v2324 = vadd.f32 %v2322, %v2323
      %v2325 = vrot.slane %v2114, 4
      %v2326 = vadd.f32 %v2114, %v2325
      %v2327 = vrot.slane %v2326, 2
      %v2328 = vadd.f32 %v2326, %v2327
      %v2329 = vrot.slane %v2328, 1
      %v2330 = vadd.f32 %v2328, %v2329
      %v2331 = vrot.slane %v2116, 4
      %v2332 = vadd.f32 %v2116, %v2331
      %v2333 = vrot.slane %v2332, 2
      %v2334 = vadd.f32 %v2332, %v2333
      %v2335 = vrot.slane %v2334, 1
      %v2336 = vadd.f32 %v2334, %v2335
      %v2337 = vrot.slane %v2118, 4
      %v2338 = vadd.f32 %v2118, %v2337
      %v2339 = vrot.slane %v2338, 2
      %v2340 = vadd.f32 %v2338, %v2339
      %v2341 = vrot.slane %v2340, 1
      %v2342 = vadd.f32 %v2340, %v2341
      %v2343 = vrot.slane %v2120, 4
      %v2344 = vadd.f32 %v2120, %v2343
      %v2345 = vrot.slane %v2344, 2
      %v2346 = vadd.f32 %v2344, %v2345
      %v2347 = vrot.slane %v2346, 1
      %v2348 = vadd.f32 %v2346, %v2347
      %v2349 = vrot.slane %v2122, 4
      %v2350 = vadd.f32 %v2122, %v2349
      %v2351 = vrot.slane %v2350, 2
      %v2352 = vadd.f32 %v2350, %v2351
      %v2353 = vrot.slane %v2352, 1
      %v2354 = vadd.f32 %v2352, %v2353
      %v2355 = vrot.slane %v2124, 4
      %v2356 = vadd.f32 %v2124, %v2355
      %v2357 = vrot.slane %v2356, 2
      %v2358 = vadd.f32 %v2356, %v2357
      %v2359 = vrot.slane %v2358, 1
      %v2360 = vadd.f32 %v2358, %v2359
      %v2361 = vrot.slane %v2126, 4
      %v2362 = vadd.f32 %v2126, %v2361
      %v2363 = vrot.slane %v2362, 2
      %v2364 = vadd.f32 %v2362, %v2363
      %v2365 = vrot.slane %v2364, 1
      %v2366 = vadd.f32 %v2364, %v2365
      %v2367 = vrot.slane %v2128, 4
      %v2368 = vadd.f32 %v2128, %v2367
      %v2369 = vrot.slane %v2368, 2
      %v2370 = vadd.f32 %v2368, %v2369
      %v2371 = vrot.slane %v2370, 1
      %v2372 = vadd.f32 %v2370, %v2371
      %v2373 = vrot.slane %v2130, 4
      %v2374 = vadd.f32 %v2130, %v2373
      %v2375 = vrot.slane %v2374, 2
      %v2376 = vadd.f32 %v2374, %v2375
      %v2377 = vrot.slane %v2376, 1
      %v2378 = vadd.f32 %v2376, %v2377
      %v2379 = vrot.slane %v2132, 4
      %v2380 = vadd.f32 %v2132, %v2379
      %v2381 = vrot.slane %v2380, 2
      %v2382 = vadd.f32 %v2380, %v2381
      %v2383 = vrot.slane %v2382, 1
      %v2384 = vadd.f32 %v2382, %v2383
      %v2385 = vrot.slane %v2134, 4
      %v2386 = vadd.f32 %v2134, %v2385
      %v2387 = vrot.slane %v2386, 2
      %v2388 = vadd.f32 %v2386, %v2387
      %v2389 = vrot.slane %v2388, 1
      %v2390 = vadd.f32 %v2388, %v2389
      %v2391 = vrot.slane %v2136, 4
      %v2392 = vadd.f32 %v2136, %v2391
      %v2393 = vrot.slane %v2392, 2
      %v2394 = vadd.f32 %v2392, %v2393
      %v2395 = vrot.slane %v2394, 1
      %v2396 = vadd.f32 %v2394, %v2395
      %v2397 = vrot.slane %v2138, 4
      %v2398 = vadd.f32 %v2138, %v2397
      %v2399 = vrot.slane %v2398, 2
      %v2400 = vadd.f32 %v2398, %v2399
      %v2401 = vrot.slane %v2400, 1
      %v2402 = vadd.f32 %v2400, %v2401
      %v2403 = vrot.slane %v2140, 4
      %v2404 = vadd.f32 %v2140, %v2403
      %v2405 = vrot.slane %v2404, 2
      %v2406 = vadd.f32 %v2404, %v2405
      %v2407 = vrot.slane %v2406, 1
      %v2408 = vadd.f32 %v2406, %v2407
      %v2409 = vrot.slane %v2142, 4
      %v2410 = vadd.f32 %v2142, %v2409
      %v2411 = vrot.slane %v2410, 2
      %v2412 = vadd.f32 %v2410, %v2411
      %v2413 = vrot.slane %v2412, 1
      %v2414 = vadd.f32 %v2412, %v2413
      %v2415 = vrot.slane %v2144, 4
      %v2416 = vadd.f32 %v2144, %v2415
      %v2417 = vrot.slane %v2416, 2
      %v2418 = vadd.f32 %v2416, %v2417
      %v2419 = vrot.slane %v2418, 1
      %v2420 = vadd.f32 %v2418, %v2419
      %v2421 = vrot.slane %v2146, 4
      %v2422 = vadd.f32 %v2146, %v2421
      %v2423 = vrot.slane %v2422, 2
      %v2424 = vadd.f32 %v2422, %v2423
      %v2425 = vrot.slane %v2424, 1
      %v2426 = vadd.f32 %v2424, %v2425
      %v2427 = vrot.slane %v2148, 4
      %v2428 = vadd.f32 %v2148, %v2427
      %v2429 = vrot.slane %v2428, 2
      %v2430 = vadd.f32 %v2428, %v2429
      %v2431 = vrot.slane %v2430, 1
      %v2432 = vadd.f32 %v2430, %v2431
      %v2433 = vrot.slane %v2150, 4
      %v2434 = vadd.f32 %v2150, %v2433
      %v2435 = vrot.slane %v2434, 2
      %v2436 = vadd.f32 %v2434, %v2435
      %v2437 = vrot.slane %v2436, 1
      %v2438 = vadd.f32 %v2436, %v2437
      %v2439 = vrot.slane %v2152, 4
      %v2440 = vadd.f32 %v2152, %v2439
      %v2441 = vrot.slane %v2440, 2
      %v2442 = vadd.f32 %v2440, %v2441
      %v2443 = vrot.slane %v2442, 1
      %v2444 = vadd.f32 %v2442, %v2443
      %v2445 = vrot.slane %v2154, 4
      %v2446 = vadd.f32 %v2154, %v2445
      %v2447 = vrot.slane %v2446, 2
      %v2448 = vadd.f32 %v2446, %v2447
      %v2449 = vrot.slane %v2448, 1
      %v2450 = vadd.f32 %v2448, %v2449
      %v2451 = vrot.slane %v2156, 4
      %v2452 = vadd.f32 %v2156, %v2451
      %v2453 = vrot.slane %v2452, 2
      %v2454 = vadd.f32 %v2452, %v2453
      %v2455 = vrot.slane %v2454, 1
      %v2456 = vadd.f32 %v2454, %v2455
      %v2457 = vrot.slane %v2158, 4
      %v2458 = vadd.f32 %v2158, %v2457
      %v2459 = vrot.slane %v2458, 2
      %v2460 = vadd.f32 %v2458, %v2459
      %v2461 = vrot.slane %v2460, 1
      %v2462 = vadd.f32 %v2460, %v2461
      %v2463 = vrot.slane %v2160, 4
      %v2464 = vadd.f32 %v2160, %v2463
      %v2465 = vrot.slane %v2464, 2
      %v2466 = vadd.f32 %v2464, %v2465
      %v2467 = vrot.slane %v2466, 1
      %v2468 = vadd.f32 %v2466, %v2467
      %v2469 = vrot.slane %v2162, 4
      %v2470 = vadd.f32 %v2162, %v2469
      %v2471 = vrot.slane %v2470, 2
      %v2472 = vadd.f32 %v2470, %v2471
      %v2473 = vrot.slane %v2472, 1
      %v2474 = vadd.f32 %v2472, %v2473
      %v2475 = vrot.slane %v2164, 4
      %v2476 = vadd.f32 %v2164, %v2475
      %v2477 = vrot.slane %v2476, 2
      %v2478 = vadd.f32 %v2476, %v2477
      %v2479 = vrot.slane %v2478, 1
      %v2480 = vadd.f32 %v2478, %v2479
      %v2481 = vrot.slane %v2166, 4
      %v2482 = vadd.f32 %v2166, %v2481
      %v2483 = vrot.slane %v2482, 2
      %v2484 = vadd.f32 %v2482, %v2483
      %v2485 = vrot.slane %v2484, 1
      %v2486 = vadd.f32 %v2484, %v2485
      %v2487 = vrot.slane %v2168, 4
      %v2488 = vadd.f32 %v2168, %v2487
      %v2489 = vrot.slane %v2488, 2
      %v2490 = vadd.f32 %v2488, %v2489
      %v2491 = vrot.slane %v2490, 1
      %v2492 = vadd.f32 %v2490, %v2491
      %v2493 = vrot.slane %v2170, 4
      %v2494 = vadd.f32 %v2170, %v2493
      %v2495 = vrot.slane %v2494, 2
      %v2496 = vadd.f32 %v2494, %v2495
      %v2497 = vrot.slane %v2496, 1
      %v2498 = vadd.f32 %v2496, %v2497
      %v2499 = vrot.slane %v2172, 4
      %v2500 = vadd.f32 %v2172, %v2499
      %v2501 = vrot.slane %v2500, 2
      %v2502 = vadd.f32 %v2500, %v2501
      %v2503 = vrot.slane %v2502, 1
      %v2504 = vadd.f32 %v2502, %v2503
      %v2505 = vrot.slane %v2174, 4
      %v2506 = vadd.f32 %v2174, %v2505
      %v2507 = vrot.slane %v2506, 2
      %v2508 = vadd.f32 %v2506, %v2507
      %v2509 = vrot.slane %v2508, 1
      %v2510 = vadd.f32 %v2508, %v2509
      %v2511 = vrot.slane %v2176, 4
      %v2512 = vadd.f32 %v2176, %v2511
      %v2513 = vrot.slane %v2512, 2
      %v2514 = vadd.f32 %v2512, %v2513
      %v2515 = vrot.slane %v2514, 1
      %v2516 = vadd.f32 %v2514, %v2515
      %v2517 = vrot.slane %v2178, 4
      %v2518 = vadd.f32 %v2178, %v2517
      %v2519 = vrot.slane %v2518, 2
      %v2520 = vadd.f32 %v2518, %v2519
      %v2521 = vrot.slane %v2520, 1
      %v2522 = vadd.f32 %v2520, %v2521
      %v2523 = vrot.slane %v2180, 4
      %v2524 = vadd.f32 %v2180, %v2523
      %v2525 = vrot.slane %v2524, 2
      %v2526 = vadd.f32 %v2524, %v2525
      %v2527 = vrot.slane %v2526, 1
      %v2528 = vadd.f32 %v2526, %v2527
      %v2529 = vrot.slane %v2182, 4
      %v2530 = vadd.f32 %v2182, %v2529
      %v2531 = vrot.slane %v2530, 2
      %v2532 = vadd.f32 %v2530, %v2531
      %v2533 = vrot.slane %v2532, 1
      %v2534 = vadd.f32 %v2532, %v2533
      %v2535 = vrot.slane %v2184, 4
      %v2536 = vadd.f32 %v2184, %v2535
      %v2537 = vrot.slane %v2536, 2
      %v2538 = vadd.f32 %v2536, %v2537
      %v2539 = vrot.slane %v2538, 1
      %v2540 = vadd.f32 %v2538, %v2539
      %v2541 = vrot.slane %v2186, 4
      %v2542 = vadd.f32 %v2186, %v2541
      %v2543 = vrot.slane %v2542, 2
      %v2544 = vadd.f32 %v2542, %v2543
      %v2545 = vrot.slane %v2544, 1
      %v2546 = vadd.f32 %v2544, %v2545
      %v2547 = vrot.slane %v2188, 4
      %v2548 = vadd.f32 %v2188, %v2547
      %v2549 = vrot.slane %v2548, 2
      %v2550 = vadd.f32 %v2548, %v2549
      %v2551 = vrot.slane %v2550, 1
      %v2552 = vadd.f32 %v2550, %v2551
      %v2553 = vrot.slane %v2190, 4
      %v2554 = vadd.f32 %v2190, %v2553
      %v2555 = vrot.slane %v2554, 2
      %v2556 = vadd.f32 %v2554, %v2555
      %v2557 = vrot.slane %v2556, 1
      %v2558 = vadd.f32 %v2556, %v2557
      %v2559 = vrot.slane %v2192, 4
      %v2560 = vadd.f32 %v2192, %v2559
      %v2561 = vrot.slane %v2560, 2
      %v2562 = vadd.f32 %v2560, %v2561
      %v2563 = vrot.slane %v2562, 1
      %v2564 = vadd.f32 %v2562, %v2563
      %v2565 = vrot.slane %v2194, 4
      %v2566 = vadd.f32 %v2194, %v2565
      %v2567 = vrot.slane %v2566, 2
      %v2568 = vadd.f32 %v2566, %v2567
      %v2569 = vrot.slane %v2568, 1
      %v2570 = vadd.f32 %v2568, %v2569
      %v2571 = vrot.slane %v2196, 4
      %v2572 = vadd.f32 %v2196, %v2571
      %v2573 = vrot.slane %v2572, 2
      %v2574 = vadd.f32 %v2572, %v2573
      %v2575 = vrot.slane %v2574, 1
      %v2576 = vadd.f32 %v2574, %v2575
      %v2577 = vrot.slane %v2198, 4
      %v2578 = vadd.f32 %v2198, %v2577
      %v2579 = vrot.slane %v2578, 2
      %v2580 = vadd.f32 %v2578, %v2579
      %v2581 = vrot.slane %v2580, 1
      %v2582 = vadd.f32 %v2580, %v2581
      %v2583 = vrcp.pop %v2204
      %v2584 = vmul.f32 %v2072, %v2583
      %v2585 = vrcp.pop %v2210
      %v2586 = vmul.f32 %v2074, %v2585
      %v2587 = vrcp.pop %v2216
      %v2588 = vmul.f32 %v2076, %v2587
      %v2589 = vrcp.pop %v2222
      %v2590 = vmul.f32 %v2078, %v2589
      %v2591 = vrcp.pop %v2228
      %v2592 = vmul.f32 %v2080, %v2591
      %v2593 = vrcp.pop %v2234
      %v2594 = vmul.f32 %v2082, %v2593
      %v2595 = vrcp.pop %v2240
      %v2596 = vmul.f32 %v2084, %v2595
      %v2597 = vrcp.pop %v2246
      %v2598 = vmul.f32 %v2086, %v2597
      %v2599 = vrcp.pop %v2252
      %v2600 = vmul.f32 %v2088, %v2599
      %v2601 = vrcp.pop %v2258
      %v2602 = vmul.f32 %v2090, %v2601
      %v2603 = vrcp.pop %v2264
      %v2604 = vmul.f32 %v2092, %v2603
      %v2605 = vrcp.pop %v2270
      %v2606 = vmul.f32 %v2094, %v2605
      %v2607 = vrcp.pop %v2276
      %v2608 = vmul.f32 %v2096, %v2607
      %v2609 = vrcp.pop %v2282
      %v2610 = vmul.f32 %v2098, %v2609
      %v2611 = vrcp.pop %v2288
      %v2612 = vmul.f32 %v2100, %v2611
      %v2613 = vrcp.pop %v2294
      %v2614 = vmul.f32 %v2102, %v2613
      %v2615 = vrcp.pop %v2300
      %v2616 = vmul.f32 %v2104, %v2615
      %v2617 = vrcp.pop %v2306
      %v2618 = vmul.f32 %v2106, %v2617
      %v2619 = vrcp.pop %v2312
      %v2620 = vmul.f32 %v2108, %v2619
      %v2621 = vrcp.pop %v2318
      %v2622 = vmul.f32 %v2110, %v2621
      %v2623 = vrcp.pop %v2324
      %v2624 = vmul.f32 %v2112, %v2623
      %v2625 = vrcp.pop %v2330
      %v2626 = vmul.f32 %v2114, %v2625
      %v2627 = vrcp.pop %v2336
      %v2628 = vmul.f32 %v2116, %v2627
      %v2629 = vrcp.pop %v2342
      %v2630 = vmul.f32 %v2118, %v2629
      %v2631 = vrcp.pop %v2348
      %v2632 = vmul.f32 %v2120, %v2631
      %v2633 = vrcp.pop %v2354
      %v2634 = vmul.f32 %v2122, %v2633
      %v2635 = vrcp.pop %v2360
      %v2636 = vmul.f32 %v2124, %v2635
      %v2637 = vrcp.pop %v2366
      %v2638 = vmul.f32 %v2126, %v2637
      %v2639 = vrcp.pop %v2372
      %v2640 = vmul.f32 %v2128, %v2639
      %v2641 = vrcp.pop %v2378
      %v2642 = vmul.f32 %v2130, %v2641
      %v2643 = vrcp.pop %v2384
      %v2644 = vmul.f32 %v2132, %v2643
      %v2645 = vrcp.pop %v2390
      %v2646 = vmul.f32 %v2134, %v2645
      %v2647 = vrcp.pop %v2396
      %v2648 = vmul.f32 %v2136, %v2647
      %v2649 = vrcp.pop %v2402
      %v2650 = vmul.f32 %v2138, %v2649
      %v2651 = vrcp.pop %v2408
      %v2652 = vmul.f32 %v2140, %v2651
      %v2653 = vrcp.pop %v2414
      %v2654 = vmul.f32 %v2142, %v2653
      %v2655 = vrcp.pop %v2420
      %v2656 = vmul.f32 %v2144, %v2655
      %v2657 = vrcp.pop %v2426
      %v2658 = vmul.f32 %v2146, %v2657
      %v2659 = vrcp.pop %v2432
      %v2660 = vmul.f32 %v2148, %v2659
      %v2661 = vrcp.pop %v2438
      %v2662 = vmul.f32 %v2150, %v2661
      %v2663 = vrcp.pop %v2444
      %v2664 = vmul.f32 %v2152, %v2663
      %v2665 = vrcp.pop %v2450
      %v2666 = vmul.f32 %v2154, %v2665
      %v2667 = vrcp.pop %v2456
      %v2668 = vmul.f32 %v2156, %v2667
      %v2669 = vrcp.pop %v2462
      %v2670 = vmul.f32 %v2158, %v2669
      %v2671 = vrcp.pop %v2468
      %v2672 = vmul.f32 %v2160, %v2671
      %v2673 = vrcp.pop %v2474
      %v2674 = vmul.f32 %v2162, %v2673
      %v2675 = vrcp.pop %v2480
      %v2676 = vmul.f32 %v2164, %v2675
      %v2677 = vrcp.pop %v2486
      %v2678 = vmul.f32 %v2166, %v2677
      %v2679 = vrcp.pop %v2492
      %v2680 = vmul.f32 %v2168, %v2679
      %v2681 = vrcp.pop %v2498
      %v2682 = vmul.f32 %v2170, %v2681
      %v2683 = vrcp.pop %v2504
      %v2684 = vmul.f32 %v2172, %v2683
      %v2685 = vrcp.pop %v2510
      %v2686 = vmul.f32 %v2174, %v2685
      %v2687 = vrcp.pop %v2516
      %v2688 = vmul.f32 %v2176, %v2687
      %v2689 = vrcp.pop %v2522
      %v2690 = vmul.f32 %v2178, %v2689
      %v2691 = vrcp.pop %v2528
      %v2692 = vmul.f32 %v2180, %v2691
      %v2693 = vrcp.pop %v2534
      %v2694 = vmul.f32 %v2182, %v2693
      %v2695 = vrcp.pop %v2540
      %v2696 = vmul.f32 %v2184, %v2695
      %v2697 = vrcp.pop %v2546
      %v2698 = vmul.f32 %v2186, %v2697
      %v2699 = vrcp.pop %v2552
      %v2700 = vmul.f32 %v2188, %v2699
      %v2701 = vrcp.pop %v2558
      %v2702 = vmul.f32 %v2190, %v2701
      %v2703 = vrcp.pop %v2564
      %v2704 = vmul.f32 %v2192, %v2703
      %v2705 = vrcp.pop %v2570
      %v2706 = vmul.f32 %v2194, %v2705
      %v2707 = vrcp.pop %v2576
      %v2708 = vmul.f32 %v2196, %v2707
      %v2709 = vrcp.pop %v2582
      %v2710 = vmul.f32 %v2198, %v2709
      %v2711 = vmul.f32 %v2584, %v1048
      %v2712 = vmul.f32 %v2586, %v1050
      %v2713 = vmul.f32 %v2588, %v1054
      %v2714 = vmul.f32 %v2590, %v1056
      %v2715 = vmul.f32 %v2592, %v1060
      %v2716 = vmul.f32 %v2594, %v1062
      %v2717 = vmul.f32 %v2596, %v1066
      %v2718 = vmul.f32 %v2598, %v1068
      %v2719 = vmul.f32 %v2600, %v1072
      %v2720 = vmul.f32 %v2602, %v1074
      %v2721 = vmul.f32 %v2604, %v1078
      %v2722 = vmul.f32 %v2606, %v1080
      %v2723 = vmul.f32 %v2608, %v1084
      %v2724 = vmul.f32 %v2610, %v1086
      %v2725 = vmul.f32 %v2612, %v1090
      %v2726 = vmul.f32 %v2614, %v1092
      %v2727 = vmul.f32 %v2616, %v1096
      %v2728 = vmul.f32 %v2618, %v1098
      %v2729 = vmul.f32 %v2620, %v1102
      %v2730 = vmul.f32 %v2622, %v1104
      %v2731 = vmul.f32 %v2624, %v1108
      %v2732 = vmul.f32 %v2626, %v1110
      %v2733 = vmul.f32 %v2628, %v1114
      %v2734 = vmul.f32 %v2630, %v1116
      %v2735 = vmul.f32 %v2632, %v1120
      %v2736 = vmul.f32 %v2634, %v1122
      %v2737 = vmul.f32 %v2636, %v1126
      %v2738 = vmul.f32 %v2638, %v1128
      %v2739 = vmul.f32 %v2640, %v1132
      %v2740 = vmul.f32 %v2642, %v1134
      %v2741 = vmul.f32 %v2644, %v1138
      %v2742 = vmul.f32 %v2646, %v1140
      %v2743 = vmul.f32 %v2648, %v1144
      %v2744 = vmul.f32 %v2650, %v1146
      %v2745 = vmul.f32 %v2652, %v1150
      %v2746 = vmul.f32 %v2654, %v1152
      %v2747 = vmul.f32 %v2656, %v1156
      %v2748 = vmul.f32 %v2658, %v1158
      %v2749 = vmul.f32 %v2660, %v1162
      %v2750 = vmul.f32 %v2662, %v1164
      %v2751 = vmul.f32 %v2664, %v1168
      %v2752 = vmul.f32 %v2666, %v1170
      %v2753 = vmul.f32 %v2668, %v1174
      %v2754 = vmul.f32 %v2670, %v1176
      %v2755 = vmul.f32 %v2672, %v1180
      %v2756 = vmul.f32 %v2674, %v1182
      %v2757 = vmul.f32 %v2676, %v1186
      %v2758 = vmul.f32 %v2678, %v1188
      %v2759 = vmul.f32 %v2680, %v1192
      %v2760 = vmul.f32 %v2682, %v1194
      %v2761 = vmul.f32 %v2684, %v1198
      %v2762 = vmul.f32 %v2686, %v1200
      %v2763 = vmul.f32 %v2688, %v1204
      %v2764 = vmul.f32 %v2690, %v1206
      %v2765 = vmul.f32 %v2692, %v1210
      %v2766 = vmul.f32 %v2694, %v1212
      %v2767 = vmul.f32 %v2696, %v1216
      %v2768 = vmul.f32 %v2698, %v1218
      %v2769 = vmul.f32 %v2700, %v1222
      %v2770 = vmul.f32 %v2702, %v1224
      %v2771 = vmul.f32 %v2704, %v1228
      %v2772 = vmul.f32 %v2706, %v1230
      %v2773 = vmul.f32 %v2708, %v1234
      %v2774 = vmul.f32 %v2710, %v1236
      %v2775 = vld [vmem:[%s4] sm:$0xff]
      %v2776 = vld [vmem:[%s4 + $0x8] sm:$0xff]
      %v2777 = vld [vmem:[%s4 + $0x10] sm:$0xff]
      %v2778 = vld [vmem:[%s4 + $0x18] sm:$0xff]
      %v2779 = vld [vmem:[%s4 + $0x20] sm:$0xff]
      %v2780 = vld [vmem:[%s4 + $0x28] sm:$0xff]
      %v2781 = vld [vmem:[%s4 + $0x30] sm:$0xff]
      %v2782 = vld [vmem:[%s4 + $0x38] sm:$0xff]
      %v2783 = vld [vmem:[%s4 + $0x40] sm:$0xff]
      %v2784 = vld [vmem:[%s4 + $0x48] sm:$0xff]
      %v2785 = vld [vmem:[%s4 + $0x50] sm:$0xff]
      %v2786 = vld [vmem:[%s4 + $0x58] sm:$0xff]
      %v2787 = vld [vmem:[%s4 + $0x60] sm:$0xff]
      %v2788 = vld [vmem:[%s4 + $0x68] sm:$0xff]
      %v2789 = vld [vmem:[%s4 + $0x70] sm:$0xff]
      %v2790 = vld [vmem:[%s4 + $0x78] sm:$0xff]
      %v2791 = vld [vmem:[%s4 + $0x80] sm:$0xff]
      %v2792 = vld [vmem:[%s4 + $0x88] sm:$0xff]
      %v2793 = vld [vmem:[%s4 + $0x90] sm:$0xff]
      %v2794 = vld [vmem:[%s4 + $0x98] sm:$0xff]
      %v2795 = vld [vmem:[%s4 + $0xa0] sm:$0xff]
      %v2796 = vld [vmem:[%s4 + $0xa8] sm:$0xff]
      %v2797 = vld [vmem:[%s4 + $0xb0] sm:$0xff]
      %v2798 = vld [vmem:[%s4 + $0xb8] sm:$0xff]
      %v2799 = vld [vmem:[%s4 + $0xc0] sm:$0xff]
      %v2800 = vld [vmem:[%s4 + $0xc8] sm:$0xff]
      %v2801 = vld [vmem:[%s4 + $0xd0] sm:$0xff]
      %v2802 = vld [vmem:[%s4 + $0xd8] sm:$0xff]
      %v2803 = vld [vmem:[%s4 + $0xe0] sm:$0xff]
      %v2804 = vld [vmem:[%s4 + $0xe8] sm:$0xff]
      %v2805 = vld [vmem:[%s4 + $0xf0] sm:$0xff]
      %v2806 = vld [vmem:[%s4 + $0xf8] sm:$0xff]
      %v2807 = vld [vmem:[%s6] sm:$0x1]
      %v2808 = vlaneseq
      %v2809 = vshrl.u32 %v2808, 7
      %v2810 = vsub.s32 0, %v2809
      %v2811 = vrot.slane %v2807, %v2810
      %2812 = vmatprep.subr.mxu0 0.0
      %2813 = vmatpush1.msra.mxu0 %v2775
      %2814 = vmatprep.subr.mxu0 0.0
      %2815 = vmatpush1.msra.mxu0 %v2776
      %2816 = vmatprep.subr.mxu0 0.0
      %2817 = vmatpush1.msra.mxu0 %v2777
      %2818 = vmatprep.subr.mxu0 0.0
      %2819 = vmatpush1.msra.mxu0 %v2778
      %2820 = vmatprep.subr.mxu0 0.0
      %2821 = vmatpush1.msra.mxu0 %v2779
      %2822 = vmatprep.subr.mxu0 0.0
      %2823 = vmatpush1.msra.mxu0 %v2780
      %2824 = vmatprep.subr.mxu0 0.0
      %2825 = vmatpush1.msra.mxu0 %v2781
      %2826 = vmatprep.subr.mxu0 0.0
      %2827 = vmatpush1.msra.mxu0 %v2782
      %2828 = vmatprep.subr.mxu0 0.0
      %2829 = vmatpush1.msra.mxu0 %v2783
      %2830 = vmatprep.subr.mxu0 0.0
      %2831 = vmatpush1.msra.mxu0 %v2784
      %2832 = vmatprep.subr.mxu0 0.0
      %2833 = vmatpush1.msra.mxu0 %v2785
      %2834 = vmatprep.subr.mxu0 0.0
      %2835 = vmatpush1.msra.mxu0 %v2786
      %2836 = vmatprep.subr.mxu0 0.0
      %2837 = vmatpush1.msra.mxu0 %v2787
      %2838 = vmatprep.subr.mxu0 0.0
      %2839 = vmatpush1.msra.mxu0 %v2788
      %2840 = vmatprep.subr.mxu0 0.0
      %2841 = vmatpush1.msra.mxu0 %v2789
      %2842 = vmatprep.subr.mxu0 0.0
      %2843 = vmatpush1.msra.mxu0 %v2790
      %2844 = vmatprep.subr.mxu0 0.0
      %2845 = vmatpush1.msra.mxu0 %v2791
      %2846 = vmatprep.subr.mxu0 0.0
      %2847 = vmatpush1.msra.mxu0 %v2792
      %2848 = vmatprep.subr.mxu0 0.0
      %2849 = vmatpush1.msra.mxu0 %v2793
      %2850 = vmatprep.subr.mxu0 0.0
      %2851 = vmatpush1.msra.mxu0 %v2794
      %2852 = vmatprep.subr.mxu0 0.0
      %2853 = vmatpush1.msra.mxu0 %v2795
      %2854 = vmatprep.subr.mxu0 0.0
      %2855 = vmatpush1.msra.mxu0 %v2796
      %2856 = vmatprep.subr.mxu0 0.0
      %2857 = vmatpush1.msra.mxu0 %v2797
      %2858 = vmatprep.subr.mxu0 0.0
      %2859 = vmatpush1.msra.mxu0 %v2798
      %2860 = vmatprep.subr.mxu0 0.0
      %2861 = vmatpush1.msra.mxu0 %v2799
      %2862 = vmatprep.subr.mxu0 0.0
      %2863 = vmatpush1.msra.mxu0 %v2800
      %2864 = vmatprep.subr.mxu0 0.0
      %2865 = vmatpush1.msra.mxu0 %v2801
      %2866 = vmatprep.subr.mxu0 0.0
      %2867 = vmatpush1.msra.mxu0 %v2802
      %2868 = vmatprep.subr.mxu0 0.0
      %2869 = vmatpush1.msra.mxu0 %v2803
      %2870 = vmatprep.subr.mxu0 0.0
      %2871 = vmatpush1.msra.mxu0 %v2804
      %2872 = vmatprep.subr.mxu0 0.0
      %2873 = vmatpush1.msra.mxu0 %v2805
      %2874 = vmatprep.subr.mxu0 0.0
      %2875 = vmatpush1.msra.mxu0 %v2806
      %2876 = vmatprep.mubr.f32.mxu0 %v2712
      %2877 = vmatmul.mubr.f32.gmra.mrb[0].mxu0 %v2711
      %v2878 = vpop.f32.mrb[0].mxu0
      %v2879 = vadd.f32 %v2811, %v2878
      %v2880 = vpop.f32.mrb[0].mxu0
      %2881 = vmatprep.mubr.f32.mxu0 %v2714
      %2882 = vmatmul.mubr.f32.gmra.mrb[0].mxu0 %v2713
      %v2883 = vpop.f32.mrb[0].mxu0
      %v2884 = vadd.f32 %v2811, %v2883
      %v2885 = vpop.f32.mrb[0].mxu0
      %2886 = vmatprep.mubr.f32.mxu0 %v2716
      %2887 = vmatmul.mubr.f32.gmra.mrb[0].mxu0 %v2715
      %v2888 = vpop.f32.mrb[0].mxu0
      %v2889 = vadd.f32 %v2811, %v2888
      %v2890 = vpop.f32.mrb[0].mxu0
      %2891 = vmatprep.mubr.f32.mxu0 %v2718
      %2892 = vmatmul.mubr.f32.gmra.mrb[0].mxu0 %v2717
      %v2893 = vpop.f32.mrb[0].mxu0
      %v2894 = vadd.f32 %v2811, %v2893
      %v2895 = vpop.f32.mrb[0].mxu0
      %2896 = vmatprep.mubr.f32.mxu0 %v2720
      %2897 = vmatmul.mubr.f32.gmra.mrb[0].mxu0 %v2719
      %v2898 = vpop.f32.mrb[0].mxu0
      %v2899 = vadd.f32 %v2811, %v2898
      %v2900 = vpop.f32.mrb[0].mxu0
      %2901 = vmatprep.mubr.f32.mxu0 %v2722
      %2902 = vmatmul.mubr.f32.gmra.mrb[0].mxu0 %v2721
      %v2903 = vpop.f32.mrb[0].mxu0
      %v2904 = vadd.f32 %v2811, %v2903
      %v2905 = vpop.f32.mrb[0].mxu0
      %2906 = vmatprep.mubr.f32.mxu0 %v2724
      %2907 = vmatmul.mubr.f32.gmra.mrb[0].mxu0 %v2723
      %v2908 = vpop.f32.mrb[0].mxu0
      %v2909 = vadd.f32 %v2811, %v2908
      %v2910 = vpop.f32.mrb[0].mxu0
      %2911 = vmatprep.mubr.f32.mxu0 %v2726
      %2912 = vmatmul.mubr.f32.gmra.mrb[0].mxu0 %v2725
      %v2913 = vpop.f32.mrb[0].mxu0
      %v2914 = vadd.f32 %v2811, %v2913
      %v2915 = vpop.f32.mrb[0].mxu0
      %2916 = vmatprep.mubr.f32.mxu0 %v2728
      %2917 = vmatmul.mubr.f32.gmra.mrb[0].mxu0 %v2727
      %v2918 = vpop.f32.mrb[0].mxu0
      %v2919 = vadd.f32 %v2811, %v2918
      %v2920 = vpop.f32.mrb[0].mxu0
      %2921 = vmatprep.mubr.f32.mxu0 %v2730
      %2922 = vmatmul.mubr.f32.gmra.mrb[0].mxu0 %v2729
      %v2923 = vpop.f32.mrb[0].mxu0
      %v2924 = vadd.f32 %v2811, %v2923
      %v2925 = vpop.f32.mrb[0].mxu0
      %2926 = vmatprep.mubr.f32.mxu0 %v2732
      %2927 = vmatmul.mubr.f32.gmra.mrb[0].mxu0 %v2731
      %v2928 = vpop.f32.mrb[0].mxu0
      %v2929 = vadd.f32 %v2811, %v2928
      %v2930 = vpop.f32.mrb[0].mxu0
      %2931 = vmatprep.mubr.f32.mxu0 %v2734
      %2932 = vmatmul.mubr.f32.gmra.mrb[0].mxu0 %v2733
      %v2933 = vpop.f32.mrb[0].mxu0
      %v2934 = vadd.f32 %v2811, %v2933
      %v2935 = vpop.f32.mrb[0].mxu0
      %2936 = vmatprep.mubr.f32.mxu0 %v2736
      %2937 = vmatmul.mubr.f32.gmra.mrb[0].mxu0 %v2735
      %v2938 = vpop.f32.mrb[0].mxu0
      %v2939 = vadd.f32 %v2811, %v2938
      %v2940 = vpop.f32.mrb[0].mxu0
      %2941 = vmatprep.mubr.f32.mxu0 %v2738
      %2942 = vmatmul.mubr.f32.gmra.mrb[0].mxu0 %v2737
      %v2943 = vpop.f32.mrb[0].mxu0
      %v2944 = vadd.f32 %v2811, %v2943
      %v2945 = vpop.f32.mrb[0].mxu0
      %2946 = vmatprep.mubr.f32.mxu0 %v2740
      %2947 = vmatmul.mubr.f32.gmra.mrb[0].mxu0 %v2739
      %v2948 = vpop.f32.mrb[0].mxu0
      %v2949 = vadd.f32 %v2811, %v2948
      %v2950 = vpop.f32.mrb[0].mxu0
      %2951 = vmatprep.mubr.f32.mxu0 %v2742
      %2952 = vmatmul.mubr.f32.gmra.mrb[0].mxu0 %v2741
      %v2953 = vpop.f32.mrb[0].mxu0
      %v2954 = vadd.f32 %v2811, %v2953
      %v2955 = vpop.f32.mrb[0].mxu0
      %2956 = vmatprep.mubr.f32.mxu0 %v2744
      %2957 = vmatmul.mubr.f32.gmra.mrb[0].mxu0 %v2743
      %v2958 = vpop.f32.mrb[0].mxu0
      %v2959 = vadd.f32 %v2811, %v2958
      %v2960 = vpop.f32.mrb[0].mxu0
      %2961 = vmatprep.mubr.f32.mxu0 %v2746
      %2962 = vmatmul.mubr.f32.gmra.mrb[0].mxu0 %v2745
      %v2963 = vpop.f32.mrb[0].mxu0
      %v2964 = vadd.f32 %v2811, %v2963
      %v2965 = vpop.f32.mrb[0].mxu0
      %2966 = vmatprep.mubr.f32.mxu0 %v2748
      %2967 = vmatmul.mubr.f32.gmra.mrb[0].mxu0 %v2747
      %v2968 = vpop.f32.mrb[0].mxu0
      %v2969 = vadd.f32 %v2811, %v2968
      %v2970 = vpop.f32.mrb[0].mxu0
      %2971 = vmatprep.mubr.f32.mxu0 %v2750
      %2972 = vmatmul.mubr.f32.gmra.mrb[0].mxu0 %v2749
      %v2973 = vpop.f32.mrb[0].mxu0
      %v2974 = vadd.f32 %v2811, %v2973
      %v2975 = vpop.f32.mrb[0].mxu0
      %2976 = vmatprep.mubr.f32.mxu0 %v2752
      %2977 = vmatmul.mubr.f32.gmra.mrb[0].mxu0 %v2751
      %v2978 = vpop.f32.mrb[0].mxu0
      %v2979 = vadd.f32 %v2811, %v2978
      %v2980 = vpop.f32.mrb[0].mxu0
      %2981 = vmatprep.mubr.f32.mxu0 %v2754
      %2982 = vmatmul.mubr.f32.gmra.mrb[0].mxu0 %v2753
      %v2983 = vpop.f32.mrb[0].mxu0
      %v2984 = vadd.f32 %v2811, %v2983
      %v2985 = vpop.f32.mrb[0].mxu0
      %2986 = vmatprep.mubr.f32.mxu0 %v2756
      %2987 = vmatmul.mubr.f32.gmra.mrb[0].mxu0 %v2755
      %v2988 = vpop.f32.mrb[0].mxu0
      %v2989 = vadd.f32 %v2811, %v2988
      %v2990 = vpop.f32.mrb[0].mxu0
      %2991 = vmatprep.mubr.f32.mxu0 %v2758
      %2992 = vmatmul.mubr.f32.gmra.mrb[0].mxu0 %v2757
      %v2993 = vpop.f32.mrb[0].mxu0
      %v2994 = vadd.f32 %v2811, %v2993
      %v2995 = vpop.f32.mrb[0].mxu0
      %2996 = vmatprep.mubr.f32.mxu0 %v2760
      %2997 = vmatmul.mubr.f32.gmra.mrb[0].mxu0 %v2759
      %v2998 = vpop.f32.mrb[0].mxu0
      %v2999 = vadd.f32 %v2811, %v2998
      %v3000 = vpop.f32.mrb[0].mxu0
      %3001 = vmatprep.mubr.f32.mxu0 %v2762
      %3002 = vmatmul.mubr.f32.gmra.mrb[0].mxu0 %v2761
      %v3003 = vpop.f32.mrb[0].mxu0
      %v3004 = vadd.f32 %v2811, %v3003
      %v3005 = vpop.f32.mrb[0].mxu0
      %3006 = vmatprep.mubr.f32.mxu0 %v2764
      %3007 = vmatmul.mubr.f32.gmra.mrb[0].mxu0 %v2763
      %v3008 = vpop.f32.mrb[0].mxu0
      %v3009 = vadd.f32 %v2811, %v3008
      %v3010 = vpop.f32.mrb[0].mxu0
      %3011 = vmatprep.mubr.f32.mxu0 %v2766
      %3012 = vmatmul.mubr.f32.gmra.mrb[0].mxu0 %v2765
      %v3013 = vpop.f32.mrb[0].mxu0
      %v3014 = vadd.f32 %v2811, %v3013
      %v3015 = vpop.f32.mrb[0].mxu0
      %3016 = vmatprep.mubr.f32.mxu0 %v2768
      %3017 = vmatmul.mubr.f32.gmra.mrb[0].mxu0 %v2767
      %v3018 = vpop.f32.mrb[0].mxu0
      %v3019 = vadd.f32 %v2811, %v3018
      %v3020 = vpop.f32.mrb[0].mxu0
      %3021 = vmatprep.mubr.f32.mxu0 %v2770
      %3022 = vmatmul.mubr.f32.gmra.mrb[0].mxu0 %v2769
      %v3023 = vpop.f32.mrb[0].mxu0
      %v3024 = vadd.f32 %v2811, %v3023
      %v3025 = vpop.f32.mrb[0].mxu0
      %3026 = vmatprep.mubr.f32.mxu0 %v2772
      %3027 = vmatmul.mubr.f32.gmra.mrb[0].mxu0 %v2771
      %v3028 = vpop.f32.mrb[0].mxu0
      %v3029 = vadd.f32 %v2811, %v3028
      %v3030 = vpop.f32.mrb[0].mxu0
      %3031 = vmatprep.mubr.f32.mxu0 %v2774
      %3032 = vmatmul.mubr.f32.gmra.mrb[0].mxu0 %v2773
      %v3033 = vpop.f32.mrb[0].mxu0
      %v3034 = vadd.f32 %v2811, %v3033
      %v3035 = vpop.f32.mrb[0].mxu0
      %3036 = vdwg.mxu0
      %v3037 = vld [vmem:[%s5] sm:$0xff]
      %v3038 = vld [vmem:[%s5 + $0x8] sm:$0xff]
      %v3039 = vld [vmem:[%s5 + $0x10] sm:$0xff]
      %v3040 = vld [vmem:[%s5 + $0x18] sm:$0xff]
      %v3041 = vld [vmem:[%s6 + $0x1] sm:$0x1]
      %v3042 = vlaneseq
      %v3043 = vshrl.u32 %v3042, 7
      %v3044 = vsub.s32 0, %v3043
      %v3045 = vrot.slane %v3041, %v3044
      %v3047 = vsel %vm370, %v2879, 0
      %v3050 = vsel %vm370, %v2884, 0
      %v3053 = vsel %vm370, %v2889, 0
      %v3056 = vsel %vm370, %v2894, 0
      %v3059 = vsel %vm370, %v2899, 0
      %v3062 = vsel %vm370, %v2904, 0
      %v3065 = vsel %vm370, %v2909, 0
      %v3068 = vsel %vm370, %v2914, 0
      %v3071 = vsel %vm370, %v2919, 0
      %v3074 = vsel %vm370, %v2924, 0
      %v3077 = vsel %vm370, %v2929, 0
      %v3080 = vsel %vm370, %v2934, 0
      %v3083 = vsel %vm370, %v2939, 0
      %v3086 = vsel %vm370, %v2944, 0
      %v3089 = vsel %vm370, %v2949, 0
      %v3092 = vsel %vm370, %v2954, 0
      %v3095 = vsel %vm370, %v2959, 0
      %v3098 = vsel %vm370, %v2964, 0
      %v3101 = vsel %vm370, %v2969, 0
      %v3104 = vsel %vm370, %v2974, 0
      %v3107 = vsel %vm370, %v2979, 0
      %v3110 = vsel %vm370, %v2984, 0
      %v3113 = vsel %vm370, %v2989, 0
      %v3116 = vsel %vm370, %v2994, 0
      %v3119 = vsel %vm370, %v2999, 0
      %v3122 = vsel %vm370, %v3004, 0
      %v3125 = vsel %vm370, %v3009, 0
      %v3128 = vsel %vm370, %v3014, 0
      %v3131 = vsel %vm370, %v3019, 0
      %v3134 = vsel %vm370, %v3024, 0
      %v3137 = vsel %vm370, %v3029, 0
      %v3140 = vsel %vm370, %v3034, 0
      %3142 = vmatprep.subr.mxu0 0.0
      %3143 = vmatpush1.msra.mxu0 %v3037
      %3144 = vmatprep.subr.mxu0 0.0
      %3145 = vmatpush1.msra.mxu0 %v3038
      %3146 = vmatprep.subr.mxu0 0.0
      %3147 = vmatpush1.msra.mxu0 %v3039
      %3148 = vmatprep.subr.mxu0 0.0
      %3149 = vmatpush1.msra.mxu0 %v3040
      %3150 = vmatprep.subr.mxu0 0.0
      %3151 = vmatpush1.msra.mxu0 0.0
      %3152 = vmatprep.subr.mxu0 0.0
      %3153 = vmatpush1.msra.mxu0 0.0
      %3154 = vmatprep.subr.mxu0 0.0
      %3155 = vmatpush1.msra.mxu0 0.0
      %3156 = vmatprep.subr.mxu0 0.0
      %3157 = vmatpush1.msra.mxu0 0.0
      %3158 = vmatprep.subr.mxu0 0.0
      %3159 = vmatpush1.msra.mxu0 0.0
      %3160 = vmatprep.subr.mxu0 0.0
      %3161 = vmatpush1.msra.mxu0 0.0
      %3162 = vmatprep.subr.mxu0 0.0
      %3163 = vmatpush1.msra.mxu0 0.0
      %3164 = vmatprep.subr.mxu0 0.0
      %3165 = vmatpush1.msra.mxu0 0.0
      %3166 = vmatprep.subr.mxu0 0.0
      %3167 = vmatpush1.msra.mxu0 0.0
      %3168 = vmatprep.subr.mxu0 0.0
      %3169 = vmatpush1.msra.mxu0 0.0
      %3170 = vmatprep.subr.mxu0 0.0
      %3171 = vmatpush1.msra.mxu0 0.0
      %3172 = vmatprep.subr.mxu0 0.0
      %3173 = vmatpush1.msra.mxu0 0.0
      %3174 = vmatprep.subr.mxu0 0.0
      %3175 = vmatpush1.msra.mxu0 0.0
      %3176 = vmatprep.subr.mxu0 0.0
      %3177 = vmatpush1.msra.mxu0 0.0
      %3178 = vmatprep.subr.mxu0 0.0
      %3179 = vmatpush1.msra.mxu0 0.0
      %3180 = vmatprep.subr.mxu0 0.0
      %3181 = vmatpush1.msra.mxu0 0.0
      %3182 = vmatprep.subr.mxu0 0.0
      %3183 = vmatpush1.msra.mxu0 0.0
      %3184 = vmatprep.subr.mxu0 0.0
      %3185 = vmatpush1.msra.mxu0 0.0
      %3186 = vmatprep.subr.mxu0 0.0
      %3187 = vmatpush1.msra.mxu0 0.0
      %3188 = vmatprep.subr.mxu0 0.0
      %3189 = vmatpush1.msra.mxu0 0.0
      %3190 = vmatprep.subr.mxu0 0.0
      %3191 = vmatpush1.msra.mxu0 0.0
      %3192 = vmatprep.subr.mxu0 0.0
      %3193 = vmatpush1.msra.mxu0 0.0
      %3194 = vmatprep.subr.mxu0 0.0
      %3195 = vmatpush1.msra.mxu0 0.0
      %3196 = vmatprep.subr.mxu0 0.0
      %3197 = vmatpush1.msra.mxu0 0.0
      %3198 = vmatprep.subr.mxu0 0.0
      %3199 = vmatpush1.msra.mxu0 0.0
      %3200 = vmatprep.subr.mxu0 0.0
      %3201 = vmatpush1.msra.mxu0 0.0
      %3202 = vmatprep.subr.mxu0 0.0
      %3203 = vmatpush1.msra.mxu0 0.0
      %3204 = vmatprep.subr.mxu0 0.0
      %3205 = vmatpush1.msra.mxu0 0.0
      %3206 = vmatprep.mubr.f32.mxu0 0.0
      %3207 = vmatmul.mubr.f32.gmra.mrb[0].mxu0 %v3047
      %v3208 = vpop.f32.mrb[0].mxu0
      %v3209 = vadd.f32 %v3045, %v3208
      %v3210 = vpop.f32.mrb[0].mxu0
      %3211 = vmatprep.mubr.f32.mxu0 0.0
      %3212 = vmatmul.mubr.f32.gmra.mrb[0].mxu0 %v3050
      %v3213 = vpop.f32.mrb[0].mxu0
      %v3214 = vadd.f32 %v3045, %v3213
      %v3215 = vpop.f32.mrb[0].mxu0
      %3216 = vmatprep.mubr.f32.mxu0 0.0
      %3217 = vmatmul.mubr.f32.gmra.mrb[0].mxu0 %v3053
      %v3218 = vpop.f32.mrb[0].mxu0
      %v3219 = vadd.f32 %v3045, %v3218
      %v3220 = vpop.f32.mrb[0].mxu0
      %3221 = vmatprep.mubr.f32.mxu0 0.0
      %3222 = vmatmul.mubr.f32.gmra.mrb[0].mxu0 %v3056
      %v3223 = vpop.f32.mrb[0].mxu0
      %v3224 = vadd.f32 %v3045, %v3223
      %v3225 = vpop.f32.mrb[0].mxu0
      %3226 = vmatprep.mubr.f32.mxu0 0.0
      %3227 = vmatmul.mubr.f32.gmra.mrb[0].mxu0 %v3059
      %v3228 = vpop.f32.mrb[0].mxu0
      %v3229 = vadd.f32 %v3045, %v3228
      %v3230 = vpop.f32.mrb[0].mxu0
      %3231 = vmatprep.mubr.f32.mxu0 0.0
      %3232 = vmatmul.mubr.f32.gmra.mrb[0].mxu0 %v3062
      %v3233 = vpop.f32.mrb[0].mxu0
      %v3234 = vadd.f32 %v3045, %v3233
      %v3235 = vpop.f32.mrb[0].mxu0
      %3236 = vmatprep.mubr.f32.mxu0 0.0
      %3237 = vmatmul.mubr.f32.gmra.mrb[0].mxu0 %v3065
      %v3238 = vpop.f32.mrb[0].mxu0
      %v3239 = vadd.f32 %v3045, %v3238
      %v3240 = vpop.f32.mrb[0].mxu0
      %3241 = vmatprep.mubr.f32.mxu0 0.0
      %3242 = vmatmul.mubr.f32.gmra.mrb[0].mxu0 %v3068
      %v3243 = vpop.f32.mrb[0].mxu0
      %v3244 = vadd.f32 %v3045, %v3243
      %v3245 = vpop.f32.mrb[0].mxu0
      %3246 = vmatprep.mubr.f32.mxu0 0.0
      %3247 = vmatmul.mubr.f32.gmra.mrb[0].mxu0 %v3071
      %v3248 = vpop.f32.mrb[0].mxu0
      %v3249 = vadd.f32 %v3045, %v3248
      %v3250 = vpop.f32.mrb[0].mxu0
      %3251 = vmatprep.mubr.f32.mxu0 0.0
      %3252 = vmatmul.mubr.f32.gmra.mrb[0].mxu0 %v3074
      %v3253 = vpop.f32.mrb[0].mxu0
      %v3254 = vadd.f32 %v3045, %v3253
      %v3255 = vpop.f32.mrb[0].mxu0
      %3256 = vmatprep.mubr.f32.mxu0 0.0
      %3257 = vmatmul.mubr.f32.gmra.mrb[0].mxu0 %v3077
      %v3258 = vpop.f32.mrb[0].mxu0
      %v3259 = vadd.f32 %v3045, %v3258
      %v3260 = vpop.f32.mrb[0].mxu0
      %3261 = vmatprep.mubr.f32.mxu0 0.0
      %3262 = vmatmul.mubr.f32.gmra.mrb[0].mxu0 %v3080
      %v3263 = vpop.f32.mrb[0].mxu0
      %v3264 = vadd.f32 %v3045, %v3263
      %v3265 = vpop.f32.mrb[0].mxu0
      %3266 = vmatprep.mubr.f32.mxu0 0.0
      %3267 = vmatmul.mubr.f32.gmra.mrb[0].mxu0 %v3083
      %v3268 = vpop.f32.mrb[0].mxu0
      %v3269 = vadd.f32 %v3045, %v3268
      %v3270 = vpop.f32.mrb[0].mxu0
      %3271 = vmatprep.mubr.f32.mxu0 0.0
      %3272 = vmatmul.mubr.f32.gmra.mrb[0].mxu0 %v3086
      %v3273 = vpop.f32.mrb[0].mxu0
      %v3274 = vadd.f32 %v3045, %v3273
      %v3275 = vpop.f32.mrb[0].mxu0
      %3276 = vmatprep.mubr.f32.mxu0 0.0
      %3277 = vmatmul.mubr.f32.gmra.mrb[0].mxu0 %v3089
      %v3278 = vpop.f32.mrb[0].mxu0
      %v3279 = vadd.f32 %v3045, %v3278
      %v3280 = vpop.f32.mrb[0].mxu0
      %3281 = vmatprep.mubr.f32.mxu0 0.0
      %3282 = vmatmul.mubr.f32.gmra.mrb[0].mxu0 %v3092
      %v3283 = vpop.f32.mrb[0].mxu0
      %v3284 = vadd.f32 %v3045, %v3283
      %v3285 = vpop.f32.mrb[0].mxu0
      %3286 = vmatprep.mubr.f32.mxu0 0.0
      %3287 = vmatmul.mubr.f32.gmra.mrb[0].mxu0 %v3095
      %v3288 = vpop.f32.mrb[0].mxu0
      %v3289 = vadd.f32 %v3045, %v3288
      %v3290 = vpop.f32.mrb[0].mxu0
      %3291 = vmatprep.mubr.f32.mxu0 0.0
      %3292 = vmatmul.mubr.f32.gmra.mrb[0].mxu0 %v3098
      %v3293 = vpop.f32.mrb[0].mxu0
      %v3294 = vadd.f32 %v3045, %v3293
      %v3295 = vpop.f32.mrb[0].mxu0
      %3296 = vmatprep.mubr.f32.mxu0 0.0
      %3297 = vmatmul.mubr.f32.gmra.mrb[0].mxu0 %v3101
      %v3298 = vpop.f32.mrb[0].mxu0
      %v3299 = vadd.f32 %v3045, %v3298
      %v3300 = vpop.f32.mrb[0].mxu0
      %3301 = vmatprep.mubr.f32.mxu0 0.0
      %3302 = vmatmul.mubr.f32.gmra.mrb[0].mxu0 %v3104
      %v3303 = vpop.f32.mrb[0].mxu0
      %v3304 = vadd.f32 %v3045, %v3303
      %v3305 = vpop.f32.mrb[0].mxu0
      %3306 = vmatprep.mubr.f32.mxu0 0.0
      %3307 = vmatmul.mubr.f32.gmra.mrb[0].mxu0 %v3107
      %v3308 = vpop.f32.mrb[0].mxu0
      %v3309 = vadd.f32 %v3045, %v3308
      %v3310 = vpop.f32.mrb[0].mxu0
      %3311 = vmatprep.mubr.f32.mxu0 0.0
      %3312 = vmatmul.mubr.f32.gmra.mrb[0].mxu0 %v3110
      %v3313 = vpop.f32.mrb[0].mxu0
      %v3314 = vadd.f32 %v3045, %v3313
      %v3315 = vpop.f32.mrb[0].mxu0
      %3316 = vmatprep.mubr.f32.mxu0 0.0
      %3317 = vmatmul.mubr.f32.gmra.mrb[0].mxu0 %v3113
      %v3318 = vpop.f32.mrb[0].mxu0
      %v3319 = vadd.f32 %v3045, %v3318
      %v3320 = vpop.f32.mrb[0].mxu0
      %3321 = vmatprep.mubr.f32.mxu0 0.0
      %3322 = vmatmul.mubr.f32.gmra.mrb[0].mxu0 %v3116
      %v3323 = vpop.f32.mrb[0].mxu0
      %v3324 = vadd.f32 %v3045, %v3323
      %v3325 = vpop.f32.mrb[0].mxu0
      %3326 = vmatprep.mubr.f32.mxu0 0.0
      %3327 = vmatmul.mubr.f32.gmra.mrb[0].mxu0 %v3119
      %v3328 = vpop.f32.mrb[0].mxu0
      %v3329 = vadd.f32 %v3045, %v3328
      %v3330 = vpop.f32.mrb[0].mxu0
      %3331 = vmatprep.mubr.f32.mxu0 0.0
      %3332 = vmatmul.mubr.f32.gmra.mrb[0].mxu0 %v3122
      %v3333 = vpop.f32.mrb[0].mxu0
      %v3334 = vadd.f32 %v3045, %v3333
      %v3335 = vpop.f32.mrb[0].mxu0
      %3336 = vmatprep.mubr.f32.mxu0 0.0
      %3337 = vmatmul.mubr.f32.gmra.mrb[0].mxu0 %v3125
      %v3338 = vpop.f32.mrb[0].mxu0
      %v3339 = vadd.f32 %v3045, %v3338
      %v3340 = vpop.f32.mrb[0].mxu0
      %3341 = vmatprep.mubr.f32.mxu0 0.0
      %3342 = vmatmul.mubr.f32.gmra.mrb[0].mxu0 %v3128
      %v3343 = vpop.f32.mrb[0].mxu0
      %v3344 = vadd.f32 %v3045, %v3343
      %v3345 = vpop.f32.mrb[0].mxu0
      %3346 = vmatprep.mubr.f32.mxu0 0.0
      %3347 = vmatmul.mubr.f32.gmra.mrb[0].mxu0 %v3131
      %v3348 = vpop.f32.mrb[0].mxu0
      %v3349 = vadd.f32 %v3045, %v3348
      %v3350 = vpop.f32.mrb[0].mxu0
      %3351 = vmatprep.mubr.f32.mxu0 0.0
      %3352 = vmatmul.mubr.f32.gmra.mrb[0].mxu0 %v3134
      %v3353 = vpop.f32.mrb[0].mxu0
      %v3354 = vadd.f32 %v3045, %v3353
      %v3355 = vpop.f32.mrb[0].mxu0
      %3356 = vmatprep.mubr.f32.mxu0 0.0
      %3357 = vmatmul.mubr.f32.gmra.mrb[0].mxu0 %v3137
      %v3358 = vpop.f32.mrb[0].mxu0
      %v3359 = vadd.f32 %v3045, %v3358
      %v3360 = vpop.f32.mrb[0].mxu0
      %3361 = vmatprep.mubr.f32.mxu0 0.0
      %3362 = vmatmul.mubr.f32.gmra.mrb[0].mxu0 %v3140
      %v3363 = vpop.f32.mrb[0].mxu0
      %v3364 = vadd.f32 %v3045, %v3363
      %v3365 = vpop.f32.mrb[0].mxu0
      %3366 = vdwg.mxu0
      %v3367 = vsel %vm370, %v3209, 0.0
      %3368 = vadd.xlane.f32.xlu0 %v3367
      %v3369 = vpop.xlane.xlu0 %3368
      %v3370 = vsel %vm370, %v3214, 0.0
      %3371 = vadd.xlane.f32.xlu0 %v3370
      %v3372 = vpop.xlane.xlu0 %3371
      %v3373 = vsel %vm370, %v3219, 0.0
      %3374 = vadd.xlane.f32.xlu0 %v3373
      %v3375 = vpop.xlane.xlu0 %3374
      %v3376 = vsel %vm370, %v3224, 0.0
      %3377 = vadd.xlane.f32.xlu0 %v3376
      %v3378 = vpop.xlane.xlu0 %3377
      %v3379 = vsel %vm370, %v3229, 0.0
      %3380 = vadd.xlane.f32.xlu0 %v3379
      %v3381 = vpop.xlane.xlu0 %3380
      %v3382 = vsel %vm370, %v3234, 0.0
      %3383 = vadd.xlane.f32.xlu0 %v3382
      %v3384 = vpop.xlane.xlu0 %3383
      %v3385 = vsel %vm370, %v3239, 0.0
      %3386 = vadd.xlane.f32.xlu0 %v3385
      %v3387 = vpop.xlane.xlu0 %3386
      %v3388 = vsel %vm370, %v3244, 0.0
      %3389 = vadd.xlane.f32.xlu0 %v3388
      %v3390 = vpop.xlane.xlu0 %3389
      %v3391 = vsel %vm370, %v3249, 0.0
      %3392 = vadd.xlane.f32.xlu0 %v3391
      %v3393 = vpop.xlane.xlu0 %3392
      %v3394 = vsel %vm370, %v3254, 0.0
      %3395 = vadd.xlane.f32.xlu0 %v3394
      %v3396 = vpop.xlane.xlu0 %3395
      %v3397 = vsel %vm370, %v3259, 0.0
      %3398 = vadd.xlane.f32.xlu0 %v3397
      %v3399 = vpop.xlane.xlu0 %3398
      %v3400 = vsel %vm370, %v3264, 0.0
      %3401 = vadd.xlane.f32.xlu0 %v3400
      %v3402 = vpop.xlane.xlu0 %3401
      %v3403 = vsel %vm370, %v3269, 0.0
      %3404 = vadd.xlane.f32.xlu0 %v3403
      %v3405 = vpop.xlane.xlu0 %3404
      %v3406 = vsel %vm370, %v3274, 0.0
      %3407 = vadd.xlane.f32.xlu0 %v3406
      %v3408 = vpop.xlane.xlu0 %3407
      %v3409 = vsel %vm370, %v3279, 0.0
      %3410 = vadd.xlane.f32.xlu0 %v3409
      %v3411 = vpop.xlane.xlu0 %3410
      %v3412 = vsel %vm370, %v3284, 0.0
      %3413 = vadd.xlane.f32.xlu0 %v3412
      %v3414 = vpop.xlane.xlu0 %3413
      %v3415 = vsel %vm370, %v3289, 0.0
      %3416 = vadd.xlane.f32.xlu0 %v3415
      %v3417 = vpop.xlane.xlu0 %3416
      %v3418 = vsel %vm370, %v3294, 0.0
      %3419 = vadd.xlane.f32.xlu0 %v3418
      %v3420 = vpop.xlane.xlu0 %3419
      %v3421 = vsel %vm370, %v3299, 0.0
      %3422 = vadd.xlane.f32.xlu0 %v3421
      %v3423 = vpop.xlane.xlu0 %3422
      %v3424 = vsel %vm370, %v3304, 0.0
      %3425 = vadd.xlane.f32.xlu0 %v3424
      %v3426 = vpop.xlane.xlu0 %3425
      %v3427 = vsel %vm370, %v3309, 0.0
      %3428 = vadd.xlane.f32.xlu0 %v3427
      %v3429 = vpop.xlane.xlu0 %3428
      %v3430 = vsel %vm370, %v3314, 0.0
      %3431 = vadd.xlane.f32.xlu0 %v3430
      %v3432 = vpop.xlane.xlu0 %3431
      %v3433 = vsel %vm370, %v3319, 0.0
      %3434 = vadd.xlane.f32.xlu0 %v3433
      %v3435 = vpop.xlane.xlu0 %3434
      %v3436 = vsel %vm370, %v3324, 0.0
      %3437 = vadd.xlane.f32.xlu0 %v3436
      %v3438 = vpop.xlane.xlu0 %3437
      %v3439 = vsel %vm370, %v3329, 0.0
      %3440 = vadd.xlane.f32.xlu0 %v3439
      %v3441 = vpop.xlane.xlu0 %3440
      %v3442 = vsel %vm370, %v3334, 0.0
      %3443 = vadd.xlane.f32.xlu0 %v3442
      %v3444 = vpop.xlane.xlu0 %3443
      %v3445 = vsel %vm370, %v3339, 0.0
      %3446 = vadd.xlane.f32.xlu0 %v3445
      %v3447 = vpop.xlane.xlu0 %3446
      %v3448 = vsel %vm370, %v3344, 0.0
      %3449 = vadd.xlane.f32.xlu0 %v3448
      %v3450 = vpop.xlane.xlu0 %3449
      %v3451 = vsel %vm370, %v3349, 0.0
      %3452 = vadd.xlane.f32.xlu0 %v3451
      %v3453 = vpop.xlane.xlu0 %3452
      %v3454 = vsel %vm370, %v3354, 0.0
      %3455 = vadd.xlane.f32.xlu0 %v3454
      %v3456 = vpop.xlane.xlu0 %3455
      %v3457 = vsel %vm370, %v3359, 0.0
      %3458 = vadd.xlane.f32.xlu0 %v3457
      %v3459 = vpop.xlane.xlu0 %3458
      %v3460 = vsel %vm370, %v3364, 0.0
      %3461 = vadd.xlane.f32.xlu0 %v3460
      %v3462 = vpop.xlane.xlu0 %3461
      %v3463 = vrcp.pop 32.0
      %v3464 = vmul.f32 %v3369, %v3463
      %v3465 = vmul.f32 %v3372, %v3463
      %v3466 = vmul.f32 %v3375, %v3463
      %v3467 = vmul.f32 %v3378, %v3463
      %v3468 = vmul.f32 %v3381, %v3463
      %v3469 = vmul.f32 %v3384, %v3463
      %v3470 = vmul.f32 %v3387, %v3463
      %v3471 = vmul.f32 %v3390, %v3463
      %v3472 = vmul.f32 %v3393, %v3463
      %v3473 = vmul.f32 %v3396, %v3463
      %v3474 = vmul.f32 %v3399, %v3463
      %v3475 = vmul.f32 %v3402, %v3463
      %v3476 = vmul.f32 %v3405, %v3463
      %v3477 = vmul.f32 %v3408, %v3463
      %v3478 = vmul.f32 %v3411, %v3463
      %v3479 = vmul.f32 %v3414, %v3463
      %v3480 = vmul.f32 %v3417, %v3463
      %v3481 = vmul.f32 %v3420, %v3463
      %v3482 = vmul.f32 %v3423, %v3463
      %v3483 = vmul.f32 %v3426, %v3463
      %v3484 = vmul.f32 %v3429, %v3463
      %v3485 = vmul.f32 %v3432, %v3463
      %v3486 = vmul.f32 %v3435, %v3463
      %v3487 = vmul.f32 %v3438, %v3463
      %v3488 = vmul.f32 %v3441, %v3463
      %v3489 = vmul.f32 %v3444, %v3463
      %v3490 = vmul.f32 %v3447, %v3463
      %v3491 = vmul.f32 %v3450, %v3463
      %v3492 = vmul.f32 %v3453, %v3463
      %v3493 = vmul.f32 %v3456, %v3463
      %v3494 = vmul.f32 %v3459, %v3463
      %v3495 = vmul.f32 %v3462, %v3463
      %v3496 = vsub.f32 %v3209, %v3464
      %v3497 = vsub.f32 %v3214, %v3465
      %v3498 = vsub.f32 %v3219, %v3466
      %v3499 = vsub.f32 %v3224, %v3467
      %v3500 = vsub.f32 %v3229, %v3468
      %v3501 = vsub.f32 %v3234, %v3469
      %v3502 = vsub.f32 %v3239, %v3470
      %v3503 = vsub.f32 %v3244, %v3471
      %v3504 = vsub.f32 %v3249, %v3472
      %v3505 = vsub.f32 %v3254, %v3473
      %v3506 = vsub.f32 %v3259, %v3474
      %v3507 = vsub.f32 %v3264, %v3475
      %v3508 = vsub.f32 %v3269, %v3476
      %v3509 = vsub.f32 %v3274, %v3477
      %v3510 = vsub.f32 %v3279, %v3478
      %v3511 = vsub.f32 %v3284, %v3479
      %v3512 = vsub.f32 %v3289, %v3480
      %v3513 = vsub.f32 %v3294, %v3481
      %v3514 = vsub.f32 %v3299, %v3482
      %v3515 = vsub.f32 %v3304, %v3483
      %v3516 = vsub.f32 %v3309, %v3484
      %v3517 = vsub.f32 %v3314, %v3485
      %v3518 = vsub.f32 %v3319, %v3486
      %v3519 = vsub.f32 %v3324, %v3487
      %v3520 = vsub.f32 %v3329, %v3488
      %v3521 = vsub.f32 %v3334, %v3489
      %v3522 = vsub.f32 %v3339, %v3490
      %v3523 = vsub.f32 %v3344, %v3491
      %v3524 = vsub.f32 %v3349, %v3492
      %v3525 = vsub.f32 %v3354, %v3493
      %v3526 = vsub.f32 %v3359, %v3494
      %v3527 = vsub.f32 %v3364, %v3495
      %v3528 = vmul.f32 %v3496, %v3496
      %v3529 = vmul.f32 %v3497, %v3497
      %v3530 = vmul.f32 %v3498, %v3498
      %v3531 = vmul.f32 %v3499, %v3499
      %v3532 = vmul.f32 %v3500, %v3500
      %v3533 = vmul.f32 %v3501, %v3501
      %v3534 = vmul.f32 %v3502, %v3502
      %v3535 = vmul.f32 %v3503, %v3503
      %v3536 = vmul.f32 %v3504, %v3504
      %v3537 = vmul.f32 %v3505, %v3505
      %v3538 = vmul.f32 %v3506, %v3506
      %v3539 = vmul.f32 %v3507, %v3507
      %v3540 = vmul.f32 %v3508, %v3508
      %v3541 = vmul.f32 %v3509, %v3509
      %v3542 = vmul.f32 %v3510, %v3510
      %v3543 = vmul.f32 %v3511, %v3511
      %v3544 = vmul.f32 %v3512, %v3512
      %v3545 = vmul.f32 %v3513, %v3513
      %v3546 = vmul.f32 %v3514, %v3514
      %v3547 = vmul.f32 %v3515, %v3515
      %v3548 = vmul.f32 %v3516, %v3516
      %v3549 = vmul.f32 %v3517, %v3517
      %v3550 = vmul.f32 %v3518, %v3518
      %v3551 = vmul.f32 %v3519, %v3519
      %v3552 = vmul.f32 %v3520, %v3520
      %v3553 = vmul.f32 %v3521, %v3521
      %v3554 = vmul.f32 %v3522, %v3522
      %v3555 = vmul.f32 %v3523, %v3523
      %v3556 = vmul.f32 %v3524, %v3524
      %v3557 = vmul.f32 %v3525, %v3525
      %v3558 = vmul.f32 %v3526, %v3526
      %v3559 = vmul.f32 %v3527, %v3527
      %v3560 = vsel %vm370, %v3528, 0.0
      %3561 = vadd.xlane.f32.xlu0 %v3560
      %v3562 = vpop.xlane.xlu0 %3561
      %v3563 = vsel %vm370, %v3529, 0.0
      %3564 = vadd.xlane.f32.xlu0 %v3563
      %v3565 = vpop.xlane.xlu0 %3564
      %v3566 = vsel %vm370, %v3530, 0.0
      %3567 = vadd.xlane.f32.xlu0 %v3566
      %v3568 = vpop.xlane.xlu0 %3567
      %v3569 = vsel %vm370, %v3531, 0.0
      %3570 = vadd.xlane.f32.xlu0 %v3569
      %v3571 = vpop.xlane.xlu0 %3570
      %v3572 = vsel %vm370, %v3532, 0.0
      %3573 = vadd.xlane.f32.xlu0 %v3572
      %v3574 = vpop.xlane.xlu0 %3573
      %v3575 = vsel %vm370, %v3533, 0.0
      %3576 = vadd.xlane.f32.xlu0 %v3575
      %v3577 = vpop.xlane.xlu0 %3576
      %v3578 = vsel %vm370, %v3534, 0.0
      %3579 = vadd.xlane.f32.xlu0 %v3578
      %v3580 = vpop.xlane.xlu0 %3579
      %v3581 = vsel %vm370, %v3535, 0.0
      %3582 = vadd.xlane.f32.xlu0 %v3581
      %v3583 = vpop.xlane.xlu0 %3582
      %v3584 = vsel %vm370, %v3536, 0.0
      %3585 = vadd.xlane.f32.xlu0 %v3584
      %v3586 = vpop.xlane.xlu0 %3585
      %v3587 = vsel %vm370, %v3537, 0.0
      %3588 = vadd.xlane.f32.xlu0 %v3587
      %v3589 = vpop.xlane.xlu0 %3588
      %v3590 = vsel %vm370, %v3538, 0.0
      %3591 = vadd.xlane.f32.xlu0 %v3590
      %v3592 = vpop.xlane.xlu0 %3591
      %v3593 = vsel %vm370, %v3539, 0.0
      %3594 = vadd.xlane.f32.xlu0 %v3593
      %v3595 = vpop.xlane.xlu0 %3594
      %v3596 = vsel %vm370, %v3540, 0.0
      %3597 = vadd.xlane.f32.xlu0 %v3596
      %v3598 = vpop.xlane.xlu0 %3597
      %v3599 = vsel %vm370, %v3541, 0.0
      %3600 = vadd.xlane.f32.xlu0 %v3599
      %v3601 = vpop.xlane.xlu0 %3600
      %v3602 = vsel %vm370, %v3542, 0.0
      %3603 = vadd.xlane.f32.xlu0 %v3602
      %v3604 = vpop.xlane.xlu0 %3603
      %v3605 = vsel %vm370, %v3543, 0.0
      %3606 = vadd.xlane.f32.xlu0 %v3605
      %v3607 = vpop.xlane.xlu0 %3606
      %v3608 = vsel %vm370, %v3544, 0.0
      %3609 = vadd.xlane.f32.xlu0 %v3608
      %v3610 = vpop.xlane.xlu0 %3609
      %v3611 = vsel %vm370, %v3545, 0.0
      %3612 = vadd.xlane.f32.xlu0 %v3611
      %v3613 = vpop.xlane.xlu0 %3612
      %v3614 = vsel %vm370, %v3546, 0.0
      %3615 = vadd.xlane.f32.xlu0 %v3614
      %v3616 = vpop.xlane.xlu0 %3615
      %v3617 = vsel %vm370, %v3547, 0.0
      %3618 = vadd.xlane.f32.xlu0 %v3617
      %v3619 = vpop.xlane.xlu0 %3618
      %v3620 = vsel %vm370, %v3548, 0.0
      %3621 = vadd.xlane.f32.xlu0 %v3620
      %v3622 = vpop.xlane.xlu0 %3621
      %v3623 = vsel %vm370, %v3549, 0.0
      %3624 = vadd.xlane.f32.xlu0 %v3623
      %v3625 = vpop.xlane.xlu0 %3624
      %v3626 = vsel %vm370, %v3550, 0.0
      %3627 = vadd.xlane.f32.xlu0 %v3626
      %v3628 = vpop.xlane.xlu0 %3627
      %v3629 = vsel %vm370, %v3551, 0.0
      %3630 = vadd.xlane.f32.xlu0 %v3629
      %v3631 = vpop.xlane.xlu0 %3630
      %v3632 = vsel %vm370, %v3552, 0.0
      %3633 = vadd.xlane.f32.xlu0 %v3632
      %v3634 = vpop.xlane.xlu0 %3633
      %v3635 = vsel %vm370, %v3553, 0.0
      %3636 = vadd.xlane.f32.xlu0 %v3635
      %v3637 = vpop.xlane.xlu0 %3636
      %v3638 = vsel %vm370, %v3554, 0.0
      %3639 = vadd.xlane.f32.xlu0 %v3638
      %v3640 = vpop.xlane.xlu0 %3639
      %v3641 = vsel %vm370, %v3555, 0.0
      %3642 = vadd.xlane.f32.xlu0 %v3641
      %v3643 = vpop.xlane.xlu0 %3642
      %v3644 = vsel %vm370, %v3556, 0.0
      %3645 = vadd.xlane.f32.xlu0 %v3644
      %v3646 = vpop.xlane.xlu0 %3645
      %v3647 = vsel %vm370, %v3557, 0.0
      %3648 = vadd.xlane.f32.xlu0 %v3647
      %v3649 = vpop.xlane.xlu0 %3648
      %v3650 = vsel %vm370, %v3558, 0.0
      %3651 = vadd.xlane.f32.xlu0 %v3650
      %v3652 = vpop.xlane.xlu0 %3651
      %v3653 = vsel %vm370, %v3559, 0.0
      %3654 = vadd.xlane.f32.xlu0 %v3653
      %v3655 = vpop.xlane.xlu0 %3654
      %v3656 = vrcp.pop 31.0
      %v3657 = vmul.f32 %v3562, %v3656
      %v3658 = vmul.f32 %v3565, %v3656
      %v3659 = vmul.f32 %v3568, %v3656
      %v3660 = vmul.f32 %v3571, %v3656
      %v3661 = vmul.f32 %v3574, %v3656
      %v3662 = vmul.f32 %v3577, %v3656
      %v3663 = vmul.f32 %v3580, %v3656
      %v3664 = vmul.f32 %v3583, %v3656
      %v3665 = vmul.f32 %v3586, %v3656
      %v3666 = vmul.f32 %v3589, %v3656
      %v3667 = vmul.f32 %v3592, %v3656
      %v3668 = vmul.f32 %v3595, %v3656
      %v3669 = vmul.f32 %v3598, %v3656
      %v3670 = vmul.f32 %v3601, %v3656
      %v3671 = vmul.f32 %v3604, %v3656
      %v3672 = vmul.f32 %v3607, %v3656
      %v3673 = vmul.f32 %v3610, %v3656
      %v3674 = vmul.f32 %v3613, %v3656
      %v3675 = vmul.f32 %v3616, %v3656
      %v3676 = vmul.f32 %v3619, %v3656
      %v3677 = vmul.f32 %v3622, %v3656
      %v3678 = vmul.f32 %v3625, %v3656
      %v3679 = vmul.f32 %v3628, %v3656
      %v3680 = vmul.f32 %v3631, %v3656
      %v3681 = vmul.f32 %v3634, %v3656
      %v3682 = vmul.f32 %v3637, %v3656
      %v3683 = vmul.f32 %v3640, %v3656
      %v3684 = vmul.f32 %v3643, %v3656
      %v3685 = vmul.f32 %v3646, %v3656
      %v3686 = vmul.f32 %v3649, %v3656
      %v3687 = vmul.f32 %v3652, %v3656
      %v3688 = vmul.f32 %v3655, %v3656
      %v3689 = vrsqrt.pop %v3657
      %v3690 = vmul.f32 %v3657, %v3689
      %vm3691 = vcmp.eq.f32.partialorder %v3657, inf
      %v3692 = vsel %vm3691, %v3657, %v3690
      %vm3693 = vcmp.eq.f32.partialorder %v3657, 0.0
      %v3694 = vand.u32 %v3657, 2147483648
      %v3695 = vsel %vm3693, %v3694, %v3692
      %v3696 = vrsqrt.pop %v3658
      %v3697 = vmul.f32 %v3658, %v3696
      %vm3698 = vcmp.eq.f32.partialorder %v3658, inf
      %v3699 = vsel %vm3698, %v3658, %v3697
      %vm3700 = vcmp.eq.f32.partialorder %v3658, 0.0
      %v3701 = vand.u32 %v3658, 2147483648
      %v3702 = vsel %vm3700, %v3701, %v3699
      %v3703 = vrsqrt.pop %v3659
      %v3704 = vmul.f32 %v3659, %v3703
      %vm3705 = vcmp.eq.f32.partialorder %v3659, inf
      %v3706 = vsel %vm3705, %v3659, %v3704
      %vm3707 = vcmp.eq.f32.partialorder %v3659, 0.0
      %v3708 = vand.u32 %v3659, 2147483648
      %v3709 = vsel %vm3707, %v3708, %v3706
      %v3710 = vrsqrt.pop %v3660
      %v3711 = vmul.f32 %v3660, %v3710
      %vm3712 = vcmp.eq.f32.partialorder %v3660, inf
      %v3713 = vsel %vm3712, %v3660, %v3711
      %vm3714 = vcmp.eq.f32.partialorder %v3660, 0.0
      %v3715 = vand.u32 %v3660, 2147483648
      %v3716 = vsel %vm3714, %v3715, %v3713
      %v3717 = vrsqrt.pop %v3661
      %v3718 = vmul.f32 %v3661, %v3717
      %vm3719 = vcmp.eq.f32.partialorder %v3661, inf
      %v3720 = vsel %vm3719, %v3661, %v3718
      %vm3721 = vcmp.eq.f32.partialorder %v3661, 0.0
      %v3722 = vand.u32 %v3661, 2147483648
      %v3723 = vsel %vm3721, %v3722, %v3720
      %v3724 = vrsqrt.pop %v3662
      %v3725 = vmul.f32 %v3662, %v3724
      %vm3726 = vcmp.eq.f32.partialorder %v3662, inf
      %v3727 = vsel %vm3726, %v3662, %v3725
      %vm3728 = vcmp.eq.f32.partialorder %v3662, 0.0
      %v3729 = vand.u32 %v3662, 2147483648
      %v3730 = vsel %vm3728, %v3729, %v3727
      %v3731 = vrsqrt.pop %v3663
      %v3732 = vmul.f32 %v3663, %v3731
      %vm3733 = vcmp.eq.f32.partialorder %v3663, inf
      %v3734 = vsel %vm3733, %v3663, %v3732
      %vm3735 = vcmp.eq.f32.partialorder %v3663, 0.0
      %v3736 = vand.u32 %v3663, 2147483648
      %v3737 = vsel %vm3735, %v3736, %v3734
      %v3738 = vrsqrt.pop %v3664
      %v3739 = vmul.f32 %v3664, %v3738
      %vm3740 = vcmp.eq.f32.partialorder %v3664, inf
      %v3741 = vsel %vm3740, %v3664, %v3739
      %vm3742 = vcmp.eq.f32.partialorder %v3664, 0.0
      %v3743 = vand.u32 %v3664, 2147483648
      %v3744 = vsel %vm3742, %v3743, %v3741
      %v3745 = vrsqrt.pop %v3665
      %v3746 = vmul.f32 %v3665, %v3745
      %vm3747 = vcmp.eq.f32.partialorder %v3665, inf
      %v3748 = vsel %vm3747, %v3665, %v3746
      %vm3749 = vcmp.eq.f32.partialorder %v3665, 0.0
      %v3750 = vand.u32 %v3665, 2147483648
      %v3751 = vsel %vm3749, %v3750, %v3748
      %v3752 = vrsqrt.pop %v3666
      %v3753 = vmul.f32 %v3666, %v3752
      %vm3754 = vcmp.eq.f32.partialorder %v3666, inf
      %v3755 = vsel %vm3754, %v3666, %v3753
      %vm3756 = vcmp.eq.f32.partialorder %v3666, 0.0
      %v3757 = vand.u32 %v3666, 2147483648
      %v3758 = vsel %vm3756, %v3757, %v3755
      %v3759 = vrsqrt.pop %v3667
      %v3760 = vmul.f32 %v3667, %v3759
      %vm3761 = vcmp.eq.f32.partialorder %v3667, inf
      %v3762 = vsel %vm3761, %v3667, %v3760
      %vm3763 = vcmp.eq.f32.partialorder %v3667, 0.0
      %v3764 = vand.u32 %v3667, 2147483648
      %v3765 = vsel %vm3763, %v3764, %v3762
      %v3766 = vrsqrt.pop %v3668
      %v3767 = vmul.f32 %v3668, %v3766
      %vm3768 = vcmp.eq.f32.partialorder %v3668, inf
      %v3769 = vsel %vm3768, %v3668, %v3767
      %vm3770 = vcmp.eq.f32.partialorder %v3668, 0.0
      %v3771 = vand.u32 %v3668, 2147483648
      %v3772 = vsel %vm3770, %v3771, %v3769
      %v3773 = vrsqrt.pop %v3669
      %v3774 = vmul.f32 %v3669, %v3773
      %vm3775 = vcmp.eq.f32.partialorder %v3669, inf
      %v3776 = vsel %vm3775, %v3669, %v3774
      %vm3777 = vcmp.eq.f32.partialorder %v3669, 0.0
      %v3778 = vand.u32 %v3669, 2147483648
      %v3779 = vsel %vm3777, %v3778, %v3776
      %v3780 = vrsqrt.pop %v3670
      %v3781 = vmul.f32 %v3670, %v3780
      %vm3782 = vcmp.eq.f32.partialorder %v3670, inf
      %v3783 = vsel %vm3782, %v3670, %v3781
      %vm3784 = vcmp.eq.f32.partialorder %v3670, 0.0
      %v3785 = vand.u32 %v3670, 2147483648
      %v3786 = vsel %vm3784, %v3785, %v3783
      %v3787 = vrsqrt.pop %v3671
      %v3788 = vmul.f32 %v3671, %v3787
      %vm3789 = vcmp.eq.f32.partialorder %v3671, inf
      %v3790 = vsel %vm3789, %v3671, %v3788
      %vm3791 = vcmp.eq.f32.partialorder %v3671, 0.0
      %v3792 = vand.u32 %v3671, 2147483648
      %v3793 = vsel %vm3791, %v3792, %v3790
      %v3794 = vrsqrt.pop %v3672
      %v3795 = vmul.f32 %v3672, %v3794
      %vm3796 = vcmp.eq.f32.partialorder %v3672, inf
      %v3797 = vsel %vm3796, %v3672, %v3795
      %vm3798 = vcmp.eq.f32.partialorder %v3672, 0.0
      %v3799 = vand.u32 %v3672, 2147483648
      %v3800 = vsel %vm3798, %v3799, %v3797
      %v3801 = vrsqrt.pop %v3673
      %v3802 = vmul.f32 %v3673, %v3801
      %vm3803 = vcmp.eq.f32.partialorder %v3673, inf
      %v3804 = vsel %vm3803, %v3673, %v3802
      %vm3805 = vcmp.eq.f32.partialorder %v3673, 0.0
      %v3806 = vand.u32 %v3673, 2147483648
      %v3807 = vsel %vm3805, %v3806, %v3804
      %v3808 = vrsqrt.pop %v3674
      %v3809 = vmul.f32 %v3674, %v3808
      %vm3810 = vcmp.eq.f32.partialorder %v3674, inf
      %v3811 = vsel %vm3810, %v3674, %v3809
      %vm3812 = vcmp.eq.f32.partialorder %v3674, 0.0
      %v3813 = vand.u32 %v3674, 2147483648
      %v3814 = vsel %vm3812, %v3813, %v3811
      %v3815 = vrsqrt.pop %v3675
      %v3816 = vmul.f32 %v3675, %v3815
      %vm3817 = vcmp.eq.f32.partialorder %v3675, inf
      %v3818 = vsel %vm3817, %v3675, %v3816
      %vm3819 = vcmp.eq.f32.partialorder %v3675, 0.0
      %v3820 = vand.u32 %v3675, 2147483648
      %v3821 = vsel %vm3819, %v3820, %v3818
      %v3822 = vrsqrt.pop %v3676
      %v3823 = vmul.f32 %v3676, %v3822
      %vm3824 = vcmp.eq.f32.partialorder %v3676, inf
      %v3825 = vsel %vm3824, %v3676, %v3823
      %vm3826 = vcmp.eq.f32.partialorder %v3676, 0.0
      %v3827 = vand.u32 %v3676, 2147483648
      %v3828 = vsel %vm3826, %v3827, %v3825
      %v3829 = vrsqrt.pop %v3677
      %v3830 = vmul.f32 %v3677, %v3829
      %vm3831 = vcmp.eq.f32.partialorder %v3677, inf
      %v3832 = vsel %vm3831, %v3677, %v3830
      %vm3833 = vcmp.eq.f32.partialorder %v3677, 0.0
      %v3834 = vand.u32 %v3677, 2147483648
      %v3835 = vsel %vm3833, %v3834, %v3832
      %v3836 = vrsqrt.pop %v3678
      %v3837 = vmul.f32 %v3678, %v3836
      %vm3838 = vcmp.eq.f32.partialorder %v3678, inf
      %v3839 = vsel %vm3838, %v3678, %v3837
      %vm3840 = vcmp.eq.f32.partialorder %v3678, 0.0
      %v3841 = vand.u32 %v3678, 2147483648
      %v3842 = vsel %vm3840, %v3841, %v3839
      %v3843 = vrsqrt.pop %v3679
      %v3844 = vmul.f32 %v3679, %v3843
      %vm3845 = vcmp.eq.f32.partialorder %v3679, inf
      %v3846 = vsel %vm3845, %v3679, %v3844
      %vm3847 = vcmp.eq.f32.partialorder %v3679, 0.0
      %v3848 = vand.u32 %v3679, 2147483648
      %v3849 = vsel %vm3847, %v3848, %v3846
      %v3850 = vrsqrt.pop %v3680
      %v3851 = vmul.f32 %v3680, %v3850
      %vm3852 = vcmp.eq.f32.partialorder %v3680, inf
      %v3853 = vsel %vm3852, %v3680, %v3851
      %vm3854 = vcmp.eq.f32.partialorder %v3680, 0.0
      %v3855 = vand.u32 %v3680, 2147483648
      %v3856 = vsel %vm3854, %v3855, %v3853
      %v3857 = vrsqrt.pop %v3681
      %v3858 = vmul.f32 %v3681, %v3857
      %vm3859 = vcmp.eq.f32.partialorder %v3681, inf
      %v3860 = vsel %vm3859, %v3681, %v3858
      %vm3861 = vcmp.eq.f32.partialorder %v3681, 0.0
      %v3862 = vand.u32 %v3681, 2147483648
      %v3863 = vsel %vm3861, %v3862, %v3860
      %v3864 = vrsqrt.pop %v3682
      %v3865 = vmul.f32 %v3682, %v3864
      %vm3866 = vcmp.eq.f32.partialorder %v3682, inf
      %v3867 = vsel %vm3866, %v3682, %v3865
      %vm3868 = vcmp.eq.f32.partialorder %v3682, 0.0
      %v3869 = vand.u32 %v3682, 2147483648
      %v3870 = vsel %vm3868, %v3869, %v3867
      %v3871 = vrsqrt.pop %v3683
      %v3872 = vmul.f32 %v3683, %v3871
      %vm3873 = vcmp.eq.f32.partialorder %v3683, inf
      %v3874 = vsel %vm3873, %v3683, %v3872
      %vm3875 = vcmp.eq.f32.partialorder %v3683, 0.0
      %v3876 = vand.u32 %v3683, 2147483648
      %v3877 = vsel %vm3875, %v3876, %v3874
      %v3878 = vrsqrt.pop %v3684
      %v3879 = vmul.f32 %v3684, %v3878
      %vm3880 = vcmp.eq.f32.partialorder %v3684, inf
      %v3881 = vsel %vm3880, %v3684, %v3879
      %vm3882 = vcmp.eq.f32.partialorder %v3684, 0.0
      %v3883 = vand.u32 %v3684, 2147483648
      %v3884 = vsel %vm3882, %v3883, %v3881
      %v3885 = vrsqrt.pop %v3685
      %v3886 = vmul.f32 %v3685, %v3885
      %vm3887 = vcmp.eq.f32.partialorder %v3685, inf
      %v3888 = vsel %vm3887, %v3685, %v3886
      %vm3889 = vcmp.eq.f32.partialorder %v3685, 0.0
      %v3890 = vand.u32 %v3685, 2147483648
      %v3891 = vsel %vm3889, %v3890, %v3888
      %v3892 = vrsqrt.pop %v3686
      %v3893 = vmul.f32 %v3686, %v3892
      %vm3894 = vcmp.eq.f32.partialorder %v3686, inf
      %v3895 = vsel %vm3894, %v3686, %v3893
      %vm3896 = vcmp.eq.f32.partialorder %v3686, 0.0
      %v3897 = vand.u32 %v3686, 2147483648
      %v3898 = vsel %vm3896, %v3897, %v3895
      %v3899 = vrsqrt.pop %v3687
      %v3900 = vmul.f32 %v3687, %v3899
      %vm3901 = vcmp.eq.f32.partialorder %v3687, inf
      %v3902 = vsel %vm3901, %v3687, %v3900
      %vm3903 = vcmp.eq.f32.partialorder %v3687, 0.0
      %v3904 = vand.u32 %v3687, 2147483648
      %v3905 = vsel %vm3903, %v3904, %v3902
      %v3906 = vrsqrt.pop %v3688
      %v3907 = vmul.f32 %v3688, %v3906
      %vm3908 = vcmp.eq.f32.partialorder %v3688, inf
      %v3909 = vsel %vm3908, %v3688, %v3907
      %vm3910 = vcmp.eq.f32.partialorder %v3688, 0.0
      %v3911 = vand.u32 %v3688, 2147483648
      %v3912 = vsel %vm3910, %v3911, %v3909
      %v3913 = vld [vmem:[%s6 + $0x2] sm:$0x1]
      %v3914 = vlaneseq
      %v3915 = vshrl.u32 %v3914, 7
      %v3916 = vsub.s32 0, %v3915
      %v3917 = vrot.slane %v3913, %v3916
      %v3918 = vmul.f32 %v3917, %v3496
      %v3919 = vmul.f32 %v3917, %v3497
      %v3920 = vmul.f32 %v3917, %v3498
      %v3921 = vmul.f32 %v3917, %v3499
      %v3922 = vmul.f32 %v3917, %v3500
      %v3923 = vmul.f32 %v3917, %v3501
      %v3924 = vmul.f32 %v3917, %v3502
      %v3925 = vmul.f32 %v3917, %v3503
      %v3926 = vmul.f32 %v3917, %v3504
      %v3927 = vmul.f32 %v3917, %v3505
      %v3928 = vmul.f32 %v3917, %v3506
      %v3929 = vmul.f32 %v3917, %v3507
      %v3930 = vmul.f32 %v3917, %v3508
      %v3931 = vmul.f32 %v3917, %v3509
      %v3932 = vmul.f32 %v3917, %v3510
      %v3933 = vmul.f32 %v3917, %v3511
      %v3934 = vmul.f32 %v3917, %v3512
      %v3935 = vmul.f32 %v3917, %v3513
      %v3936 = vmul.f32 %v3917, %v3514
      %v3937 = vmul.f32 %v3917, %v3515
      %v3938 = vmul.f32 %v3917, %v3516
      %v3939 = vmul.f32 %v3917, %v3517
      %v3940 = vmul.f32 %v3917, %v3518
      %v3941 = vmul.f32 %v3917, %v3519
      %v3942 = vmul.f32 %v3917, %v3520
      %v3943 = vmul.f32 %v3917, %v3521
      %v3944 = vmul.f32 %v3917, %v3522
      %v3945 = vmul.f32 %v3917, %v3523
      %v3946 = vmul.f32 %v3917, %v3524
      %v3947 = vmul.f32 %v3917, %v3525
      %v3948 = vmul.f32 %v3917, %v3526
      %v3949 = vmul.f32 %v3917, %v3527
      %v3950 = vadd.f32 %v3695, 1e-06
      %v3951 = vadd.f32 %v3702, 1e-06
      %v3952 = vadd.f32 %v3709, 1e-06
      %v3953 = vadd.f32 %v3716, 1e-06
      %v3954 = vadd.f32 %v3723, 1e-06
      %v3955 = vadd.f32 %v3730, 1e-06
      %v3956 = vadd.f32 %v3737, 1e-06
      %v3957 = vadd.f32 %v3744, 1e-06
      %v3958 = vadd.f32 %v3751, 1e-06
      %v3959 = vadd.f32 %v3758, 1e-06
      %v3960 = vadd.f32 %v3765, 1e-06
      %v3961 = vadd.f32 %v3772, 1e-06
      %v3962 = vadd.f32 %v3779, 1e-06
      %v3963 = vadd.f32 %v3786, 1e-06
      %v3964 = vadd.f32 %v3793, 1e-06
      %v3965 = vadd.f32 %v3800, 1e-06
      %v3966 = vadd.f32 %v3807, 1e-06
      %v3967 = vadd.f32 %v3814, 1e-06
      %v3968 = vadd.f32 %v3821, 1e-06
      %v3969 = vadd.f32 %v3828, 1e-06
      %v3970 = vadd.f32 %v3835, 1e-06
      %v3971 = vadd.f32 %v3842, 1e-06
      %v3972 = vadd.f32 %v3849, 1e-06
      %v3973 = vadd.f32 %v3856, 1e-06
      %v3974 = vadd.f32 %v3863, 1e-06
      %v3975 = vadd.f32 %v3870, 1e-06
      %v3976 = vadd.f32 %v3877, 1e-06
      %v3977 = vadd.f32 %v3884, 1e-06
      %v3978 = vadd.f32 %v3891, 1e-06
      %v3979 = vadd.f32 %v3898, 1e-06
      %v3980 = vadd.f32 %v3905, 1e-06
      %v3981 = vadd.f32 %v3912, 1e-06
      %v3982 = vrcp.pop %v3950
      %v3983 = vmul.f32 %v3918, %v3982
      %v3984 = vrcp.pop %v3951
      %v3985 = vmul.f32 %v3919, %v3984
      %v3986 = vrcp.pop %v3952
      %v3987 = vmul.f32 %v3920, %v3986
      %v3988 = vrcp.pop %v3953
      %v3989 = vmul.f32 %v3921, %v3988
      %v3990 = vrcp.pop %v3954
      %v3991 = vmul.f32 %v3922, %v3990
      %v3992 = vrcp.pop %v3955
      %v3993 = vmul.f32 %v3923, %v3992
      %v3994 = vrcp.pop %v3956
      %v3995 = vmul.f32 %v3924, %v3994
      %v3996 = vrcp.pop %v3957
      %v3997 = vmul.f32 %v3925, %v3996
      %v3998 = vrcp.pop %v3958
      %v3999 = vmul.f32 %v3926, %v3998
      %v4000 = vrcp.pop %v3959
      %v4001 = vmul.f32 %v3927, %v4000
      %v4002 = vrcp.pop %v3960
      %v4003 = vmul.f32 %v3928, %v4002
      %v4004 = vrcp.pop %v3961
      %v4005 = vmul.f32 %v3929, %v4004
      %v4006 = vrcp.pop %v3962
      %v4007 = vmul.f32 %v3930, %v4006
      %v4008 = vrcp.pop %v3963
      %v4009 = vmul.f32 %v3931, %v4008
      %v4010 = vrcp.pop %v3964
      %v4011 = vmul.f32 %v3932, %v4010
      %v4012 = vrcp.pop %v3965
      %v4013 = vmul.f32 %v3933, %v4012
      %v4014 = vrcp.pop %v3966
      %v4015 = vmul.f32 %v3934, %v4014
      %v4016 = vrcp.pop %v3967
      %v4017 = vmul.f32 %v3935, %v4016
      %v4018 = vrcp.pop %v3968
      %v4019 = vmul.f32 %v3936, %v4018
      %v4020 = vrcp.pop %v3969
      %v4021 = vmul.f32 %v3937, %v4020
      %v4022 = vrcp.pop %v3970
      %v4023 = vmul.f32 %v3938, %v4022
      %v4024 = vrcp.pop %v3971
      %v4025 = vmul.f32 %v3939, %v4024
      %v4026 = vrcp.pop %v3972
      %v4027 = vmul.f32 %v3940, %v4026
      %v4028 = vrcp.pop %v3973
      %v4029 = vmul.f32 %v3941, %v4028
      %v4030 = vrcp.pop %v3974
      %v4031 = vmul.f32 %v3942, %v4030
      %v4032 = vrcp.pop %v3975
      %v4033 = vmul.f32 %v3943, %v4032
      %v4034 = vrcp.pop %v3976
      %v4035 = vmul.f32 %v3944, %v4034
      %v4036 = vrcp.pop %v3977
      %v4037 = vmul.f32 %v3945, %v4036
      %v4038 = vrcp.pop %v3978
      %v4039 = vmul.f32 %v3946, %v4038
      %v4040 = vrcp.pop %v3979
      %v4041 = vmul.f32 %v3947, %v4040
      %v4042 = vrcp.pop %v3980
      %v4043 = vmul.f32 %v3948, %v4042
      %v4044 = vrcp.pop %v3981
      %v4045 = vmul.f32 %v3949, %v4044
      %v4046 = vld [vmem:[%s6 + $0x3] sm:$0x1]
      %v4047 = vlaneseq
      %v4048 = vshrl.u32 %v4047, 7
      %v4049 = vsub.s32 0, %v4048
      %v4050 = vrot.slane %v4046, %v4049
      %v4051 = vadd.f32 %v3983, %v4050
      %v4052 = vadd.f32 %v3985, %v4050
      %v4053 = vadd.f32 %v3987, %v4050
      %v4054 = vadd.f32 %v3989, %v4050
      %v4055 = vadd.f32 %v3991, %v4050
      %v4056 = vadd.f32 %v3993, %v4050
      %v4057 = vadd.f32 %v3995, %v4050
      %v4058 = vadd.f32 %v3997, %v4050
      %v4059 = vadd.f32 %v3999, %v4050
      %v4060 = vadd.f32 %v4001, %v4050
      %v4061 = vadd.f32 %v4003, %v4050
      %v4062 = vadd.f32 %v4005, %v4050
      %v4063 = vadd.f32 %v4007, %v4050
      %v4064 = vadd.f32 %v4009, %v4050
      %v4065 = vadd.f32 %v4011, %v4050
      %v4066 = vadd.f32 %v4013, %v4050
      %v4067 = vadd.f32 %v4015, %v4050
      %v4068 = vadd.f32 %v4017, %v4050
      %v4069 = vadd.f32 %v4019, %v4050
      %v4070 = vadd.f32 %v4021, %v4050
      %v4071 = vadd.f32 %v4023, %v4050
      %v4072 = vadd.f32 %v4025, %v4050
      %v4073 = vadd.f32 %v4027, %v4050
      %v4074 = vadd.f32 %v4029, %v4050
      %v4075 = vadd.f32 %v4031, %v4050
      %v4076 = vadd.f32 %v4033, %v4050
      %v4077 = vadd.f32 %v4035, %v4050
      %v4078 = vadd.f32 %v4037, %v4050
      %v4079 = vadd.f32 %v4039, %v4050
      %v4080 = vadd.f32 %v4041, %v4050
      %v4081 = vadd.f32 %v4043, %v4050
      %v4082 = vadd.f32 %v4045, %v4050
      %4083 = vst.msk [vmem:[%s280] sm:$0xff] %vm370, %v4051
      %4084 = vst.msk [vmem:[%s280 + $0x8] sm:$0xff] %vm370, %v4052
      %4085 = vst.msk [vmem:[%s280 + $0x10] sm:$0xff] %vm370, %v4053
      %4086 = vst.msk [vmem:[%s280 + $0x18] sm:$0xff] %vm370, %v4054
      %4087 = vst.msk [vmem:[%s280 + $0x20] sm:$0xff] %vm370, %v4055
      %4088 = vst.msk [vmem:[%s280 + $0x28] sm:$0xff] %vm370, %v4056
      %4089 = vst.msk [vmem:[%s280 + $0x30] sm:$0xff] %vm370, %v4057
      %4090 = vst.msk [vmem:[%s280 + $0x38] sm:$0xff] %vm370, %v4058
      %4091 = vst.msk [vmem:[%s280 + $0x40] sm:$0xff] %vm370, %v4059
      %4092 = vst.msk [vmem:[%s280 + $0x48] sm:$0xff] %vm370, %v4060
      %4093 = vst.msk [vmem:[%s280 + $0x50] sm:$0xff] %vm370, %v4061
      %4094 = vst.msk [vmem:[%s280 + $0x58] sm:$0xff] %vm370, %v4062
      %4095 = vst.msk [vmem:[%s280 + $0x60] sm:$0xff] %vm370, %v4063
      %4096 = vst.msk [vmem:[%s280 + $0x68] sm:$0xff] %vm370, %v4064
      %4097 = vst.msk [vmem:[%s280 + $0x70] sm:$0xff] %vm370, %v4065
      %4098 = vst.msk [vmem:[%s280 + $0x78] sm:$0xff] %vm370, %v4066
      %4099 = vst.msk [vmem:[%s280 + $0x80] sm:$0xff] %vm370, %v4067
      %4100 = vst.msk [vmem:[%s280 + $0x88] sm:$0xff] %vm370, %v4068
      %4101 = vst.msk [vmem:[%s280 + $0x90] sm:$0xff] %vm370, %v4069
      %4102 = vst.msk [vmem:[%s280 + $0x98] sm:$0xff] %vm370, %v4070
      %4103 = vst.msk [vmem:[%s280 + $0xa0] sm:$0xff] %vm370, %v4071
      %4104 = vst.msk [vmem:[%s280 + $0xa8] sm:$0xff] %vm370, %v4072
      %4105 = vst.msk [vmem:[%s280 + $0xb0] sm:$0xff] %vm370, %v4073
      %4106 = vst.msk [vmem:[%s280 + $0xb8] sm:$0xff] %vm370, %v4074
      %4107 = vst.msk [vmem:[%s280 + $0xc0] sm:$0xff] %vm370, %v4075
      %4108 = vst.msk [vmem:[%s280 + $0xc8] sm:$0xff] %vm370, %v4076
      %4109 = vst.msk [vmem:[%s280 + $0xd0] sm:$0xff] %vm370, %v4077
      %4110 = vst.msk [vmem:[%s280 + $0xd8] sm:$0xff] %vm370, %v4078
      %4111 = vst.msk [vmem:[%s280 + $0xe0] sm:$0xff] %vm370, %v4079
      %4112 = vst.msk [vmem:[%s280 + $0xe8] sm:$0xff] %vm370, %v4080
      %4113 = vst.msk [vmem:[%s280 + $0xf0] sm:$0xff] %vm370, %v4081
      %4114 = vst.msk [vmem:[%s280 + $0xf8] sm:$0xff] %vm370, %v4082
      %s4115 = smul.u32 32, %s18
      %p4116 = scmp.lt.s32.totalorder %s4115, 63
      %s4117 = scalar_select %p4116, %s4115, 63
      %s4118 = smul.addr %s4117, 8
      %s4119 = scalar_lea.vmem %s7, %s4118
      // Predicated region
      $region49: #{tpu_custom_call.1} parent=47 // pred_check
        %p4120 = pneg %p188
      $region50: #{tpu_custom_call.1} parent=47 // pred_check_branch
        %4122 = sbr.rel (%p4120) target = $region52
      $region51: #{tpu_custom_call.1} parent=47 // pred_region
        %s4123 = smul.u32 32, %s18
      $region52: #{tpu_custom_call.1} parent=47 // pred_fallthru
        _
    $region48: #{tpu_custom_call.1} parent=5 // pred_fallthru
      _
    %p4124 = scmp.le.s32.totalorder 2, %s13
    // Predicated region
    $region53: #{tpu_custom_call.1} parent=5 // pred_check
      %p4125 = pneg %p4124
    $region54: #{tpu_custom_call.1} parent=5 // pred_check_branch
      %4127 = sbr.rel (%p4125) target = $region56
    $region55: #{tpu_custom_call.1} parent=5 // pred_region
      %s4128 = ssub.s32 %s13, 2
      // Predicated region
      $region57: #{tpu_custom_call.1} parent=55 // pred_check
        %p4129 = pneg %p194
      $region58: #{tpu_custom_call.1} parent=55 // pred_check_branch
        %4131 = sbr.rel (%p4129) target = $region60
      $region59: #{tpu_custom_call.1} parent=55 // pred_region
        %s4132 = smul.u32 32, %s19
        %p4133 = scmp.lt.s32.totalorder %s4132, 63
        %s4134 = scalar_select %p4133, %s4132, 63
        %s4135 = smul.addr %s4134, 8
        %s4136 = scalar_lea.vmem %s7, %s4135
      $region60: #{tpu_custom_call.1} parent=55 // pred_fallthru
        _
    $region56: #{tpu_custom_call.1} parent=5 // pred_fallthru
      _
  $region6: #{tpu_custom_call.1} parent=0 // loop_footer
    %s17 = sadd.s32 1, %s13
  $region7: #{tpu_custom_call.1} parent=0 // loop_footer_branch
    %12 = sbr.rel target = $region3
  $region8: #{tpu_custom_call.1} parent=0 // loop_exit
    _

</llo_original>
